<compile_context>
chip_gen: v7x
topology: tpu7x:2x2x1
jax: 0.10.0
libtpu: 0.0.40
codegen_flags: <defaults>
</compile_context>

<pallas_src>
import jax
import jax.numpy as jnp
from jax.experimental import pallas as pl
from jax.experimental.pallas import tpu as pltpu


_VMEM_LIMIT = 48 * 1024 * 1024     # safe on v5e/v6e (128 MiB) and v7x (64 MiB)


def _round_up(x, m):
    return ((x + m - 1) // m) * m


# ---------------------------------------------------------------------------
# Kernel A: row-tiled GEMM + bias (ConvTranspose2d k=2 s=2 == one matmul)
# ---------------------------------------------------------------------------
def _mm_bias_kernel(x_ref, w_ref, b_ref, o_ref):
    acc = jnp.dot(x_ref[...], w_ref[...], preferred_element_type=jnp.float32)
    o_ref[...] = (acc + b_ref[...]).astype(o_ref.dtype)


def upconv_matmul(x_bf16, w_bf16, b_f32, *, tm_max=512):
    """(M, K) @ (K, N) + b : bf16 operands, f32 accumulation, bf16 output."""
    M, K = x_bf16.shape
    N = w_bf16.shape[1]
    # Large row tiles amortise the ~0.35us per-grid-step overhead; pl.cdiv plus
    # Pallas tail masking handles M not divisible by the tile.
    tm = min(tm_max, _round_up(M, 8))
    grid = (pl.cdiv(M, tm),)
    cost = pl.CostEstimate(
        flops=2 * M * K * N,
        transcendentals=0,
        bytes_accessed=2 * M * K + 2 * K * N + 4 * N + 2 * M * N)
    return pl.pallas_call(
        _mm_bias_kernel,
        out_shape=jax.ShapeDtypeStruct((M, N), jnp.bfloat16),
        grid=grid,
        in_specs=[
            pl.BlockSpec((tm, K), lambda i: (i, 0)),
            pl.BlockSpec((K, N), lambda i: (0, 0)),    # constant operand
            pl.BlockSpec((1, N), lambda i: (0, 0)),    # constant operand
        ],
        out_specs=pl.BlockSpec((tm, N), lambda i: (i, 0)),
        compiler_params=pltpu.CompilerParams(
            dimension_semantics=("parallel",),
            vmem_limit_bytes=_VMEM_LIMIT),
        cost_estimate=cost,
    )(x_bf16, w_bf16, b_f32.reshape(1, N))


# ---------------------------------------------------------------------------
# Kernel B: fused attention gate + first 3x3 conv of DoubleConv (halo rows)
# ---------------------------------------------------------------------------
def _att_dc1_kernel(y0, y1, y2, x0, x1r, x2r,
                    wg_r, wx_r, ba_r, wp_r, bp_r, wa_r, wb_r, b1_r,
                    o_ref, x3_buf):
    wpad = y0.shape[2]            # padded width (W2 + 2)
    w2 = wpad - 2
    cout = o_ref.shape[-1]
    y_rows = (y0, y1, y2)
    x_rows = (x0, x1r, x2r)

    acc = jnp.zeros((w2, cout), jnp.float32)
    for di in range(3):
        yr = y_rows[di][0, 0, :, :]          # (wpad, C) bf16, upsampled feature
        xr = x_rows[di][0, 0, :, :]          # (wpad, C) bf16, skip feature
        # ---- attention gate (recomputed per halo row; tiny vs the conv) ----
        g1 = jnp.dot(yr, wg_r[...], preferred_element_type=jnp.float32)
        l1 = jnp.dot(xr, wx_r[...], preferred_element_type=jnp.float32)
        p = jnp.maximum(g1 + l1 + ba_r[...], 0.0)                  # (wpad, Fint)
        psi = jnp.sum(p * wp_r[...], axis=-1, keepdims=True) + bp_r[...]
        psi = jax.nn.sigmoid(psi)                                   # (wpad, 1)
        # padded border has xr == 0 -> x3 == 0, matching the reference zero pad
        x3_buf[...] = (xr.astype(jnp.float32) * psi).astype(jnp.bfloat16)
        # ---- 3x3 conv taps of this halo row; concat([x3, y]) split in two ---
        for dj in range(3):
            k = di * 3 + dj
            acc = acc + jnp.dot(x3_buf[dj:dj + w2, :], wa_r[k],
                                preferred_element_type=jnp.float32)
            acc = acc + jnp.dot(y_rows[di][0, 0, dj:dj + w2, :], wb_r[k],
                                preferred_element_type=jnp.float32)
    o_ref[0, 0, :, :] = jnp.maximum(acc + b1_r[...], 0.0).astype(o_ref.dtype)


def att_dc1_fused(y_pad, x2_pad, wg, wx, b_att, wpsi, bpsi, wa, wb, b1):
    n, hpad, wpad, c = y_pad.shape
    h2, w2 = hpad - 2, wpad - 2
    fint = wg.shape[1]
    cout = wa.shape[-1]

    def row_spec(d):
        return pl.BlockSpec((1, 1, wpad, c), lambda b, i, d=d: (b, i + d, 0, 0))

    def const_spec(shape):
        return pl.BlockSpec(shape, lambda b, i, nd=len(shape): (0,) * nd)

    steps = n * h2
    cost = pl.CostEstimate(
        flops=steps * (2 * 2 * wpad * c * fint + 2 * 18 * w2 * c * cout),
        transcendentals=steps * 3 * wpad,
        bytes_accessed=steps * (6 * wpad * c * 2 + w2 * cout * 2)
        + 2 * (c * fint * 2) + 2 * (9 * c * cout * 2))
    return pl.pallas_call(
        _att_dc1_kernel,
        out_shape=jax.ShapeDtypeStruct((n, h2, w2, cout), jnp.bfloat16),
        grid=(n, h2),
        in_specs=[row_spec(0), row_spec(1), row_spec(2),      # y_pad halo rows
                  row_spec(0), row_spec(1), row_spec(2),      # x2_pad halo rows
                  const_spec((c, fint)), const_spec((c, fint)),
                  const_spec((1, fint)), const_spec((1, fint)),
                  const_spec((1, 1)),
                  const_spec((9, c, cout)), const_spec((9, c, cout)),
                  const_spec((1, cout))],
        out_specs=pl.BlockSpec((1, 1, w2, cout), lambda b, i: (b, i, 0, 0)),
        scratch_shapes=[pltpu.VMEM((wpad, c), jnp.bfloat16)],
        compiler_params=pltpu.CompilerParams(
            dimension_semantics=("parallel", "parallel"),
            vmem_limit_bytes=_VMEM_LIMIT),
        cost_estimate=cost,
    )(y_pad, y_pad, y_pad, x2_pad, x2_pad, x2_pad,
      wg, wx, b_att, wpsi, bpsi, wa, wb, b1)


# ---------------------------------------------------------------------------
# Kernel C: 3x3 conv + folded BN + ReLU over halo rows (no im2col in HBM)
# ---------------------------------------------------------------------------
def _conv3x3_kernel(r0, r1, r2, w_r, b_r, o_ref):
    wpad = r0.shape[2]
    w2 = wpad - 2
    cout = o_ref.shape[-1]
    rows = (r0, r1, r2)
    acc = jnp.zeros((w2, cout), jnp.float32)
    for di in range(3):
        for dj in range(3):
            acc = acc + jnp.dot(rows[di][0, 0, dj:dj + w2, :],
                                w_r[di * 3 + dj],
                                preferred_element_type=jnp.float32)
    o_ref[0, 0, :, :] = jnp.maximum(acc + b_r[...], 0.0).astype(o_ref.dtype)


def conv3x3_relu(x_pad, w, b, out_dtype=jnp.float32):
    n, hpad, wpad, c = x_pad.shape
    h2, w2 = hpad - 2, wpad - 2
    cout = w.shape[-1]

    def row_spec(d):
        return pl.BlockSpec((1, 1, wpad, c), lambda b, i, d=d: (b, i + d, 0, 0))

    steps = n * h2
    cost = pl.CostEstimate(
        flops=steps * 2 * 9 * w2 * c * cout,
        transcendentals=0,
        bytes_accessed=steps * (3 * wpad * c * 2 + w2 * cout * 4)
        + 9 * c * cout * 2)
    return pl.pallas_call(
        _conv3x3_kernel,
        out_shape=jax.ShapeDtypeStruct((n, h2, w2, cout), out_dtype),
        grid=(n, h2),
        in_specs=[row_spec(0), row_spec(1), row_spec(2),
                  pl.BlockSpec((9, c, cout), lambda b, i: (0, 0, 0)),
                  pl.BlockSpec((1, cout), lambda b, i: (0, 0))],
        out_specs=pl.BlockSpec((1, 1, w2, cout), lambda b, i: (b, i, 0, 0)),
        compiler_params=pltpu.CompilerParams(
            dimension_semantics=("parallel", "parallel"),
            vmem_limit_bytes=_VMEM_LIMIT),
        cost_estimate=cost,
    )(x_pad, x_pad, x_pad, w, b)


# ---------------------------------------------------------------------------
# Parameters (synthetic, deterministic), eval-mode BN folded
# ---------------------------------------------------------------------------
def _bn_fold(gamma, beta, mean, var, eps=1e-5):
    scale = gamma / jnp.sqrt(var + eps)
    shift = beta - mean * scale
    return scale, shift


def init_params(key, in_ch, out_ch):
    fint = out_ch // 2
    ks = iter(jax.random.split(key, 32))

    def nrm(shape, s=0.1):
        return s * jax.random.normal(next(ks), shape, jnp.float32)

    def bn(c):
        gamma = 1.0 + nrm((c,))
        beta = nrm((c,))
        mean = nrm((c,))
        var = 1.0 + jnp.abs(nrm((c,)))
        return _bn_fold(gamma, beta, mean, var)

    p = {}

    # ConvTranspose2d(in_ch, out_ch, k=2, s=2): torch weight (Cin, Cout, 2, 2)
    upw = nrm((in_ch, out_ch, 2, 2))
    upb = nrm((out_ch,))
    p["up_w"] = jnp.transpose(upw, (0, 2, 3, 1)).reshape(in_ch, 4 * out_ch)
    p["up_b"] = jnp.tile(upb, 4)

    # AttBlock: Wg / Wx (Conv1x1 + BN), psi (Conv1x1 + BN + Sigmoid)
    def conv1x1_bn(cin, cout):
        w = nrm((cout, cin, 1, 1))
        b = nrm((cout,))
        scale, shift = bn(cout)
        wm = w[:, :, 0, 0].T * scale[None, :]
        bm = b * scale + shift
        return wm, bm

    p["wg_w"], p["wg_b"] = conv1x1_bn(out_ch, fint)
    p["wx_w"], p["wx_b"] = conv1x1_bn(out_ch, fint)
    p["psi_w"], p["psi_b"] = conv1x1_bn(fint, 1)

    # DoubleConv: (Conv3x3 pad=1 + BN + ReLU) x 2; first conv eats [x3, y]
    def conv3x3_bn(cin, cout):
        w = nrm((cout, cin, 3, 3))
        b = nrm((cout,))
        scale, shift = bn(cout)
        wm = jnp.transpose(w, (2, 3, 1, 0)).reshape(9, cin, cout) * scale
        bm = b * scale + shift
        return wm, bm

    p["dc1_w"], p["dc1_b"] = conv3x3_bn(2 * out_ch, out_ch)
    p["dc2_w"], p["dc2_b"] = conv3x3_bn(out_ch, out_ch)
    return p


# ---------------------------------------------------------------------------
# Forward pass (Pallas) and pure-JAX f32 reference
# ---------------------------------------------------------------------------
def att_up_forward_pallas(params, x1_nchw, x2_nchw):
    bf16, f32 = jnp.bfloat16, jnp.float32
    x1 = jnp.transpose(x1_nchw, (0, 2, 3, 1)).astype(bf16)
    x2 = jnp.transpose(x2_nchw, (0, 2, 3, 1)).astype(bf16)
    n, h, w, cin = x1.shape
    cout = params["up_w"].shape[1] // 4
    fint = params["wg_w"].shape[1]
    h2, w2 = 2 * h, 2 * w

    # upconv as one GEMM, then a single XLA pixel-shuffle relayout (bf16).
    y = upconv_matmul(x1.reshape(n * h * w, cin),
                      params["up_w"].astype(bf16),
                      params["up_b"].astype(f32))
    y = (y.reshape(n, h, w, 2, 2, cout)
          .transpose(0, 1, 3, 2, 4, 5)
          .reshape(n, h2, w2, cout))

    # One zero-pad per tensor provides both the 3x3 halo and a zero border
    # (x2_pad border == 0  ->  x3 border == 0, matching the reference pad).
    y_pad = jnp.pad(y, ((0, 0), (1, 1), (1, 1), (0, 0)))
    x2_pad = jnp.pad(x2, ((0, 0), (1, 1), (1, 1), (0, 0)))

    # Fused attention gate + conv1 (no x3 / concat / im2col ever hits HBM).
    c1 = att_dc1_fused(
        y_pad, x2_pad,
        params["wg_w"].astype(bf16), params["wx_w"].astype(bf16),
        (params["wg_b"] + params["wx_b"]).reshape(1, fint).astype(f32),
        params["psi_w"].reshape(1, fint).astype(f32),
        params["psi_b"].reshape(1, 1).astype(f32),
        params["dc1_w"][:, :cout, :].astype(bf16),   # taps hitting x3 channels
        params["dc1_w"][:, cout:, :].astype(bf16),   # taps hitting y channels
        params["dc1_b"].reshape(1, cout).astype(f32))

    # conv2 of DoubleConv.
    c1_pad = jnp.pad(c1, ((0, 0), (1, 1), (1, 1), (0, 0)))
    c2 = conv3x3_relu(c1_pad,
                      params["dc2_w"].astype(bf16),
                      params["dc2_b"].reshape(1, cout).astype(f32),
                      out_dtype=f32)
    return jnp.transpose(c2, (0, 3, 1, 2))            # back to NCHW


def _conv3x3_ref(x, w9, b):
    n, h, w_, c = x.shape
    cout = w9.shape[-1]
    xp = jnp.pad(x, ((0, 0), (1, 1), (1, 1), (0, 0)))
    y = jnp.zeros((n, h, w_, cout), jnp.float32) + b
    for di in range(3):
        for dj in range(3):
            patch = xp[:, di:di + h, dj:dj + w_, :].reshape(-1, c)
            y = y + (patch @ w9[di * 3 + dj]).reshape(n, h, w_, cout)
    return jnp.maximum(y, 0.0)


def att_up_reference(params, x1_nchw, x2_nchw):
    x1 = jnp.transpose(x1_nchw, (0, 2, 3, 1)).astype(jnp.float32)
    x2 = jnp.transpose(x2_nchw, (0, 2, 3, 1)).astype(jnp.float32)
    n, h, w, cin = x1.shape
    cout = params["up_w"].shape[1] // 4
    h2, w2 = 2 * h, 2 * w

    y = x1.reshape(n * h * w, cin) @ params["up_w"] + params["up_b"][None, :]
    y = (y.reshape(n, h, w, 2, 2, cout)
          .transpose(0, 1, 3, 2, 4, 5)
          .reshape(n, h2, w2, cout))

    g = y.reshape(-1, cout)
    xl = x2.reshape(-1, cout)
    pre = jnp.maximum(g @ params["wg_w"] + params["wg_b"]
                      + xl @ params["wx_w"] + params["wx_b"], 0.0)
    psi = jax.nn.sigmoid(pre @ params["psi_w"] + params["psi_b"])
    x3 = (xl * psi).reshape(n, h2, w2, cout)

    cat = jnp.concatenate([x3, y], axis=-1)
    c1 = _conv3x3_ref(cat, params["dc1_w"], params["dc1_b"])
    c2 = _conv3x3_ref(c1, params["dc2_w"], params["dc2_b"])
    return jnp.transpose(c2, (0, 3, 1, 2))


# ---------------------------------------------------------------------------
if __name__ == "__main__":
    IN_CH, OUT_CH = 8, 4
    N, H, W = 2, 8, 8              # x1: decoder feature; x2: 2x-larger skip

    key = jax.random.PRNGKey(0)
    k_p, k_x1, k_x2 = jax.random.split(key, 3)
    params = init_params(k_p, IN_CH, OUT_CH)

    x1 = jax.random.normal(k_x1, (N, IN_CH, H, W), jnp.float32)           # NCHW
    x2 = jax.random.normal(k_x2, (N, OUT_CH, 2 * H, 2 * W), jnp.float32)  # NCHW

    fwd = jax.jit(att_up_forward_pallas)
    out = jax.block_until_ready(fwd(params, x1, x2))
    ref = jax.block_until_ready(att_up_reference(params, x1, x2))

    assert out.shape == (N, OUT_CH, 2 * H, 2 * W), out.shape
    assert bool(jnp.all(jnp.isfinite(out)))
    max_err = float(jnp.max(jnp.abs(out - ref)))
    assert jnp.allclose(out, ref, rtol=2e-2, atol=2e-2), max_err

    print("KERNEL_OK")
</pallas_src>

<mosaic_0001>
module attributes {stable_mosaic.version = 11 : i64} {
  func.func @_mm_bias_kernel(%arg0: i32, %arg1: memref<128x8xbf16, #tpu.memory_space<vmem>>, %arg2: memref<8x16xbf16, #tpu.memory_space<vmem>>, %arg3: memref<1x16xf32, #tpu.memory_space<vmem>>, %arg4: memref<128x16xbf16, #tpu.memory_space<vmem>>) attributes {dimension_semantics = [#tpu.dimension_semantics<parallel>], iteration_bounds = array<i64: 1>, scalar_prefetch = 0 : i64, scratch_operands = 0 : i64, tpu.core_type = #tpu.core_type<tc>, window_params = [{transform_indices = @transform_0, window_bounds = array<i64: 128, 8>}, {pipeline_mode = #tpu.pipeline_mode<synchronous>, transform_indices = @transform_1, window_bounds = array<i64: 8, 16>}, {pipeline_mode = #tpu.pipeline_mode<synchronous>, transform_indices = @transform_2, window_bounds = array<i64: 1, 16>}, {transform_indices = @transform_3, window_bounds = array<i64: 128, 16>}]} {
    %c0 = arith.constant 0 : index
    %c0_0 = arith.constant 0 : index
    %0 = vector.load %arg1[%c0, %c0_0] : memref<128x8xbf16, #tpu.memory_space<vmem>>, vector<128x8xbf16>
    %c0_1 = arith.constant 0 : index
    %c0_2 = arith.constant 0 : index
    %1 = vector.load %arg2[%c0_1, %c0_2] : memref<8x16xbf16, #tpu.memory_space<vmem>>, vector<8x16xbf16>
    %cst = arith.constant dense<0.000000e+00> : vector<128x16xf32>
    %2 = tpu.matmul %0, %1, %cst {dimension_numbers = #tpu.dot_dimension_numbers<[1], [0], [0], [1], [0, 0, 1, 1], [], []>} : vector<128x8xbf16>, vector<8x16xbf16>, vector<128x16xf32> -> vector<128x16xf32>
    %c0_3 = arith.constant 0 : index
    %c0_4 = arith.constant 0 : index
    %3 = vector.load %arg3[%c0_3, %c0_4] : memref<1x16xf32, #tpu.memory_space<vmem>>, vector<1x16xf32>
    %4 = vector.broadcast %3 : vector<1x16xf32> to vector<128x16xf32>
    %5 = arith.addf %2, %4 : vector<128x16xf32>
    %6 = arith.truncf %5 : vector<128x16xf32> to vector<128x16xbf16>
    %c0_5 = arith.constant 0 : index
    %c0_6 = arith.constant 0 : index
    %7 = vector.load %arg4[%c0_5, %c0_6] : memref<128x16xbf16, #tpu.memory_space<vmem>>, vector<128x16xbf16>
    tpu.vector_store %arg4[%c0_5, %c0_6], %6 {strides = array<i32>} : memref<128x16xbf16, #tpu.memory_space<vmem>>, vector<128x16xbf16>,
    return
  }
  func.func @transform_0(%arg0: i32) -> (i32, i32) {
    %c0_i32 = arith.constant 0 : i32
    %c0_i32_0 = arith.constant 0 : i32
    return %arg0, %c0_i32 : i32, i32
  }
  func.func @transform_1(%arg0: i32) -> (i32, i32) {
    %c0_i32 = arith.constant 0 : i32
    %c0_i32_0 = arith.constant 0 : i32
    %c0_i32_1 = arith.constant 0 : i32
    return %c0_i32, %c0_i32_0 : i32, i32
  }
  func.func @transform_2(%arg0: i32) -> (i32, i32) {
    %c0_i32 = arith.constant 0 : i32
    %c0_i32_0 = arith.constant 0 : i32
    %c0_i32_1 = arith.constant 0 : i32
    return %c0_i32, %c0_i32_0 : i32, i32
  }
  func.func @transform_3(%arg0: i32) -> (i32, i32) {
    %c0_i32 = arith.constant 0 : i32
    %c0_i32_0 = arith.constant 0 : i32
    return %arg0, %c0_i32 : i32, i32
  }
}

module attributes {stable_mosaic.version = 11 : i64} {
  func.func @_att_dc1_kernel(%arg0: i32, %arg1: i32, %arg2: memref<1x1x18x4xbf16, #tpu.memory_space<vmem>>, %arg3: memref<1x1x18x4xbf16, #tpu.memory_space<vmem>>, %arg4: memref<1x1x18x4xbf16, #tpu.memory_space<vmem>>, %arg5: memref<1x1x18x4xbf16, #tpu.memory_space<vmem>>, %arg6: memref<1x1x18x4xbf16, #tpu.memory_space<vmem>>, %arg7: memref<1x1x18x4xbf16, #tpu.memory_space<vmem>>, %arg8: memref<4x2xbf16, #tpu.memory_space<vmem>>, %arg9: memref<4x2xbf16, #tpu.memory_space<vmem>>, %arg10: memref<1x2xf32, #tpu.memory_space<vmem>>, %arg11: memref<1x2xf32, #tpu.memory_space<vmem>>, %arg12: memref<1x1xf32, #tpu.memory_space<vmem>>, %arg13: memref<9x4x4xbf16, #tpu.memory_space<vmem>>, %arg14: memref<9x4x4xbf16, #tpu.memory_space<vmem>>, %arg15: memref<1x4xf32, #tpu.memory_space<vmem>>, %arg16: memref<1x1x16x4xbf16, #tpu.memory_space<vmem>>, %arg17: memref<18x4xbf16, #tpu.memory_space<vmem>>) attributes {dimension_semantics = [#tpu.dimension_semantics<parallel>, #tpu.dimension_semantics<parallel>], iteration_bounds = array<i64: 2, 16>, scalar_prefetch = 0 : i64, scratch_operands = 1 : i64, tpu.core_type = #tpu.core_type<tc>, window_params = [{transform_indices = @transform_0, window_bounds = array<i64: 1, 1, 18, 4>}, {transform_indices = @transform_1, window_bounds = array<i64: 1, 1, 18, 4>}, {transform_indices = @transform_2, window_bounds = array<i64: 1, 1, 18, 4>}, {transform_indices = @transform_3, window_bounds = array<i64: 1, 1, 18, 4>}, {transform_indices = @transform_4, window_bounds = array<i64: 1, 1, 18, 4>}, {transform_indices = @transform_5, window_bounds = array<i64: 1, 1, 18, 4>}, {pipeline_mode = #tpu.pipeline_mode<synchronous>, transform_indices = @transform_6, window_bounds = array<i64: 4, 2>}, {pipeline_mode = #tpu.pipeline_mode<synchronous>, transform_indices = @transform_7, window_bounds = array<i64: 4, 2>}, {pipeline_mode = #tpu.pipeline_mode<synchronous>, transform_indices = @transform_8, window_bounds = array<i64: 1, 2>}, {pipeline_mode = #tpu.pipeline_mode<synchronous>, transform_indices = @transform_9, window_bounds = array<i64: 1, 2>}, {pipeline_mode = #tpu.pipeline_mode<synchronous>, transform_indices = @transform_10, window_bounds = array<i64: 1, 1>}, {pipeline_mode = #tpu.pipeline_mode<synchronous>, transform_indices = @transform_11, window_bounds = array<i64: 9, 4, 4>}, {pipeline_mode = #tpu.pipeline_mode<synchronous>, transform_indices = @transform_12, window_bounds = array<i64: 9, 4, 4>}, {pipeline_mode = #tpu.pipeline_mode<synchronous>, transform_indices = @transform_13, window_bounds = array<i64: 1, 4>}, {transform_indices = @transform_14, window_bounds = array<i64: 1, 1, 16, 4>}]} {
    %cst = arith.constant 0.000000e+00 : f32
    %0 = vector.broadcast %cst : f32 to vector<16x4xf32>
    %c0 = arith.constant 0 : index
    %c0_0 = arith.constant 0 : index
    %c0_1 = arith.constant 0 : index
    %c0_2 = arith.constant 0 : index
    %1 = vector.load %arg2[%c0, %c0_0, %c0_1, %c0_2] : memref<1x1x18x4xbf16, #tpu.memory_space<vmem>>, vector<1x1x18x4xbf16>
    %2 = vector.shape_cast %1 : vector<1x1x18x4xbf16> to vector<18x4xbf16>
    %c0_3 = arith.constant 0 : index
    %c0_4 = arith.constant 0 : index
    %c0_5 = arith.constant 0 : index
    %c0_6 = arith.constant 0 : index
    %3 = vector.load %arg5[%c0_3, %c0_4, %c0_5, %c0_6] : memref<1x1x18x4xbf16, #tpu.memory_space<vmem>>, vector<1x1x18x4xbf16>
    %4 = vector.shape_cast %3 : vector<1x1x18x4xbf16> to vector<18x4xbf16>
    %c0_7 = arith.constant 0 : index
    %c0_8 = arith.constant 0 : index
    %5 = vector.load %arg8[%c0_7, %c0_8] : memref<4x2xbf16, #tpu.memory_space<vmem>>, vector<4x2xbf16>
    %cst_9 = arith.constant dense<0.000000e+00> : vector<18x2xf32>
    %6 = tpu.matmul %2, %5, %cst_9 {dimension_numbers = #tpu.dot_dimension_numbers<[1], [0], [0], [1], [0, 0, 1, 1], [], []>} : vector<18x4xbf16>, vector<4x2xbf16>, vector<18x2xf32> -> vector<18x2xf32>
    %c0_10 = arith.constant 0 : index
    %c0_11 = arith.constant 0 : index
    %7 = vector.load %arg9[%c0_10, %c0_11] : memref<4x2xbf16, #tpu.memory_space<vmem>>, vector<4x2xbf16>
    %cst_12 = arith.constant dense<0.000000e+00> : vector<18x2xf32>
    %8 = tpu.matmul %4, %7, %cst_12 {dimension_numbers = #tpu.dot_dimension_numbers<[1], [0], [0], [1], [0, 0, 1, 1], [], []>} : vector<18x4xbf16>, vector<4x2xbf16>, vector<18x2xf32> -> vector<18x2xf32>
    %9 = arith.addf %6, %8 : vector<18x2xf32>
    %c0_13 = arith.constant 0 : index
    %c0_14 = arith.constant 0 : index
    %10 = vector.load %arg10[%c0_13, %c0_14] : memref<1x2xf32, #tpu.memory_space<vmem>>, vector<1x2xf32>
    %11 = vector.broadcast %10 : vector<1x2xf32> to vector<18x2xf32>
    %12 = arith.addf %9, %11 : vector<18x2xf32>
    %cst_15 = arith.constant 0.000000e+00 : f32
    %13 = vector.broadcast %cst_15 : f32 to vector<18x2xf32>
    %14 = arith.maximumf %12, %13 : vector<18x2xf32>
    %c0_16 = arith.constant 0 : index
    %c0_17 = arith.constant 0 : index
    %15 = vector.load %arg11[%c0_16, %c0_17] : memref<1x2xf32, #tpu.memory_space<vmem>>, vector<1x2xf32>
    %16 = vector.broadcast %15 : vector<1x2xf32> to vector<18x2xf32>
    %17 = arith.mulf %14, %16 : vector<18x2xf32>
    %cst_18 = arith.constant dense<0.000000e+00> : vector<18xf32>
    %18 = vector.multi_reduction <add>, %17, %cst_18 [1] : vector<18x2xf32> to vector<18xf32>
    %19 = vector.shape_cast %18 : vector<18xf32> to vector<18x1xf32>
    %c0_19 = arith.constant 0 : index
    %c0_20 = arith.constant 0 : index
    %20 = vector.load %arg12[%c0_19, %c0_20] : memref<1x1xf32, #tpu.memory_space<vmem>>, vector<1x1xf32>
    %21 = vector.broadcast %20 : vector<1x1xf32> to vector<18x1xf32>
    %22 = arith.addf %19, %21 : vector<18x1xf32>
    %23 = arith.negf %22 : vector<18x1xf32>
    %24 = math.exp %23 : vector<18x1xf32>
    %cst_21 = arith.constant 1.000000e+00 : f32
    %25 = vector.broadcast %cst_21 : f32 to vector<18x1xf32>
    %26 = arith.addf %25, %24 : vector<18x1xf32>
    %27 = arith.divf %25, %26 : vector<18x1xf32>
    %28 = arith.extf %4 : vector<18x4xbf16> to vector<18x4xf32>
    %29 = vector.broadcast %27 : vector<18x1xf32> to vector<18x4xf32>
    %30 = arith.mulf %28, %29 : vector<18x4xf32>
    %31 = arith.truncf %30 : vector<18x4xf32> to vector<18x4xbf16>
    %c0_22 = arith.constant 0 : index
    %c0_23 = arith.constant 0 : index
    %32 = vector.load %arg17[%c0_22, %c0_23] : memref<18x4xbf16, #tpu.memory_space<vmem>>, vector<18x4xbf16>
    tpu.vector_store %arg17[%c0_22, %c0_23], %31 {strides = array<i32>} : memref<18x4xbf16, #tpu.memory_space<vmem>>, vector<18x4xbf16>,
    %c0_24 = arith.constant 0 : index
    %c0_25 = arith.constant 0 : index
    %33 = vector.load %arg17[%c0_24, %c0_25] : memref<18x4xbf16, #tpu.memory_space<vmem>>, vector<16x4xbf16>
    %c0_26 = arith.constant 0 : index
    %c0_27 = arith.constant 0 : index
    %c0_28 = arith.constant 0 : index
    %34 = vector.load %arg13[%c0_26, %c0_27, %c0_28] : memref<9x4x4xbf16, #tpu.memory_space<vmem>>, vector<1x4x4xbf16>
    %35 = vector.shape_cast %34 : vector<1x4x4xbf16> to vector<4x4xbf16>
    %cst_29 = arith.constant dense<0.000000e+00> : vector<16x4xf32>
    %36 = tpu.matmul %33, %35, %cst_29 {dimension_numbers = #tpu.dot_dimension_numbers<[1], [0], [0], [1], [0, 0, 1, 1], [], []>} : vector<16x4xbf16>, vector<4x4xbf16>, vector<16x4xf32> -> vector<16x4xf32>
    %37 = arith.addf %0, %36 : vector<16x4xf32>
    %c0_30 = arith.constant 0 : index
    %c0_31 = arith.constant 0 : index
    %c0_32 = arith.constant 0 : index
    %c0_33 = arith.constant 0 : index
    %38 = vector.load %arg2[%c0_30, %c0_31, %c0_32, %c0_33] : memref<1x1x18x4xbf16, #tpu.memory_space<vmem>>, vector<1x1x16x4xbf16>
    %39 = vector.shape_cast %38 : vector<1x1x16x4xbf16> to vector<16x4xbf16>
    %c0_34 = arith.constant 0 : index
    %c0_35 = arith.constant 0 : index
    %c0_36 = arith.constant 0 : index
    %40 = vector.load %arg14[%c0_34, %c0_35, %c0_36] : memref<9x4x4xbf16, #tpu.memory_space<vmem>>, vector<1x4x4xbf16>
    %41 = vector.shape_cast %40 : vector<1x4x4xbf16> to vector<4x4xbf16>
    %cst_37 = arith.constant dense<0.000000e+00> : vector<16x4xf32>
    %42 = tpu.matmul %39, %41, %cst_37 {dimension_numbers = #tpu.dot_dimension_numbers<[1], [0], [0], [1], [0, 0, 1, 1], [], []>} : vector<16x4xbf16>, vector<4x4xbf16>, vector<16x4xf32> -> vector<16x4xf32>
    %43 = arith.addf %37, %42 : vector<16x4xf32>
    %c1 = arith.constant 1 : index
    %c0_38 = arith.constant 0 : index
    %44 = vector.load %arg17[%c1, %c0_38] : memref<18x4xbf16, #tpu.memory_space<vmem>>, vector<16x4xbf16>
    %c1_39 = arith.constant 1 : index
    %c0_40 = arith.constant 0 : index
    %c0_41 = arith.constant 0 : index
    %45 = vector.load %arg13[%c1_39, %c0_40, %c0_41] : memref<9x4x4xbf16, #tpu.memory_space<vmem>>, vector<1x4x4xbf16>
    %46 = vector.shape_cast %45 : vector<1x4x4xbf16> to vector<4x4xbf16>
    %cst_42 = arith.constant dense<0.000000e+00> : vector<16x4xf32>
    %47 = tpu.matmul %44, %46, %cst_42 {dimension_numbers = #tpu.dot_dimension_numbers<[1], [0], [0], [1], [0, 0, 1, 1], [], []>} : vector<16x4xbf16>, vector<4x4xbf16>, vector<16x4xf32> -> vector<16x4xf32>
    %48 = arith.addf %43, %47 : vector<16x4xf32>
    %c0_43 = arith.constant 0 : index
    %c0_44 = arith.constant 0 : index
    %c1_45 = arith.constant 1 : index
    %c0_46 = arith.constant 0 : index
    %49 = vector.load %arg2[%c0_43, %c0_44, %c1_45, %c0_46] : memref<1x1x18x4xbf16, #tpu.memory_space<vmem>>, vector<1x1x16x4xbf16>
    %50 = vector.shape_cast %49 : vector<1x1x16x4xbf16> to vector<16x4xbf16>
    %c1_47 = arith.constant 1 : index
    %c0_48 = arith.constant 0 : index
    %c0_49 = arith.constant 0 : index
    %51 = vector.load %arg14[%c1_47, %c0_48, %c0_49] : memref<9x4x4xbf16, #tpu.memory_space<vmem>>, vector<1x4x4xbf16>
    %52 = vector.shape_cast %51 : vector<1x4x4xbf16> to vector<4x4xbf16>
    %cst_50 = arith.constant dense<0.000000e+00> : vector<16x4xf32>
    %53 = tpu.matmul %50, %52, %cst_50 {dimension_numbers = #tpu.dot_dimension_numbers<[1], [0], [0], [1], [0, 0, 1, 1], [], []>} : vector<16x4xbf16>, vector<4x4xbf16>, vector<16x4xf32> -> vector<16x4xf32>
    %54 = arith.addf %48, %53 : vector<16x4xf32>
    %c2 = arith.constant 2 : index
    %c0_51 = arith.constant 0 : index
    %55 = vector.load %arg17[%c2, %c0_51] : memref<18x4xbf16, #tpu.memory_space<vmem>>, vector<16x4xbf16>
    %c2_52 = arith.constant 2 : index
    %c0_53 = arith.constant 0 : index
    %c0_54 = arith.constant 0 : index
    %56 = vector.load %arg13[%c2_52, %c0_53, %c0_54] : memref<9x4x4xbf16, #tpu.memory_space<vmem>>, vector<1x4x4xbf16>
    %57 = vector.shape_cast %56 : vector<1x4x4xbf16> to vector<4x4xbf16>
    %cst_55 = arith.constant dense<0.000000e+00> : vector<16x4xf32>
    %58 = tpu.matmul %55, %57, %cst_55 {dimension_numbers = #tpu.dot_dimension_numbers<[1], [0], [0], [1], [0, 0, 1, 1], [], []>} : vector<16x4xbf16>, vector<4x4xbf16>, vector<16x4xf32> -> vector<16x4xf32>
    %59 = arith.addf %54, %58 : vector<16x4xf32>
    %c0_56 = arith.constant 0 : index
    %c0_57 = arith.constant 0 : index
    %c2_58 = arith.constant 2 : index
    %c0_59 = arith.constant 0 : index
    %60 = vector.load %arg2[%c0_56, %c0_57, %c2_58, %c0_59] : memref<1x1x18x4xbf16, #tpu.memory_space<vmem>>, vector<1x1x16x4xbf16>
    %61 = vector.shape_cast %60 : vector<1x1x16x4xbf16> to vector<16x4xbf16>
    %c2_60 = arith.constant 2 : index
    %c0_61 = arith.constant 0 : index
    %c0_62 = arith.constant 0 : index
    %62 = vector.load %arg14[%c2_60, %c0_61, %c0_62] : memref<9x4x4xbf16, #tpu.memory_space<vmem>>, vector<1x4x4xbf16>
    %63 = vector.shape_cast %62 : vector<1x4x4xbf16> to vector<4x4xbf16>
    %cst_63 = arith.constant dense<0.000000e+00> : vector<16x4xf32>
    %64 = tpu.matmul %61, %63, %cst_63 {dimension_numbers = #tpu.dot_dimension_numbers<[1], [0], [0], [1], [0, 0, 1, 1], [], []>} : vector<16x4xbf16>, vector<4x4xbf16>, vector<16x4xf32> -> vector<16x4xf32>
    %65 = arith.addf %59, %64 : vector<16x4xf32>
    %c0_64 = arith.constant 0 : index
    %c0_65 = arith.constant 0 : index
    %c0_66 = arith.constant 0 : index
    %c0_67 = arith.constant 0 : index
    %66 = vector.load %arg3[%c0_64, %c0_65, %c0_66, %c0_67] : memref<1x1x18x4xbf16, #tpu.memory_space<vmem>>, vector<1x1x18x4xbf16>
    %67 = vector.shape_cast %66 : vector<1x1x18x4xbf16> to vector<18x4xbf16>
    %c0_68 = arith.constant 0 : index
    %c0_69 = arith.constant 0 : index
    %c0_70 = arith.constant 0 : index
    %c0_71 = arith.constant 0 : index
    %68 = vector.load %arg6[%c0_68, %c0_69, %c0_70, %c0_71] : memref<1x1x18x4xbf16, #tpu.memory_space<vmem>>, vector<1x1x18x4xbf16>
    %69 = vector.shape_cast %68 : vector<1x1x18x4xbf16> to vector<18x4xbf16>
    %c0_72 = arith.constant 0 : index
    %c0_73 = arith.constant 0 : index
    %70 = vector.load %arg8[%c0_72, %c0_73] : memref<4x2xbf16, #tpu.memory_space<vmem>>, vector<4x2xbf16>
    %cst_74 = arith.constant dense<0.000000e+00> : vector<18x2xf32>
    %71 = tpu.matmul %67, %70, %cst_74 {dimension_numbers = #tpu.dot_dimension_numbers<[1], [0], [0], [1], [0, 0, 1, 1], [], []>} : vector<18x4xbf16>, vector<4x2xbf16>, vector<18x2xf32> -> vector<18x2xf32>
    %c0_75 = arith.constant 0 : index
    %c0_76 = arith.constant 0 : index
    %72 = vector.load %arg9[%c0_75, %c0_76] : memref<4x2xbf16, #tpu.memory_space<vmem>>, vector<4x2xbf16>
    %cst_77 = arith.constant dense<0.000000e+00> : vector<18x2xf32>
    %73 = tpu.matmul %69, %72, %cst_77 {dimension_numbers = #tpu.dot_dimension_numbers<[1], [0], [0], [1], [0, 0, 1, 1], [], []>} : vector<18x4xbf16>, vector<4x2xbf16>, vector<18x2xf32> -> vector<18x2xf32>
    %74 = arith.addf %71, %73 : vector<18x2xf32>
    %c0_78 = arith.constant 0 : index
    %c0_79 = arith.constant 0 : index
    %75 = vector.load %arg10[%c0_78, %c0_79] : memref<1x2xf32, #tpu.memory_space<vmem>>, vector<1x2xf32>
    %76 = vector.broadcast %75 : vector<1x2xf32> to vector<18x2xf32>
    %77 = arith.addf %74, %76 : vector<18x2xf32>
    %cst_80 = arith.constant 0.000000e+00 : f32
    %78 = vector.broadcast %cst_80 : f32 to vector<18x2xf32>
    %79 = arith.maximumf %77, %78 : vector<18x2xf32>
    %c0_81 = arith.constant 0 : index
    %c0_82 = arith.constant 0 : index
    %80 = vector.load %arg11[%c0_81, %c0_82] : memref<1x2xf32, #tpu.memory_space<vmem>>, vector<1x2xf32>
    %81 = vector.broadcast %80 : vector<1x2xf32> to vector<18x2xf32>
    %82 = arith.mulf %79, %81 : vector<18x2xf32>
    %cst_83 = arith.constant dense<0.000000e+00> : vector<18xf32>
    %83 = vector.multi_reduction <add>, %82, %cst_83 [1] : vector<18x2xf32> to vector<18xf32>
    %84 = vector.shape_cast %83 : vector<18xf32> to vector<18x1xf32>
    %c0_84 = arith.constant 0 : index
    %c0_85 = arith.constant 0 : index
    %85 = vector.load %arg12[%c0_84, %c0_85] : memref<1x1xf32, #tpu.memory_space<vmem>>, vector<1x1xf32>
    %86 = vector.broadcast %85 : vector<1x1xf32> to vector<18x1xf32>
    %87 = arith.addf %84, %86 : vector<18x1xf32>
    %88 = arith.negf %87 : vector<18x1xf32>
    %89 = math.exp %88 : vector<18x1xf32>
    %cst_86 = arith.constant 1.000000e+00 : f32
    %90 = vector.broadcast %cst_86 : f32 to vector<18x1xf32>
    %91 = arith.addf %90, %89 : vector<18x1xf32>
    %92 = arith.divf %90, %91 : vector<18x1xf32>
    %93 = arith.extf %69 : vector<18x4xbf16> to vector<18x4xf32>
    %94 = vector.broadcast %92 : vector<18x1xf32> to vector<18x4xf32>
    %95 = arith.mulf %93, %94 : vector<18x4xf32>
    %96 = arith.truncf %95 : vector<18x4xf32> to vector<18x4xbf16>
    %c0_87 = arith.constant 0 : index
    %c0_88 = arith.constant 0 : index
    %97 = vector.load %arg17[%c0_87, %c0_88] : memref<18x4xbf16, #tpu.memory_space<vmem>>, vector<18x4xbf16>
    tpu.vector_store %arg17[%c0_87, %c0_88], %96 {strides = array<i32>} : memref<18x4xbf16, #tpu.memory_space<vmem>>, vector<18x4xbf16>,
    %c0_89 = arith.constant 0 : index
    %c0_90 = arith.constant 0 : index
    %98 = vector.load %arg17[%c0_89, %c0_90] : memref<18x4xbf16, #tpu.memory_space<vmem>>, vector<16x4xbf16>
    %c3 = arith.constant 3 : index
    %c0_91 = arith.constant 0 : index
    %c0_92 = arith.constant 0 : index
    %99 = vector.load %arg13[%c3, %c0_91, %c0_92] : memref<9x4x4xbf16, #tpu.memory_space<vmem>>, vector<1x4x4xbf16>
    %100 = vector.shape_cast %99 : vector<1x4x4xbf16> to vector<4x4xbf16>
    %cst_93 = arith.constant dense<0.000000e+00> : vector<16x4xf32>
    %101 = tpu.matmul %98, %100, %cst_93 {dimension_numbers = #tpu.dot_dimension_numbers<[1], [0], [0], [1], [0, 0, 1, 1], [], []>} : vector<16x4xbf16>, vector<4x4xbf16>, vector<16x4xf32> -> vector<16x4xf32>
    %102 = arith.addf %65, %101 : vector<16x4xf32>
    %c0_94 = arith.constant 0 : index
    %c0_95 = arith.constant 0 : index
    %c0_96 = arith.constant 0 : index
    %c0_97 = arith.constant 0 : index
    %103 = vector.load %arg3[%c0_94, %c0_95, %c0_96, %c0_97] : memref<1x1x18x4xbf16, #tpu.memory_space<vmem>>, vector<1x1x16x4xbf16>
    %104 = vector.shape_cast %103 : vector<1x1x16x4xbf16> to vector<16x4xbf16>
    %c3_98 = arith.constant 3 : index
    %c0_99 = arith.constant 0 : index
    %c0_100 = arith.constant 0 : index
    %105 = vector.load %arg14[%c3_98, %c0_99, %c0_100] : memref<9x4x4xbf16, #tpu.memory_space<vmem>>, vector<1x4x4xbf16>
    %106 = vector.shape_cast %105 : vector<1x4x4xbf16> to vector<4x4xbf16>
    %cst_101 = arith.constant dense<0.000000e+00> : vector<16x4xf32>
    %107 = tpu.matmul %104, %106, %cst_101 {dimension_numbers = #tpu.dot_dimension_numbers<[1], [0], [0], [1], [0, 0, 1, 1], [], []>} : vector<16x4xbf16>, vector<4x4xbf16>, vector<16x4xf32> -> vector<16x4xf32>
    %108 = arith.addf %102, %107 : vector<16x4xf32>
    %c1_102 = arith.constant 1 : index
    %c0_103 = arith.constant 0 : index
    %109 = vector.load %arg17[%c1_102, %c0_103] : memref<18x4xbf16, #tpu.memory_space<vmem>>, vector<16x4xbf16>
    %c4 = arith.constant 4 : index
    %c0_104 = arith.constant 0 : index
    %c0_105 = arith.constant 0 : index
    %110 = vector.load %arg13[%c4, %c0_104, %c0_105] : memref<9x4x4xbf16, #tpu.memory_space<vmem>>, vector<1x4x4xbf16>
    %111 = vector.shape_cast %110 : vector<1x4x4xbf16> to vector<4x4xbf16>
    %cst_106 = arith.constant dense<0.000000e+00> : vector<16x4xf32>
    %112 = tpu.matmul %109, %111, %cst_106 {dimension_numbers = #tpu.dot_dimension_numbers<[1], [0], [0], [1], [0, 0, 1, 1], [], []>} : vector<16x4xbf16>, vector<4x4xbf16>, vector<16x4xf32> -> vector<16x4xf32>
    %113 = arith.addf %108, %112 : vector<16x4xf32>
    %c0_107 = arith.constant 0 : index
    %c0_108 = arith.constant 0 : index
    %c1_109 = arith.constant 1 : index
    %c0_110 = arith.constant 0 : index
    %114 = vector.load %arg3[%c0_107, %c0_108, %c1_109, %c0_110] : memref<1x1x18x4xbf16, #tpu.memory_space<vmem>>, vector<1x1x16x4xbf16>
    %115 = vector.shape_cast %114 : vector<1x1x16x4xbf16> to vector<16x4xbf16>
    %c4_111 = arith.constant 4 : index
    %c0_112 = arith.constant 0 : index
    %c0_113 = arith.constant 0 : index
    %116 = vector.load %arg14[%c4_111, %c0_112, %c0_113] : memref<9x4x4xbf16, #tpu.memory_space<vmem>>, vector<1x4x4xbf16>
    %117 = vector.shape_cast %116 : vector<1x4x4xbf16> to vector<4x4xbf16>
    %cst_114 = arith.constant dense<0.000000e+00> : vector<16x4xf32>
    %118 = tpu.matmul %115, %117, %cst_114 {dimension_numbers = #tpu.dot_dimension_numbers<[1], [0], [0], [1], [0, 0, 1, 1], [], []>} : vector<16x4xbf16>, vector<4x4xbf16>, vector<16x4xf32> -> vector<16x4xf32>
    %119 = arith.addf %113, %118 : vector<16x4xf32>
    %c2_115 = arith.constant 2 : index
    %c0_116 = arith.constant 0 : index
    %120 = vector.load %arg17[%c2_115, %c0_116] : memref<18x4xbf16, #tpu.memory_space<vmem>>, vector<16x4xbf16>
    %c5 = arith.constant 5 : index
    %c0_117 = arith.constant 0 : index
    %c0_118 = arith.constant 0 : index
    %121 = vector.load %arg13[%c5, %c0_117, %c0_118] : memref<9x4x4xbf16, #tpu.memory_space<vmem>>, vector<1x4x4xbf16>
    %122 = vector.shape_cast %121 : vector<1x4x4xbf16> to vector<4x4xbf16>
    %cst_119 = arith.constant dense<0.000000e+00> : vector<16x4xf32>
    %123 = tpu.matmul %120, %122, %cst_119 {dimension_numbers = #tpu.dot_dimension_numbers<[1], [0], [0], [1], [0, 0, 1, 1], [], []>} : vector<16x4xbf16>, vector<4x4xbf16>, vector<16x4xf32> -> vector<16x4xf32>
    %124 = arith.addf %119, %123 : vector<16x4xf32>
    %c0_120 = arith.constant 0 : index
    %c0_121 = arith.constant 0 : index
    %c2_122 = arith.constant 2 : index
    %c0_123 = arith.constant 0 : index
    %125 = vector.load %arg3[%c0_120, %c0_121, %c2_122, %c0_123] : memref<1x1x18x4xbf16, #tpu.memory_space<vmem>>, vector<1x1x16x4xbf16>
    %126 = vector.shape_cast %125 : vector<1x1x16x4xbf16> to vector<16x4xbf16>
    %c5_124 = arith.constant 5 : index
    %c0_125 = arith.constant 0 : index
    %c0_126 = arith.constant 0 : index
    %127 = vector.load %arg14[%c5_124, %c0_125, %c0_126] : memref<9x4x4xbf16, #tpu.memory_space<vmem>>, vector<1x4x4xbf16>
    %128 = vector.shape_cast %127 : vector<1x4x4xbf16> to vector<4x4xbf16>
    %cst_127 = arith.constant dense<0.000000e+00> : vector<16x4xf32>
    %129 = tpu.matmul %126, %128, %cst_127 {dimension_numbers = #tpu.dot_dimension_numbers<[1], [0], [0], [1], [0, 0, 1, 1], [], []>} : vector<16x4xbf16>, vector<4x4xbf16>, vector<16x4xf32> -> vector<16x4xf32>
    %130 = arith.addf %124, %129 : vector<16x4xf32>
    %c0_128 = arith.constant 0 : index
    %c0_129 = arith.constant 0 : index
    %c0_130 = arith.constant 0 : index
    %c0_131 = arith.constant 0 : index
    %131 = vector.load %arg4[%c0_128, %c0_129, %c0_130, %c0_131] : memref<1x1x18x4xbf16, #tpu.memory_space<vmem>>, vector<1x1x18x4xbf16>
    %132 = vector.shape_cast %131 : vector<1x1x18x4xbf16> to vector<18x4xbf16>
    %c0_132 = arith.constant 0 : index
    %c0_133 = arith.constant 0 : index
    %c0_134 = arith.constant 0 : index
    %c0_135 = arith.constant 0 : index
    %133 = vector.load %arg7[%c0_132, %c0_133, %c0_134, %c0_135] : memref<1x1x18x4xbf16, #tpu.memory_space<vmem>>, vector<1x1x18x4xbf16>
    %134 = vector.shape_cast %133 : vector<1x1x18x4xbf16> to vector<18x4xbf16>
    %c0_136 = arith.constant 0 : index
    %c0_137 = arith.constant 0 : index
    %135 = vector.load %arg8[%c0_136, %c0_137] : memref<4x2xbf16, #tpu.memory_space<vmem>>, vector<4x2xbf16>
    %cst_138 = arith.constant dense<0.000000e+00> : vector<18x2xf32>
    %136 = tpu.matmul %132, %135, %cst_138 {dimension_numbers = #tpu.dot_dimension_numbers<[1], [0], [0], [1], [0, 0, 1, 1], [], []>} : vector<18x4xbf16>, vector<4x2xbf16>, vector<18x2xf32> -> vector<18x2xf32>
    %c0_139 = arith.constant 0 : index
    %c0_140 = arith.constant 0 : index
    %137 = vector.load %arg9[%c0_139, %c0_140] : memref<4x2xbf16, #tpu.memory_space<vmem>>, vector<4x2xbf16>
    %cst_141 = arith.constant dense<0.000000e+00> : vector<18x2xf32>
    %138 = tpu.matmul %134, %137, %cst_141 {dimension_numbers = #tpu.dot_dimension_numbers<[1], [0], [0], [1], [0, 0, 1, 1], [], []>} : vector<18x4xbf16>, vector<4x2xbf16>, vector<18x2xf32> -> vector<18x2xf32>
    %139 = arith.addf %136, %138 : vector<18x2xf32>
    %c0_142 = arith.constant 0 : index
    %c0_143 = arith.constant 0 : index
    %140 = vector.load %arg10[%c0_142, %c0_143] : memref<1x2xf32, #tpu.memory_space<vmem>>, vector<1x2xf32>
    %141 = vector.broadcast %140 : vector<1x2xf32> to vector<18x2xf32>
    %142 = arith.addf %139, %141 : vector<18x2xf32>
    %cst_144 = arith.constant 0.000000e+00 : f32
    %143 = vector.broadcast %cst_144 : f32 to vector<18x2xf32>
    %144 = arith.maximumf %142, %143 : vector<18x2xf32>
    %c0_145 = arith.constant 0 : index
    %c0_146 = arith.constant 0 : index
    %145 = vector.load %arg11[%c0_145, %c0_146] : memref<1x2xf32, #tpu.memory_space<vmem>>, vector<1x2xf32>
    %146 = vector.broadcast %145 : vector<1x2xf32> to vector<18x2xf32>
    %147 = arith.mulf %144, %146 : vector<18x2xf32>
    %cst_147 = arith.constant dense<0.000000e+00> : vector<18xf32>
    %148 = vector.multi_reduction <add>, %147, %cst_147 [1] : vector<18x2xf32> to vector<18xf32>
    %149 = vector.shape_cast %148 : vector<18xf32> to vector<18x1xf32>
    %c0_148 = arith.constant 0 : index
    %c0_149 = arith.constant 0 : index
    %150 = vector.load %arg12[%c0_148, %c0_149] : memref<1x1xf32, #tpu.memory_space<vmem>>, vector<1x1xf32>
    %151 = vector.broadcast %150 : vector<1x1xf32> to vector<18x1xf32>
    %152 = arith.addf %149, %151 : vector<18x1xf32>
    %153 = arith.negf %152 : vector<18x1xf32>
    %154 = math.exp %153 : vector<18x1xf32>
    %cst_150 = arith.constant 1.000000e+00 : f32
    %155 = vector.broadcast %cst_150 : f32 to vector<18x1xf32>
    %156 = arith.addf %155, %154 : vector<18x1xf32>
    %157 = arith.divf %155, %156 : vector<18x1xf32>
    %158 = arith.extf %134 : vector<18x4xbf16> to vector<18x4xf32>
    %159 = vector.broadcast %157 : vector<18x1xf32> to vector<18x4xf32>
    %160 = arith.mulf %158, %159 : vector<18x4xf32>
    %161 = arith.truncf %160 : vector<18x4xf32> to vector<18x4xbf16>
    %c0_151 = arith.constant 0 : index
    %c0_152 = arith.constant 0 : index
    %162 = vector.load %arg17[%c0_151, %c0_152] : memref<18x4xbf16, #tpu.memory_space<vmem>>, vector<18x4xbf16>
    tpu.vector_store %arg17[%c0_151, %c0_152], %161 {strides = array<i32>} : memref<18x4xbf16, #tpu.memory_space<vmem>>, vector<18x4xbf16>,
    %c0_153 = arith.constant 0 : index
    %c0_154 = arith.constant 0 : index
    %163 = vector.load %arg17[%c0_153, %c0_154] : memref<18x4xbf16, #tpu.memory_space<vmem>>, vector<16x4xbf16>
    %c6 = arith.constant 6 : index
    %c0_155 = arith.constant 0 : index
    %c0_156 = arith.constant 0 : index
    %164 = vector.load %arg13[%c6, %c0_155, %c0_156] : memref<9x4x4xbf16, #tpu.memory_space<vmem>>, vector<1x4x4xbf16>
    %165 = vector.shape_cast %164 : vector<1x4x4xbf16> to vector<4x4xbf16>
    %cst_157 = arith.constant dense<0.000000e+00> : vector<16x4xf32>
    %166 = tpu.matmul %163, %165, %cst_157 {dimension_numbers = #tpu.dot_dimension_numbers<[1], [0], [0], [1], [0, 0, 1, 1], [], []>} : vector<16x4xbf16>, vector<4x4xbf16>, vector<16x4xf32> -> vector<16x4xf32>
    %167 = arith.addf %130, %166 : vector<16x4xf32>
    %c0_158 = arith.constant 0 : index
    %c0_159 = arith.constant 0 : index
    %c0_160 = arith.constant 0 : index
    %c0_161 = arith.constant 0 : index
    %168 = vector.load %arg4[%c0_158, %c0_159, %c0_160, %c0_161] : memref<1x1x18x4xbf16, #tpu.memory_space<vmem>>, vector<1x1x16x4xbf16>
    %169 = vector.shape_cast %168 : vector<1x1x16x4xbf16> to vector<16x4xbf16>
    %c6_162 = arith.constant 6 : index
    %c0_163 = arith.constant 0 : index
    %c0_164 = arith.constant 0 : index
    %170 = vector.load %arg14[%c6_162, %c0_163, %c0_164] : memref<9x4x4xbf16, #tpu.memory_space<vmem>>, vector<1x4x4xbf16>
    %171 = vector.shape_cast %170 : vector<1x4x4xbf16> to vector<4x4xbf16>
    %cst_165 = arith.constant dense<0.000000e+00> : vector<16x4xf32>
    %172 = tpu.matmul %169, %171, %cst_165 {dimension_numbers = #tpu.dot_dimension_numbers<[1], [0], [0], [1], [0, 0, 1, 1], [], []>} : vector<16x4xbf16>, vector<4x4xbf16>, vector<16x4xf32> -> vector<16x4xf32>
    %173 = arith.addf %167, %172 : vector<16x4xf32>
    %c1_166 = arith.constant 1 : index
    %c0_167 = arith.constant 0 : index
    %174 = vector.load %arg17[%c1_166, %c0_167] : memref<18x4xbf16, #tpu.memory_space<vmem>>, vector<16x4xbf16>
    %c7 = arith.constant 7 : index
    %c0_168 = arith.constant 0 : index
    %c0_169 = arith.constant 0 : index
    %175 = vector.load %arg13[%c7, %c0_168, %c0_169] : memref<9x4x4xbf16, #tpu.memory_space<vmem>>, vector<1x4x4xbf16>
    %176 = vector.shape_cast %175 : vector<1x4x4xbf16> to vector<4x4xbf16>
    %cst_170 = arith.constant dense<0.000000e+00> : vector<16x4xf32>
    %177 = tpu.matmul %174, %176, %cst_170 {dimension_numbers = #tpu.dot_dimension_numbers<[1], [0], [0], [1], [0, 0, 1, 1], [], []>} : vector<16x4xbf16>, vector<4x4xbf16>, vector<16x4xf32> -> vector<16x4xf32>
    %178 = arith.addf %173, %177 : vector<16x4xf32>
    %c0_171 = arith.constant 0 : index
    %c0_172 = arith.constant 0 : index
    %c1_173 = arith.constant 1 : index
    %c0_174 = arith.constant 0 : index
    %179 = vector.load %arg4[%c0_171, %c0_172, %c1_173, %c0_174] : memref<1x1x18x4xbf16, #tpu.memory_space<vmem>>, vector<1x1x16x4xbf16>
    %180 = vector.shape_cast %179 : vector<1x1x16x4xbf16> to vector<16x4xbf16>
    %c7_175 = arith.constant 7 : index
    %c0_176 = arith.constant 0 : index
    %c0_177 = arith.constant 0 : index
    %181 = vector.load %arg14[%c7_175, %c0_176, %c0_177] : memref<9x4x4xbf16, #tpu.memory_space<vmem>>, vector<1x4x4xbf16>
    %182 = vector.shape_cast %181 : vector<1x4x4xbf16> to vector<4x4xbf16>
    %cst_178 = arith.constant dense<0.000000e+00> : vector<16x4xf32>
    %183 = tpu.matmul %180, %182, %cst_178 {dimension_numbers = #tpu.dot_dimension_numbers<[1], [0], [0], [1], [0, 0, 1, 1], [], []>} : vector<16x4xbf16>, vector<4x4xbf16>, vector<16x4xf32> -> vector<16x4xf32>
    %184 = arith.addf %178, %183 : vector<16x4xf32>
    %c2_179 = arith.constant 2 : index
    %c0_180 = arith.constant 0 : index
    %185 = vector.load %arg17[%c2_179, %c0_180] : memref<18x4xbf16, #tpu.memory_space<vmem>>, vector<16x4xbf16>
    %c8 = arith.constant 8 : index
    %c0_181 = arith.constant 0 : index
    %c0_182 = arith.constant 0 : index
    %186 = vector.load %arg13[%c8, %c0_181, %c0_182] : memref<9x4x4xbf16, #tpu.memory_space<vmem>>, vector<1x4x4xbf16>
    %187 = vector.shape_cast %186 : vector<1x4x4xbf16> to vector<4x4xbf16>
    %cst_183 = arith.constant dense<0.000000e+00> : vector<16x4xf32>
    %188 = tpu.matmul %185, %187, %cst_183 {dimension_numbers = #tpu.dot_dimension_numbers<[1], [0], [0], [1], [0, 0, 1, 1], [], []>} : vector<16x4xbf16>, vector<4x4xbf16>, vector<16x4xf32> -> vector<16x4xf32>
    %189 = arith.addf %184, %188 : vector<16x4xf32>
    %c0_184 = arith.constant 0 : index
    %c0_185 = arith.constant 0 : index
    %c2_186 = arith.constant 2 : index
    %c0_187 = arith.constant 0 : index
    %190 = vector.load %arg4[%c0_184, %c0_185, %c2_186, %c0_187] : memref<1x1x18x4xbf16, #tpu.memory_space<vmem>>, vector<1x1x16x4xbf16>
    %191 = vector.shape_cast %190 : vector<1x1x16x4xbf16> to vector<16x4xbf16>
    %c8_188 = arith.constant 8 : index
    %c0_189 = arith.constant 0 : index
    %c0_190 = arith.constant 0 : index
    %192 = vector.load %arg14[%c8_188, %c0_189, %c0_190] : memref<9x4x4xbf16, #tpu.memory_space<vmem>>, vector<1x4x4xbf16>
    %193 = vector.shape_cast %192 : vector<1x4x4xbf16> to vector<4x4xbf16>
    %cst_191 = arith.constant dense<0.000000e+00> : vector<16x4xf32>
    %194 = tpu.matmul %191, %193, %cst_191 {dimension_numbers = #tpu.dot_dimension_numbers<[1], [0], [0], [1], [0, 0, 1, 1], [], []>} : vector<16x4xbf16>, vector<4x4xbf16>, vector<16x4xf32> -> vector<16x4xf32>
    %195 = arith.addf %189, %194 : vector<16x4xf32>
    %c0_192 = arith.constant 0 : index
    %c0_193 = arith.constant 0 : index
    %196 = vector.load %arg15[%c0_192, %c0_193] : memref<1x4xf32, #tpu.memory_space<vmem>>, vector<1x4xf32>
    %197 = vector.broadcast %196 : vector<1x4xf32> to vector<16x4xf32>
    %198 = arith.addf %195, %197 : vector<16x4xf32>
    %cst_194 = arith.constant 0.000000e+00 : f32
    %199 = vector.broadcast %cst_194 : f32 to vector<16x4xf32>
    %200 = arith.maximumf %198, %199 : vector<16x4xf32>
    %201 = arith.truncf %200 : vector<16x4xf32> to vector<16x4xbf16>
    %c0_195 = arith.constant 0 : index
    %c0_196 = arith.constant 0 : index
    %c0_197 = arith.constant 0 : index
    %c0_198 = arith.constant 0 : index
    %202 = vector.load %arg16[%c0_195, %c0_196, %c0_197, %c0_198] : memref<1x1x16x4xbf16, #tpu.memory_space<vmem>>, vector<1x1x16x4xbf16>
    %203 = vector.shape_cast %202 : vector<1x1x16x4xbf16> to vector<16x4xbf16>
    %204 = vector.shape_cast %201 : vector<16x4xbf16> to vector<1x1x16x4xbf16>
    tpu.vector_store %arg16[%c0_195, %c0_196, %c0_197, %c0_198], %204 {strides = array<i32>} : memref<1x1x16x4xbf16, #tpu.memory_space<vmem>>, vector<1x1x16x4xbf16>,
    return
  }
  func.func @transform_0(%arg0: i32, %arg1: i32) -> (i32, i32, i32, i32) {
    %c0_i32 = arith.constant 0 : i32
    %0 = arith.addi %arg1, %c0_i32 : i32
    %c0_i32_0 = arith.constant 0 : i32
    %c0_i32_1 = arith.constant 0 : i32
    %c0_i32_2 = arith.constant 0 : i32
    return %arg0, %0, %c0_i32_0, %c0_i32_1 : i32, i32, i32, i32
  }
  func.func @transform_1(%arg0: i32, %arg1: i32) -> (i32, i32, i32, i32) {
    %c1_i32 = arith.constant 1 : i32
    %0 = arith.addi %arg1, %c1_i32 : i32
    %c0_i32 = arith.constant 0 : i32
    %c0_i32_0 = arith.constant 0 : i32
    %c0_i32_1 = arith.constant 0 : i32
    return %arg0, %0, %c0_i32, %c0_i32_0 : i32, i32, i32, i32
  }
  func.func @transform_2(%arg0: i32, %arg1: i32) -> (i32, i32, i32, i32) {
    %c2_i32 = arith.constant 2 : i32
    %0 = arith.addi %arg1, %c2_i32 : i32
    %c0_i32 = arith.constant 0 : i32
    %c0_i32_0 = arith.constant 0 : i32
    %c0_i32_1 = arith.constant 0 : i32
    return %arg0, %0, %c0_i32, %c0_i32_0 : i32, i32, i32, i32
  }
  func.func @transform_3(%arg0: i32, %arg1: i32) -> (i32, i32, i32, i32) {
    %c0_i32 = arith.constant 0 : i32
    %0 = arith.addi %arg1, %c0_i32 : i32
    %c0_i32_0 = arith.constant 0 : i32
    %c0_i32_1 = arith.constant 0 : i32
    %c0_i32_2 = arith.constant 0 : i32
    return %arg0, %0, %c0_i32_0, %c0_i32_1 : i32, i32, i32, i32
  }
  func.func @transform_4(%arg0: i32, %arg1: i32) -> (i32, i32, i32, i32) {
    %c1_i32 = arith.constant 1 : i32
    %0 = arith.addi %arg1, %c1_i32 : i32
    %c0_i32 = arith.constant 0 : i32
    %c0_i32_0 = arith.constant 0 : i32
    %c0_i32_1 = arith.constant 0 : i32
    return %arg0, %0, %c0_i32, %c0_i32_0 : i32, i32, i32, i32
  }
  func.func @transform_5(%arg0: i32, %arg1: i32) -> (i32, i32, i32, i32) {
    %c2_i32 = arith.constant 2 : i32
    %0 = arith.addi %arg1, %c2_i32 : i32
    %c0_i32 = arith.constant 0 : i32
    %c0_i32_0 = arith.constant 0 : i32
    %c0_i32_1 = arith.constant 0 : i32
    return %arg0, %0, %c0_i32, %c0_i32_0 : i32, i32, i32, i32
  }
  func.func @transform_6(%arg0: i32, %arg1: i32) -> (i32, i32) {
    %c0_i32 = arith.constant 0 : i32
    %c0_i32_0 = arith.constant 0 : i32
    %c0_i32_1 = arith.constant 0 : i32
    return %c0_i32, %c0_i32_0 : i32, i32
  }
  func.func @transform_7(%arg0: i32, %arg1: i32) -> (i32, i32) {
    %c0_i32 = arith.constant 0 : i32
    %c0_i32_0 = arith.constant 0 : i32
    %c0_i32_1 = arith.constant 0 : i32
    return %c0_i32, %c0_i32_0 : i32, i32
  }
  func.func @transform_8(%arg0: i32, %arg1: i32) -> (i32, i32) {
    %c0_i32 = arith.constant 0 : i32
    %c0_i32_0 = arith.constant 0 : i32
    %c0_i32_1 = arith.constant 0 : i32
    return %c0_i32, %c0_i32_0 : i32, i32
  }
  func.func @transform_9(%arg0: i32, %arg1: i32) -> (i32, i32) {
    %c0_i32 = arith.constant 0 : i32
    %c0_i32_0 = arith.constant 0 : i32
    %c0_i32_1 = arith.constant 0 : i32
    return %c0_i32, %c0_i32_0 : i32, i32
  }
  func.func @transform_10(%arg0: i32, %arg1: i32) -> (i32, i32) {
    %c0_i32 = arith.constant 0 : i32
    %c0_i32_0 = arith.constant 0 : i32
    %c0_i32_1 = arith.constant 0 : i32
    return %c0_i32, %c0_i32_0 : i32, i32
  }
  func.func @transform_11(%arg0: i32, %arg1: i32) -> (i32, i32, i32) {
    %c0_i32 = arith.constant 0 : i32
    %c0_i32_0 = arith.constant 0 : i32
    %c0_i32_1 = arith.constant 0 : i32
    %c0_i32_2 = arith.constant 0 : i32
    return %c0_i32, %c0_i32_0, %c0_i32_1 : i32, i32, i32
  }
  func.func @transform_12(%arg0: i32, %arg1: i32) -> (i32, i32, i32) {
    %c0_i32 = arith.constant 0 : i32
    %c0_i32_0 = arith.constant 0 : i32
    %c0_i32_1 = arith.constant 0 : i32
    %c0_i32_2 = arith.constant 0 : i32
    return %c0_i32, %c0_i32_0, %c0_i32_1 : i32, i32, i32
  }
  func.func @transform_13(%arg0: i32, %arg1: i32) -> (i32, i32) {
    %c0_i32 = arith.constant 0 : i32
    %c0_i32_0 = arith.constant 0 : i32
    %c0_i32_1 = arith.constant 0 : i32
    return %c0_i32, %c0_i32_0 : i32, i32
  }
  func.func @transform_14(%arg0: i32, %arg1: i32) -> (i32, i32, i32, i32) {
    %c0_i32 = arith.constant 0 : i32
    %c0_i32_0 = arith.constant 0 : i32
    %c0_i32_1 = arith.constant 0 : i32
    return %arg0, %arg1, %c0_i32, %c0_i32_0 : i32, i32, i32, i32
  }
}

module attributes {stable_mosaic.version = 11 : i64} {
  func.func @_conv3x3_kernel(%arg0: i32, %arg1: i32, %arg2: memref<1x1x18x4xbf16, #tpu.memory_space<vmem>>, %arg3: memref<1x1x18x4xbf16, #tpu.memory_space<vmem>>, %arg4: memref<1x1x18x4xbf16, #tpu.memory_space<vmem>>, %arg5: memref<9x4x4xbf16, #tpu.memory_space<vmem>>, %arg6: memref<1x4xf32, #tpu.memory_space<vmem>>, %arg7: memref<1x1x16x4xf32, #tpu.memory_space<vmem>>) attributes {dimension_semantics = [#tpu.dimension_semantics<parallel>, #tpu.dimension_semantics<parallel>], iteration_bounds = array<i64: 2, 16>, scalar_prefetch = 0 : i64, scratch_operands = 0 : i64, tpu.core_type = #tpu.core_type<tc>, window_params = [{transform_indices = @transform_0, window_bounds = array<i64: 1, 1, 18, 4>}, {transform_indices = @transform_1, window_bounds = array<i64: 1, 1, 18, 4>}, {transform_indices = @transform_2, window_bounds = array<i64: 1, 1, 18, 4>}, {pipeline_mode = #tpu.pipeline_mode<synchronous>, transform_indices = @transform_3, window_bounds = array<i64: 9, 4, 4>}, {pipeline_mode = #tpu.pipeline_mode<synchronous>, transform_indices = @transform_4, window_bounds = array<i64: 1, 4>}, {transform_indices = @transform_5, window_bounds = array<i64: 1, 1, 16, 4>}]} {
    %cst = arith.constant 0.000000e+00 : f32
    %0 = vector.broadcast %cst : f32 to vector<16x4xf32>
    %c0 = arith.constant 0 : index
    %c0_0 = arith.constant 0 : index
    %c0_1 = arith.constant 0 : index
    %c0_2 = arith.constant 0 : index
    %1 = vector.load %arg2[%c0, %c0_0, %c0_1, %c0_2] : memref<1x1x18x4xbf16, #tpu.memory_space<vmem>>, vector<1x1x16x4xbf16>
    %2 = vector.shape_cast %1 : vector<1x1x16x4xbf16> to vector<16x4xbf16>
    %c0_3 = arith.constant 0 : index
    %c0_4 = arith.constant 0 : index
    %c0_5 = arith.constant 0 : index
    %3 = vector.load %arg5[%c0_3, %c0_4, %c0_5] : memref<9x4x4xbf16, #tpu.memory_space<vmem>>, vector<1x4x4xbf16>
    %4 = vector.shape_cast %3 : vector<1x4x4xbf16> to vector<4x4xbf16>
    %cst_6 = arith.constant dense<0.000000e+00> : vector<16x4xf32>
    %5 = tpu.matmul %2, %4, %cst_6 {dimension_numbers = #tpu.dot_dimension_numbers<[1], [0], [0], [1], [0, 0, 1, 1], [], []>} : vector<16x4xbf16>, vector<4x4xbf16>, vector<16x4xf32> -> vector<16x4xf32>
    %6 = arith.addf %0, %5 : vector<16x4xf32>
    %c0_7 = arith.constant 0 : index
    %c0_8 = arith.constant 0 : index
    %c1 = arith.constant 1 : index
    %c0_9 = arith.constant 0 : index
    %7 = vector.load %arg2[%c0_7, %c0_8, %c1, %c0_9] : memref<1x1x18x4xbf16, #tpu.memory_space<vmem>>, vector<1x1x16x4xbf16>
    %8 = vector.shape_cast %7 : vector<1x1x16x4xbf16> to vector<16x4xbf16>
    %c1_10 = arith.constant 1 : index
    %c0_11 = arith.constant 0 : index
    %c0_12 = arith.constant 0 : index
    %9 = vector.load %arg5[%c1_10, %c0_11, %c0_12] : memref<9x4x4xbf16, #tpu.memory_space<vmem>>, vector<1x4x4xbf16>
    %10 = vector.shape_cast %9 : vector<1x4x4xbf16> to vector<4x4xbf16>
    %cst_13 = arith.constant dense<0.000000e+00> : vector<16x4xf32>
    %11 = tpu.matmul %8, %10, %cst_13 {dimension_numbers = #tpu.dot_dimension_numbers<[1], [0], [0], [1], [0, 0, 1, 1], [], []>} : vector<16x4xbf16>, vector<4x4xbf16>, vector<16x4xf32> -> vector<16x4xf32>
    %12 = arith.addf %6, %11 : vector<16x4xf32>
    %c0_14 = arith.constant 0 : index
    %c0_15 = arith.constant 0 : index
    %c2 = arith.constant 2 : index
    %c0_16 = arith.constant 0 : index
    %13 = vector.load %arg2[%c0_14, %c0_15, %c2, %c0_16] : memref<1x1x18x4xbf16, #tpu.memory_space<vmem>>, vector<1x1x16x4xbf16>
    %14 = vector.shape_cast %13 : vector<1x1x16x4xbf16> to vector<16x4xbf16>
    %c2_17 = arith.constant 2 : index
    %c0_18 = arith.constant 0 : index
    %c0_19 = arith.constant 0 : index
    %15 = vector.load %arg5[%c2_17, %c0_18, %c0_19] : memref<9x4x4xbf16, #tpu.memory_space<vmem>>, vector<1x4x4xbf16>
    %16 = vector.shape_cast %15 : vector<1x4x4xbf16> to vector<4x4xbf16>
    %cst_20 = arith.constant dense<0.000000e+00> : vector<16x4xf32>
    %17 = tpu.matmul %14, %16, %cst_20 {dimension_numbers = #tpu.dot_dimension_numbers<[1], [0], [0], [1], [0, 0, 1, 1], [], []>} : vector<16x4xbf16>, vector<4x4xbf16>, vector<16x4xf32> -> vector<16x4xf32>
    %18 = arith.addf %12, %17 : vector<16x4xf32>
    %c0_21 = arith.constant 0 : index
    %c0_22 = arith.constant 0 : index
    %c0_23 = arith.constant 0 : index
    %c0_24 = arith.constant 0 : index
    %19 = vector.load %arg3[%c0_21, %c0_22, %c0_23, %c0_24] : memref<1x1x18x4xbf16, #tpu.memory_space<vmem>>, vector<1x1x16x4xbf16>
    %20 = vector.shape_cast %19 : vector<1x1x16x4xbf16> to vector<16x4xbf16>
    %c3 = arith.constant 3 : index
    %c0_25 = arith.constant 0 : index
    %c0_26 = arith.constant 0 : index
    %21 = vector.load %arg5[%c3, %c0_25, %c0_26] : memref<9x4x4xbf16, #tpu.memory_space<vmem>>, vector<1x4x4xbf16>
    %22 = vector.shape_cast %21 : vector<1x4x4xbf16> to vector<4x4xbf16>
    %cst_27 = arith.constant dense<0.000000e+00> : vector<16x4xf32>
    %23 = tpu.matmul %20, %22, %cst_27 {dimension_numbers = #tpu.dot_dimension_numbers<[1], [0], [0], [1], [0, 0, 1, 1], [], []>} : vector<16x4xbf16>, vector<4x4xbf16>, vector<16x4xf32> -> vector<16x4xf32>
    %24 = arith.addf %18, %23 : vector<16x4xf32>
    %c0_28 = arith.constant 0 : index
    %c0_29 = arith.constant 0 : index
    %c1_30 = arith.constant 1 : index
    %c0_31 = arith.constant 0 : index
    %25 = vector.load %arg3[%c0_28, %c0_29, %c1_30, %c0_31] : memref<1x1x18x4xbf16, #tpu.memory_space<vmem>>, vector<1x1x16x4xbf16>
    %26 = vector.shape_cast %25 : vector<1x1x16x4xbf16> to vector<16x4xbf16>
    %c4 = arith.constant 4 : index
    %c0_32 = arith.constant 0 : index
    %c0_33 = arith.constant 0 : index
    %27 = vector.load %arg5[%c4, %c0_32, %c0_33] : memref<9x4x4xbf16, #tpu.memory_space<vmem>>, vector<1x4x4xbf16>
    %28 = vector.shape_cast %27 : vector<1x4x4xbf16> to vector<4x4xbf16>
    %cst_34 = arith.constant dense<0.000000e+00> : vector<16x4xf32>
    %29 = tpu.matmul %26, %28, %cst_34 {dimension_numbers = #tpu.dot_dimension_numbers<[1], [0], [0], [1], [0, 0, 1, 1], [], []>} : vector<16x4xbf16>, vector<4x4xbf16>, vector<16x4xf32> -> vector<16x4xf32>
    %30 = arith.addf %24, %29 : vector<16x4xf32>
    %c0_35 = arith.constant 0 : index
    %c0_36 = arith.constant 0 : index
    %c2_37 = arith.constant 2 : index
    %c0_38 = arith.constant 0 : index
    %31 = vector.load %arg3[%c0_35, %c0_36, %c2_37, %c0_38] : memref<1x1x18x4xbf16, #tpu.memory_space<vmem>>, vector<1x1x16x4xbf16>
    %32 = vector.shape_cast %31 : vector<1x1x16x4xbf16> to vector<16x4xbf16>
    %c5 = arith.constant 5 : index
    %c0_39 = arith.constant 0 : index
    %c0_40 = arith.constant 0 : index
    %33 = vector.load %arg5[%c5, %c0_39, %c0_40] : memref<9x4x4xbf16, #tpu.memory_space<vmem>>, vector<1x4x4xbf16>
    %34 = vector.shape_cast %33 : vector<1x4x4xbf16> to vector<4x4xbf16>
    %cst_41 = arith.constant dense<0.000000e+00> : vector<16x4xf32>
    %35 = tpu.matmul %32, %34, %cst_41 {dimension_numbers = #tpu.dot_dimension_numbers<[1], [0], [0], [1], [0, 0, 1, 1], [], []>} : vector<16x4xbf16>, vector<4x4xbf16>, vector<16x4xf32> -> vector<16x4xf32>
    %36 = arith.addf %30, %35 : vector<16x4xf32>
    %c0_42 = arith.constant 0 : index
    %c0_43 = arith.constant 0 : index
    %c0_44 = arith.constant 0 : index
    %c0_45 = arith.constant 0 : index
    %37 = vector.load %arg4[%c0_42, %c0_43, %c0_44, %c0_45] : memref<1x1x18x4xbf16, #tpu.memory_space<vmem>>, vector<1x1x16x4xbf16>
    %38 = vector.shape_cast %37 : vector<1x1x16x4xbf16> to vector<16x4xbf16>
    %c6 = arith.constant 6 : index
    %c0_46 = arith.constant 0 : index
    %c0_47 = arith.constant 0 : index
    %39 = vector.load %arg5[%c6, %c0_46, %c0_47] : memref<9x4x4xbf16, #tpu.memory_space<vmem>>, vector<1x4x4xbf16>
    %40 = vector.shape_cast %39 : vector<1x4x4xbf16> to vector<4x4xbf16>
    %cst_48 = arith.constant dense<0.000000e+00> : vector<16x4xf32>
    %41 = tpu.matmul %38, %40, %cst_48 {dimension_numbers = #tpu.dot_dimension_numbers<[1], [0], [0], [1], [0, 0, 1, 1], [], []>} : vector<16x4xbf16>, vector<4x4xbf16>, vector<16x4xf32> -> vector<16x4xf32>
    %42 = arith.addf %36, %41 : vector<16x4xf32>
    %c0_49 = arith.constant 0 : index
    %c0_50 = arith.constant 0 : index
    %c1_51 = arith.constant 1 : index
    %c0_52 = arith.constant 0 : index
    %43 = vector.load %arg4[%c0_49, %c0_50, %c1_51, %c0_52] : memref<1x1x18x4xbf16, #tpu.memory_space<vmem>>, vector<1x1x16x4xbf16>
    %44 = vector.shape_cast %43 : vector<1x1x16x4xbf16> to vector<16x4xbf16>
    %c7 = arith.constant 7 : index
    %c0_53 = arith.constant 0 : index
    %c0_54 = arith.constant 0 : index
    %45 = vector.load %arg5[%c7, %c0_53, %c0_54] : memref<9x4x4xbf16, #tpu.memory_space<vmem>>, vector<1x4x4xbf16>
    %46 = vector.shape_cast %45 : vector<1x4x4xbf16> to vector<4x4xbf16>
    %cst_55 = arith.constant dense<0.000000e+00> : vector<16x4xf32>
    %47 = tpu.matmul %44, %46, %cst_55 {dimension_numbers = #tpu.dot_dimension_numbers<[1], [0], [0], [1], [0, 0, 1, 1], [], []>} : vector<16x4xbf16>, vector<4x4xbf16>, vector<16x4xf32> -> vector<16x4xf32>
    %48 = arith.addf %42, %47 : vector<16x4xf32>
    %c0_56 = arith.constant 0 : index
    %c0_57 = arith.constant 0 : index
    %c2_58 = arith.constant 2 : index
    %c0_59 = arith.constant 0 : index
    %49 = vector.load %arg4[%c0_56, %c0_57, %c2_58, %c0_59] : memref<1x1x18x4xbf16, #tpu.memory_space<vmem>>, vector<1x1x16x4xbf16>
    %50 = vector.shape_cast %49 : vector<1x1x16x4xbf16> to vector<16x4xbf16>
    %c8 = arith.constant 8 : index
    %c0_60 = arith.constant 0 : index
    %c0_61 = arith.constant 0 : index
    %51 = vector.load %arg5[%c8, %c0_60, %c0_61] : memref<9x4x4xbf16, #tpu.memory_space<vmem>>, vector<1x4x4xbf16>
    %52 = vector.shape_cast %51 : vector<1x4x4xbf16> to vector<4x4xbf16>
    %cst_62 = arith.constant dense<0.000000e+00> : vector<16x4xf32>
    %53 = tpu.matmul %50, %52, %cst_62 {dimension_numbers = #tpu.dot_dimension_numbers<[1], [0], [0], [1], [0, 0, 1, 1], [], []>} : vector<16x4xbf16>, vector<4x4xbf16>, vector<16x4xf32> -> vector<16x4xf32>
    %54 = arith.addf %48, %53 : vector<16x4xf32>
    %c0_63 = arith.constant 0 : index
    %c0_64 = arith.constant 0 : index
    %55 = vector.load %arg6[%c0_63, %c0_64] : memref<1x4xf32, #tpu.memory_space<vmem>>, vector<1x4xf32>
    %56 = vector.broadcast %55 : vector<1x4xf32> to vector<16x4xf32>
    %57 = arith.addf %54, %56 : vector<16x4xf32>
    %cst_65 = arith.constant 0.000000e+00 : f32
    %58 = vector.broadcast %cst_65 : f32 to vector<16x4xf32>
    %59 = arith.maximumf %57, %58 : vector<16x4xf32>
    %c0_66 = arith.constant 0 : index
    %c0_67 = arith.constant 0 : index
    %c0_68 = arith.constant 0 : index
    %c0_69 = arith.constant 0 : index
    %60 = vector.load %arg7[%c0_66, %c0_67, %c0_68, %c0_69] : memref<1x1x16x4xf32, #tpu.memory_space<vmem>>, vector<1x1x16x4xf32>
    %61 = vector.shape_cast %60 : vector<1x1x16x4xf32> to vector<16x4xf32>
    %62 = vector.shape_cast %59 : vector<16x4xf32> to vector<1x1x16x4xf32>
    tpu.vector_store %arg7[%c0_66, %c0_67, %c0_68, %c0_69], %62 {strides = array<i32>} : memref<1x1x16x4xf32, #tpu.memory_space<vmem>>, vector<1x1x16x4xf32>,
    return
  }
  func.func @transform_0(%arg0: i32, %arg1: i32) -> (i32, i32, i32, i32) {
    %c0_i32 = arith.constant 0 : i32
    %0 = arith.addi %arg1, %c0_i32 : i32
    %c0_i32_0 = arith.constant 0 : i32
    %c0_i32_1 = arith.constant 0 : i32
    %c0_i32_2 = arith.constant 0 : i32
    return %arg0, %0, %c0_i32_0, %c0_i32_1 : i32, i32, i32, i32
  }
  func.func @transform_1(%arg0: i32, %arg1: i32) -> (i32, i32, i32, i32) {
    %c1_i32 = arith.constant 1 : i32
    %0 = arith.addi %arg1, %c1_i32 : i32
    %c0_i32 = arith.constant 0 : i32
    %c0_i32_0 = arith.constant 0 : i32
    %c0_i32_1 = arith.constant 0 : i32
    return %arg0, %0, %c0_i32, %c0_i32_0 : i32, i32, i32, i32
  }
  func.func @transform_2(%arg0: i32, %arg1: i32) -> (i32, i32, i32, i32) {
    %c2_i32 = arith.constant 2 : i32
    %0 = arith.addi %arg1, %c2_i32 : i32
    %c0_i32 = arith.constant 0 : i32
    %c0_i32_0 = arith.constant 0 : i32
    %c0_i32_1 = arith.constant 0 : i32
    return %arg0, %0, %c0_i32, %c0_i32_0 : i32, i32, i32, i32
  }
  func.func @transform_3(%arg0: i32, %arg1: i32) -> (i32, i32, i32) {
    %c0_i32 = arith.constant 0 : i32
    %c0_i32_0 = arith.constant 0 : i32
    %c0_i32_1 = arith.constant 0 : i32
    %c0_i32_2 = arith.constant 0 : i32
    return %c0_i32, %c0_i32_0, %c0_i32_1 : i32, i32, i32
  }
  func.func @transform_4(%arg0: i32, %arg1: i32) -> (i32, i32) {
    %c0_i32 = arith.constant 0 : i32
    %c0_i32_0 = arith.constant 0 : i32
    %c0_i32_1 = arith.constant 0 : i32
    return %c0_i32, %c0_i32_0 : i32, i32
  }
  func.func @transform_5(%arg0: i32, %arg1: i32) -> (i32, i32, i32, i32) {
    %c0_i32 = arith.constant 0 : i32
    %c0_i32_0 = arith.constant 0 : i32
    %c0_i32_1 = arith.constant 0 : i32
    return %arg0, %arg1, %c0_i32, %c0_i32_0 : i32, i32, i32, i32
  }
}

</mosaic_0001>

<llo_original>
// kernel: att_up_forward_pallas.3
$region0: #{att_up_forward_pallas.3}
  #allocation0 [shape = 'u32[]', space=smem, size = 0x4, offset = 0x4, fixed_abs, tag = 'smem constant byte address 0x4 - core index']
  #allocation1 [shape = 'u32[144,128]{1,0:T(1,128)}', space=vmem, size = 0x12000, scoped, tag = 'internal scratch']
  %s0 = inlined_call_operand.vmem [shape: bf16[128,8], index: 0, kind: input, shape index: {}]
  %s1 = inlined_call_operand.vmem [shape: bf16[8,16], index: 1, kind: input, shape index: {}]
  %s2 = inlined_call_operand.vmem [shape: f32[1,16], index: 2, kind: input, shape index: {}]
  %s3 = inlined_call_operand.vmem [shape: bf16[128,16], index: 3, kind: output, shape index: {}]
  %s4 = sld [smem:[#allocation0]]
  $region22: #{att_up_forward_pallas.3} parent=0
    _
  %s6 = ssub.s32 1, %s4
  %s7 = scalar_select 0, %s6, %s4
  // Predicated region
  $region2: #{att_up_forward_pallas.3} parent=0 // pred_check
    _
  $region3: #{att_up_forward_pallas.3} parent=0 // pred_check_branch
    %9 = sbr.rel (0) target = $region5
  $region4: #{att_up_forward_pallas.3} parent=0 // pred_region
    _
  $region5: #{att_up_forward_pallas.3} parent=0 // pred_fallthru
    _
  // Predicated region
  $region6: #{att_up_forward_pallas.3} parent=0 // pred_check
    _
  $region7: #{att_up_forward_pallas.3} parent=0 // pred_check_branch
    %11 = sbr.rel (0) target = $region9
  $region8: #{att_up_forward_pallas.3} parent=0 // pred_region
    _
  $region9: #{att_up_forward_pallas.3} parent=0 // pred_fallthru
    _
  // Predicated region
  $region10: #{att_up_forward_pallas.3} parent=0 // pred_check
    _
  $region11: #{att_up_forward_pallas.3} parent=0 // pred_check_branch
    %13 = sbr.rel (0) target = $region13
  $region12: #{att_up_forward_pallas.3} parent=0 // pred_region
    _
  $region13: #{att_up_forward_pallas.3} parent=0 // pred_fallthru
    _
  %v15 = vld [vmem:[%s0] sm:$0xf]
  %v16 = vld [vmem:[%s0 + $0x4] sm:$0xf]
  %v17 = vld [vmem:[%s0 + $0x8] sm:$0xf]
  %v18 = vld [vmem:[%s0 + $0xc] sm:$0xf]
  %v19 = vld [vmem:[%s0 + $0x10] sm:$0xf]
  %v20 = vld [vmem:[%s0 + $0x14] sm:$0xf]
  %v21 = vld [vmem:[%s0 + $0x18] sm:$0xf]
  %v22 = vld [vmem:[%s0 + $0x1c] sm:$0xf]
  %v23 = vld [vmem:[%s0 + $0x20] sm:$0xf]
  %v24 = vld [vmem:[%s0 + $0x24] sm:$0xf]
  %v25 = vld [vmem:[%s0 + $0x28] sm:$0xf]
  %v26 = vld [vmem:[%s0 + $0x2c] sm:$0xf]
  %v27 = vld [vmem:[%s0 + $0x30] sm:$0xf]
  %v28 = vld [vmem:[%s0 + $0x34] sm:$0xf]
  %v29 = vld [vmem:[%s0 + $0x38] sm:$0xf]
  %v30 = vld [vmem:[%s0 + $0x3c] sm:$0xf]
  %v31 = vld [vmem:[%s1] sm:$0xf]
  %v32 = vld [vmem:[%s2] sm:$0x1]
  %v34 = vlaneseq
  %v35 = vshrl.u32 %v34, 7
  %v36 = vsub.s32 0, %v35
  %v37 = vrot.slane %v32, %v36
  %v55 = vunpack.c.l.b16 %v15
  %v56 = vunpack.c.l.b16 %v16
  %v57 = vunpack.c.l.b16 %v17
  %v58 = vunpack.c.l.b16 %v18
  %v59 = vunpack.c.l.b16 %v19
  %v60 = vunpack.c.l.b16 %v20
  %v61 = vunpack.c.l.b16 %v21
  %v62 = vunpack.c.l.b16 %v22
  %v63 = vunpack.c.l.b16 %v23
  %v64 = vunpack.c.l.b16 %v24
  %v65 = vunpack.c.l.b16 %v25
  %v66 = vunpack.c.l.b16 %v26
  %v67 = vunpack.c.l.b16 %v27
  %v68 = vunpack.c.l.b16 %v28
  %v69 = vunpack.c.l.b16 %v29
  %v70 = vunpack.c.l.b16 %v30
  %v71 = vpack.c.b16 %v56, %v55
  %v72 = vpack.c.b16 %v58, %v57
  %v73 = vpack.c.b16 %v60, %v59
  %v74 = vpack.c.b16 %v62, %v61
  %v75 = vpack.c.b16 %v64, %v63
  %v76 = vpack.c.b16 %v66, %v65
  %v77 = vpack.c.b16 %v68, %v67
  %v78 = vpack.c.b16 %v70, %v69
  %vm79 = vcmask 64512
  %v81 = vsel %vm79, %v71, 0
  %v84 = vsel %vm79, %v72, 0
  %v87 = vsel %vm79, %v73, 0
  %v90 = vsel %vm79, %v74, 0
  %v93 = vsel %vm79, %v75, 0
  %v96 = vsel %vm79, %v76, 0
  %v99 = vsel %vm79, %v77, 0
  %v102 = vsel %vm79, %v78, 0
  %vm104 = vcmask 1043456
  %v106 = vsel %vm104, %v31, 0
  %108 = vmatprep.subr.bf16.mxu0 0
  %109 = vmatpush1.bf16.msra.mxu0 %v106
  %110 = vmatprep.subr.bf16.mxu0 0
  %111 = vmatpush1.bf16.msra.mxu0 0
  %112 = vmatprep.subr.bf16.mxu0 0
  %113 = vmatpush1.bf16.msra.mxu0 0
  %114 = vmatprep.subr.bf16.mxu0 0
  %115 = vmatpush1.bf16.msra.mxu0 0
  %116 = vmatprep.subr.bf16.mxu0 0
  %117 = vmatpush1.bf16.msra.mxu0 0
  %118 = vmatprep.subr.bf16.mxu0 0
  %119 = vmatpush1.bf16.msra.mxu0 0
  %120 = vmatprep.subr.bf16.mxu0 0
  %121 = vmatpush1.bf16.msra.mxu0 0
  %122 = vmatprep.subr.bf16.mxu0 0
  %123 = vmatpush1.bf16.msra.mxu0 0
  %124 = vmatprep.subr.bf16.mxu0 0
  %125 = vmatpush1.bf16.msra.mxu0 0
  %126 = vmatprep.subr.bf16.mxu0 0
  %127 = vmatpush1.bf16.msra.mxu0 0
  %128 = vmatprep.subr.bf16.mxu0 0
  %129 = vmatpush1.bf16.msra.mxu0 0
  %130 = vmatprep.subr.bf16.mxu0 0
  %131 = vmatpush1.bf16.msra.mxu0 0
  %132 = vmatprep.subr.bf16.mxu0 0
  %133 = vmatpush1.bf16.msra.mxu0 0
  %134 = vmatprep.subr.bf16.mxu0 0
  %135 = vmatpush1.bf16.msra.mxu0 0
  %136 = vmatprep.subr.bf16.mxu0 0
  %137 = vmatpush1.bf16.msra.mxu0 0
  %138 = vmatprep.subr.bf16.mxu0 0
  %139 = vmatpush1.bf16.msra.mxu0 0
  %140 = vmatprep.mubr.bf16.mxu0 0
  %141 = vmatmul.mubr.bf16.gmra.mrb[0].mxu0 %v81
  %v142 = vpop.f32.mrb[0].mxu0
  %v143 = vadd.f32 %v37, %v142
  %v144 = vpop.f32.mrb[0].mxu0
  %v145 = vpop.f32.mrb[0].mxu0
  %v146 = vadd.f32 %v37, %v145
  %v147 = vpop.f32.mrb[0].mxu0
  %148 = vmatprep.mubr.bf16.mxu0 0
  %149 = vmatmul.mubr.bf16.gmra.mrb[0].mxu0 %v84
  %v150 = vpop.f32.mrb[0].mxu0
  %v151 = vadd.f32 %v37, %v150
  %v152 = vpop.f32.mrb[0].mxu0
  %v153 = vpop.f32.mrb[0].mxu0
  %v154 = vadd.f32 %v37, %v153
  %v155 = vpop.f32.mrb[0].mxu0
  %156 = vmatprep.mubr.bf16.mxu0 0
  %157 = vmatmul.mubr.bf16.gmra.mrb[0].mxu0 %v87
  %v158 = vpop.f32.mrb[0].mxu0
  %v159 = vadd.f32 %v37, %v158
  %v160 = vpop.f32.mrb[0].mxu0
  %v161 = vpop.f32.mrb[0].mxu0
  %v162 = vadd.f32 %v37, %v161
  %v163 = vpop.f32.mrb[0].mxu0
  %164 = vmatprep.mubr.bf16.mxu0 0
  %165 = vmatmul.mubr.bf16.gmra.mrb[0].mxu0 %v90
  %v166 = vpop.f32.mrb[0].mxu0
  %v167 = vadd.f32 %v37, %v166
  %v168 = vpop.f32.mrb[0].mxu0
  %v169 = vpop.f32.mrb[0].mxu0
  %v170 = vadd.f32 %v37, %v169
  %v171 = vpop.f32.mrb[0].mxu0
  %172 = vmatprep.mubr.bf16.mxu0 0
  %173 = vmatmul.mubr.bf16.gmra.mrb[0].mxu0 %v93
  %v174 = vpop.f32.mrb[0].mxu0
  %v175 = vadd.f32 %v37, %v174
  %v176 = vpop.f32.mrb[0].mxu0
  %v177 = vpop.f32.mrb[0].mxu0
  %v178 = vadd.f32 %v37, %v177
  %v179 = vpop.f32.mrb[0].mxu0
  %180 = vmatprep.mubr.bf16.mxu0 0
  %181 = vmatmul.mubr.bf16.gmra.mrb[0].mxu0 %v96
  %v182 = vpop.f32.mrb[0].mxu0
  %v183 = vadd.f32 %v37, %v182
  %v184 = vpop.f32.mrb[0].mxu0
  %v185 = vpop.f32.mrb[0].mxu0
  %v186 = vadd.f32 %v37, %v185
  %v187 = vpop.f32.mrb[0].mxu0
  %188 = vmatprep.mubr.bf16.mxu0 0
  %189 = vmatmul.mubr.bf16.gmra.mrb[0].mxu0 %v99
  %v190 = vpop.f32.mrb[0].mxu0
  %v191 = vadd.f32 %v37, %v190
  %v192 = vpop.f32.mrb[0].mxu0
  %v193 = vpop.f32.mrb[0].mxu0
  %v194 = vadd.f32 %v37, %v193
  %v195 = vpop.f32.mrb[0].mxu0
  %196 = vmatprep.mubr.bf16.mxu0 0
  %197 = vmatmul.mubr.bf16.gmra.mrb[0].mxu0 %v102
  %v198 = vpop.f32.mrb[0].mxu0
  %v199 = vadd.f32 %v37, %v198
  %v200 = vpop.f32.mrb[0].mxu0
  %v201 = vpop.f32.mrb[0].mxu0
  %v202 = vadd.f32 %v37, %v201
  %v203 = vpop.f32.mrb[0].mxu0
  %204 = vdwg.mxu0
  %v205 = vpack.c.bf16 %v146, %v143
  %v206 = vpack.c.bf16 %v154, %v151
  %v207 = vpack.c.bf16 %v162, %v159
  %v208 = vpack.c.bf16 %v170, %v167
  %v209 = vpack.c.bf16 %v178, %v175
  %v210 = vpack.c.bf16 %v186, %v183
  %v211 = vpack.c.bf16 %v194, %v191
  %v212 = vpack.c.bf16 %v202, %v199
  %v221 = vunpack.c.l.b16 %v205
  %v222 = vunpack.c.h.b16 %v205
  %v223 = vunpack.c.l.b16 %v206
  %v224 = vunpack.c.h.b16 %v206
  %v225 = vunpack.c.l.b16 %v207
  %v226 = vunpack.c.h.b16 %v207
  %v227 = vunpack.c.l.b16 %v208
  %v228 = vunpack.c.h.b16 %v208
  %v229 = vunpack.c.l.b16 %v209
  %v230 = vunpack.c.h.b16 %v209
  %v231 = vunpack.c.l.b16 %v210
  %v232 = vunpack.c.h.b16 %v210
  %v233 = vunpack.c.l.b16 %v211
  %v234 = vunpack.c.h.b16 %v211
  %v235 = vunpack.c.l.b16 %v212
  %v236 = vunpack.c.h.b16 %v212
  %v237 = vpack.c.b16 %v221, %v221
  %v238 = vpack.c.b16 %v222, %v222
  %v239 = vpack.c.b16 %v223, %v223
  %v240 = vpack.c.b16 %v224, %v224
  %v241 = vpack.c.b16 %v225, %v225
  %v242 = vpack.c.b16 %v226, %v226
  %v243 = vpack.c.b16 %v227, %v227
  %v244 = vpack.c.b16 %v228, %v228
  %v245 = vpack.c.b16 %v229, %v229
  %v246 = vpack.c.b16 %v230, %v230
  %v247 = vpack.c.b16 %v231, %v231
  %v248 = vpack.c.b16 %v232, %v232
  %v249 = vpack.c.b16 %v233, %v233
  %v250 = vpack.c.b16 %v234, %v234
  %v251 = vpack.c.b16 %v235, %v235
  %v252 = vpack.c.b16 %v236, %v236
  %vm269 = vcmask 125952
  %270 = vst.msk [vmem:[%s3] sm:$0xf] %vm269, %v237
  %271 = vst.msk [vmem:[%s3 + $0x4] sm:$0xf] %vm269, %v238
  %272 = vst.msk [vmem:[%s3 + $0x8] sm:$0xf] %vm269, %v239
  %273 = vst.msk [vmem:[%s3 + $0xc] sm:$0xf] %vm269, %v240
  %274 = vst.msk [vmem:[%s3 + $0x10] sm:$0xf] %vm269, %v241
  %275 = vst.msk [vmem:[%s3 + $0x14] sm:$0xf] %vm269, %v242
  %276 = vst.msk [vmem:[%s3 + $0x18] sm:$0xf] %vm269, %v243
  %277 = vst.msk [vmem:[%s3 + $0x1c] sm:$0xf] %vm269, %v244
  %278 = vst.msk [vmem:[%s3 + $0x20] sm:$0xf] %vm269, %v245
  %279 = vst.msk [vmem:[%s3 + $0x24] sm:$0xf] %vm269, %v246
  %280 = vst.msk [vmem:[%s3 + $0x28] sm:$0xf] %vm269, %v247
  %281 = vst.msk [vmem:[%s3 + $0x2c] sm:$0xf] %vm269, %v248
  %282 = vst.msk [vmem:[%s3 + $0x30] sm:$0xf] %vm269, %v249
  %283 = vst.msk [vmem:[%s3 + $0x34] sm:$0xf] %vm269, %v250
  %284 = vst.msk [vmem:[%s3 + $0x38] sm:$0xf] %vm269, %v251
  %285 = vst.msk [vmem:[%s3 + $0x3c] sm:$0xf] %vm269, %v252
  // Predicated region
  $region14: #{att_up_forward_pallas.3} parent=0 // pred_check
    _
  $region15: #{att_up_forward_pallas.3} parent=0 // pred_check_branch
    %287 = sbr.rel (0) target = $region17
  $region16: #{att_up_forward_pallas.3} parent=0 // pred_region
    _
  $region17: #{att_up_forward_pallas.3} parent=0 // pred_fallthru
    _
  // Predicated region
  $region18: #{att_up_forward_pallas.3} parent=0 // pred_check
    _
  $region19: #{att_up_forward_pallas.3} parent=0 // pred_check_branch
    %289 = sbr.rel (0) target = $region21
  $region20: #{att_up_forward_pallas.3} parent=0 // pred_region
    _
  $region21: #{att_up_forward_pallas.3} parent=0 // pred_fallthru
    _

// kernel: att_up_forward_pallas.5
$region0: #{att_up_forward_pallas.5}
  #allocation0 [shape = 'u32[]', space=smem, size = 0x4, offset = 0x4, fixed_abs, tag = 'smem constant byte address 0x4 - core index']
  #allocation1 [shape = 'u32[144,128]{1,0:T(1,128)}', space=vmem, size = 0x12000, scoped, tag = 'internal scratch']
  %s0 = inlined_call_operand.vmem [shape: bf16[2,18,18,4], index: 0, kind: input, shape index: {}, may-alias: {0,1,2}]
  %s1 = inlined_call_operand.vmem [shape: bf16[2,18,18,4], index: 1, kind: input, shape index: {}, may-alias: {0,1,2}]
  %s2 = inlined_call_operand.vmem [shape: bf16[2,18,18,4], index: 2, kind: input, shape index: {}, may-alias: {0,1,2}]
  %s3 = inlined_call_operand.vmem [shape: bf16[9,4,4], index: 3, kind: input, shape index: {}]
  %s4 = inlined_call_operand.vmem [shape: f32[1,4], index: 4, kind: input, shape index: {}]
  %s5 = inlined_call_operand.vmem [shape: f32[2,16,16,4], index: 5, kind: output, shape index: {}]
  %s6 = sld [smem:[#allocation0]]
  $region53: #{att_up_forward_pallas.5} parent=0
    _
  %s8 = ssub.s32 1, %s6
  %s9 = scalar_select 0, %s8, %s6
  loop: start=0, step=1, limit=34
  $region2: #{att_up_forward_pallas.5} parent=0 // loop_pre_header
    _
  $region3: #{att_up_forward_pallas.5} parent=0 // loop_header
    %s11 = sphi 0, %s15
    %p12 = scmp.ge.s32.totalorder %s11, 34
    %s18 = sphi 0, %s30
    %s19 = sphi 0, %s26
    %s20 = sphi 0, %s18
    %s21 = sphi 0, %s19
    %s22 = sphi 0, %s20
    %s23 = sphi 0, %s21
    %s35 = sphi 0, %s37
    %s38 = sphi 0, %s35
    %s39 = sphi 0, %s38
    %s55 = sphi 0, %s39
    %s65 = sphi 0, %s67
    %s68 = sphi 0, %s65
    %s69 = sphi 0, %s68
    %s85 = sphi 0, %s69
    %s95 = sphi 0, %s97
    %s98 = sphi 0, %s95
    %s99 = sphi 0, %s98
    %s115 = sphi 0, %s99
    %s119 = sphi 0, %s119
    %s121 = sphi 0, %s119
    %s122 = sphi 0, %s121
    %s136 = sphi 0, %s122
    %s140 = sphi 0, %s140
    %s142 = sphi 0, %s140
    %s143 = sphi 0, %s142
    %s157 = sphi 0, %s143
    %s165 = sphi 0, %s167
    %s168 = sphi 0, %s165
    %s169 = sphi 0, %s168
    %s185 = sphi 0, %s169
  $region4: #{att_up_forward_pallas.5} parent=0 // loop_header_branch
    %14 = sbr.rel (%p12) target = $region8
  $region5: #{att_up_forward_pallas.5} parent=0 // loop_body
    %s16 = ssub.s32 %s11, 1
    %s17 = ssub.s32 %s11, 2
    %s24 = sadd.s32 1, %s19
    %p25 = scmp.ge.s32.totalorder %s24, 16
    %s26 = scalar_select %p25, 0, %s24
    %s27 = sadd.s32 1, %s18
    %s28 = scalar_select %p25, %s27, %s18
    %p29 = scmp.ge.s32.totalorder %s28, 2
    %s30 = scalar_select %p29, 0, %s28
    %s31 = ssub.s32 %s18, %s30
    %s32 = ssub.s32 %s19, %s26
    %s33 = sor.u32 %s31, %s32
    %p34 = scmp.eq.s32.totalorder %s33, 0
    %s36 = sadd.s32 %s35, 1
    %s37 = scalar_select %p34, %s35, %s36
    %p40 = pneg %p34
    %p41 = scmp.eq.s32.totalorder %s11, 31
    %p42 = por %p40, %p41
    %p43 = scmp.ne.s32.totalorder %s35, %s38
    %p44 = scmp.eq.s32.totalorder %s11, 0
    %p45 = por %p43, %p44
    %p46 = scmp.ne.s32.totalorder %s35, %s38
    %p47 = scmp.eq.s32.totalorder %s16, 31
    %p48 = por %p46, %p47
    %p49 = scmp.ne.s32.totalorder %s38, %s39
    %p50 = scmp.eq.s32.totalorder %s16, 0
    %p51 = por %p49, %p50
    %p52 = scmp.ne.s32.totalorder %s38, %s39
    %p53 = scmp.eq.s32.totalorder %s17, 31
    %p54 = por %p52, %p53
    %p56 = scmp.ne.s32.totalorder %s39, %s55
    %p57 = scmp.eq.s32.totalorder %s17, 0
    %p58 = por %p56, %p57
    %s59 = sadd.s32 %s19, 1
    %s60 = sadd.s32 %s26, 1
    %s61 = ssub.s32 %s18, %s30
    %s62 = ssub.s32 %s59, %s60
    %s63 = sor.u32 %s61, %s62
    %p64 = scmp.eq.s32.totalorder %s63, 0
    %s66 = sadd.s32 %s65, 1
    %s67 = scalar_select %p64, %s65, %s66
    %p70 = pneg %p64
    %p71 = scmp.eq.s32.totalorder %s11, 31
    %p72 = por %p70, %p71
    %p73 = scmp.ne.s32.totalorder %s65, %s68
    %p74 = scmp.eq.s32.totalorder %s11, 0
    %p75 = por %p73, %p74
    %p76 = scmp.ne.s32.totalorder %s65, %s68
    %p77 = scmp.eq.s32.totalorder %s16, 31
    %p78 = por %p76, %p77
    %p79 = scmp.ne.s32.totalorder %s68, %s69
    %p80 = scmp.eq.s32.totalorder %s16, 0
    %p81 = por %p79, %p80
    %p82 = scmp.ne.s32.totalorder %s68, %s69
    %p83 = scmp.eq.s32.totalorder %s17, 31
    %p84 = por %p82, %p83
    %p86 = scmp.ne.s32.totalorder %s69, %s85
    %p87 = scmp.eq.s32.totalorder %s17, 0
    %p88 = por %p86, %p87
    %s89 = sadd.s32 %s19, 2
    %s90 = sadd.s32 %s26, 2
    %s91 = ssub.s32 %s18, %s30
    %s92 = ssub.s32 %s89, %s90
    %s93 = sor.u32 %s91, %s92
    %p94 = scmp.eq.s32.totalorder %s93, 0
    %s96 = sadd.s32 %s95, 1
    %s97 = scalar_select %p94, %s95, %s96
    %p100 = pneg %p94
    %p101 = scmp.eq.s32.totalorder %s11, 31
    %p102 = por %p100, %p101
    %p103 = scmp.ne.s32.totalorder %s95, %s98
    %p104 = scmp.eq.s32.totalorder %s11, 0
    %p105 = por %p103, %p104
    %p106 = scmp.ne.s32.totalorder %s95, %s98
    %p107 = scmp.eq.s32.totalorder %s16, 31
    %p108 = por %p106, %p107
    %p109 = scmp.ne.s32.totalorder %s98, %s99
    %p110 = scmp.eq.s32.totalorder %s16, 0
    %p111 = por %p109, %p110
    %p112 = scmp.ne.s32.totalorder %s98, %s99
    %p113 = scmp.eq.s32.totalorder %s17, 31
    %p114 = por %p112, %p113
    %p116 = scmp.ne.s32.totalorder %s99, %s115
    %p117 = scmp.eq.s32.totalorder %s17, 0
    %p118 = por %p116, %p117
    %s120 = sadd.s32 %s119, 1
    %p123 = scmp.eq.s32.totalorder %s11, 31
    %p124 = scmp.ne.s32.totalorder %s119, %s121
    %p125 = scmp.eq.s32.totalorder %s11, 0
    %p126 = por %p124, %p125
    %p127 = scmp.ne.s32.totalorder %s119, %s121
    %p128 = scmp.eq.s32.totalorder %s16, 31
    %p129 = por %p127, %p128
    %p130 = scmp.ne.s32.totalorder %s121, %s122
    %p131 = scmp.eq.s32.totalorder %s16, 0
    %p132 = por %p130, %p131
    %p133 = scmp.ne.s32.totalorder %s121, %s122
    %p134 = scmp.eq.s32.totalorder %s17, 31
    %p135 = por %p133, %p134
    %p137 = scmp.ne.s32.totalorder %s122, %s136
    %p138 = scmp.eq.s32.totalorder %s17, 0
    %p139 = por %p137, %p138
    %s141 = sadd.s32 %s140, 1
    %p144 = scmp.eq.s32.totalorder %s11, 31
    %p145 = scmp.ne.s32.totalorder %s140, %s142
    %p146 = scmp.eq.s32.totalorder %s11, 0
    %p147 = por %p145, %p146
    %p148 = scmp.ne.s32.totalorder %s140, %s142
    %p149 = scmp.eq.s32.totalorder %s16, 31
    %p150 = por %p148, %p149
    %p151 = scmp.ne.s32.totalorder %s142, %s143
    %p152 = scmp.eq.s32.totalorder %s16, 0
    %p153 = por %p151, %p152
    %p154 = scmp.ne.s32.totalorder %s142, %s143
    %p155 = scmp.eq.s32.totalorder %s17, 31
    %p156 = por %p154, %p155
    %p158 = scmp.ne.s32.totalorder %s143, %s157
    %p159 = scmp.eq.s32.totalorder %s17, 0
    %p160 = por %p158, %p159
    %s161 = ssub.s32 %s18, %s30
    %s162 = ssub.s32 %s19, %s26
    %s163 = sor.u32 %s161, %s162
    %p164 = scmp.eq.s32.totalorder %s163, 0
    %s166 = sadd.s32 %s165, 1
    %s167 = scalar_select %p164, %s165, %s166
    %p170 = pneg %p164
    %p171 = scmp.eq.s32.totalorder %s11, 31
    %p172 = por %p170, %p171
    %p173 = scmp.ne.s32.totalorder %s165, %s168
    %p174 = scmp.eq.s32.totalorder %s11, 0
    %p175 = por %p173, %p174
    %p176 = scmp.ne.s32.totalorder %s165, %s168
    %p177 = scmp.eq.s32.totalorder %s16, 31
    %p178 = por %p176, %p177
    %p179 = scmp.ne.s32.totalorder %s168, %s169
    %p180 = scmp.eq.s32.totalorder %s16, 0
    %p181 = por %p179, %p180
    %p182 = scmp.ne.s32.totalorder %s168, %s169
    %p183 = scmp.eq.s32.totalorder %s17, 31
    %p184 = por %p182, %p183
    %p186 = scmp.ne.s32.totalorder %s169, %s185
    %p187 = scmp.eq.s32.totalorder %s17, 0
    %p188 = por %p186, %p187
    %p189 = scmp.le.s32.totalorder 1, %s11
    %p190 = scmp.lt.s32.totalorder %s11, 33
    %p191 = pnand %p189, %p190
    %p192 = pneg %p191
    // Predicated region
    $region9: #{att_up_forward_pallas.5} parent=5 // pred_check
      _
    $region10: #{att_up_forward_pallas.5} parent=5 // pred_check_branch
      %194 = sbr.rel (%p191) target = $region12
    $region11: #{att_up_forward_pallas.5} parent=5 // pred_region
      %s195 = ssub.s32 %s11, 1
      // Predicated region
      $region13: #{att_up_forward_pallas.5} parent=11 // pred_check
        %p196 = pneg %p132
      $region14: #{att_up_forward_pallas.5} parent=11 // pred_check_branch
        %198 = sbr.rel (%p196) target = $region16
      $region15: #{att_up_forward_pallas.5} parent=11 // pred_region
        _
      $region16: #{att_up_forward_pallas.5} parent=11 // pred_fallthru
        _
      // Predicated region
      $region17: #{att_up_forward_pallas.5} parent=11 // pred_check
        %p199 = pneg %p153
      $region18: #{att_up_forward_pallas.5} parent=11 // pred_check_branch
        %201 = sbr.rel (%p199) target = $region20
      $region19: #{att_up_forward_pallas.5} parent=11 // pred_region
        _
      $region20: #{att_up_forward_pallas.5} parent=11 // pred_fallthru
        _
    $region12: #{att_up_forward_pallas.5} parent=5 // pred_fallthru
      _
    %p202 = scmp.lt.s32.totalorder %s11, 32
    // Predicated region
    $region21: #{att_up_forward_pallas.5} parent=5 // pred_check
      %p203 = pneg %p202
    $region22: #{att_up_forward_pallas.5} parent=5 // pred_check_branch
      %205 = sbr.rel (%p203) target = $region24
    $region23: #{att_up_forward_pallas.5} parent=5 // pred_region
      // Predicated region
      $region25: #{att_up_forward_pallas.5} parent=23 // pred_check
        %p206 = pneg %p45
      $region26: #{att_up_forward_pallas.5} parent=23 // pred_check_branch
        %208 = sbr.rel (%p206) target = $region28
      $region27: #{att_up_forward_pallas.5} parent=23 // pred_region
        %p209 = scmp.lt.s32.totalorder %s18, 1
        %s210 = scalar_select %p209, %s18, 1
        %p211 = scmp.lt.s32.totalorder %s19, 17
        %s212 = scalar_select %p211, %s19, 17
        %s213 = smul.addr %s212, 3
        %s214 = smul.addr %s210, 54
        %s215 = sadd.s32 %s213, %s214
        %s216 = smul.addr %s215, 4
        %s217 = scalar_lea.vmem %s0, %s216
      $region28: #{att_up_forward_pallas.5} parent=23 // pred_fallthru
        _
      // Predicated region
      $region29: #{att_up_forward_pallas.5} parent=23 // pred_check
        %p218 = pneg %p75
      $region30: #{att_up_forward_pallas.5} parent=23 // pred_check_branch
        %220 = sbr.rel (%p218) target = $region32
      $region31: #{att_up_forward_pallas.5} parent=23 // pred_region
        %s221 = sadd.s32 %s19, 1
        %p222 = scmp.lt.s32.totalorder %s18, 1
        %s223 = scalar_select %p222, %s18, 1
        %p224 = scmp.lt.s32.totalorder %s221, 17
        %s225 = scalar_select %p224, %s221, 17
        %s226 = smul.addr %s225, 3
        %s227 = smul.addr %s223, 54
        %s228 = sadd.s32 %s226, %s227
        %s229 = smul.addr %s228, 4
        %s230 = scalar_lea.vmem %s1, %s229
        %s231 = sadd.s32 %s19, 1
      $region32: #{att_up_forward_pallas.5} parent=23 // pred_fallthru
        _
      // Predicated region
      $region33: #{att_up_forward_pallas.5} parent=23 // pred_check
        %p232 = pneg %p105
      $region34: #{att_up_forward_pallas.5} parent=23 // pred_check_branch
        %234 = sbr.rel (%p232) target = $region36
      $region35: #{att_up_forward_pallas.5} parent=23 // pred_region
        %s235 = sadd.s32 %s19, 2
        %p236 = scmp.lt.s32.totalorder %s18, 1
        %s237 = scalar_select %p236, %s18, 1
        %p238 = scmp.lt.s32.totalorder %s235, 17
        %s239 = scalar_select %p238, %s235, 17
        %s240 = smul.addr %s239, 3
        %s241 = smul.addr %s237, 54
        %s242 = sadd.s32 %s240, %s241
        %s243 = smul.addr %s242, 4
        %s244 = scalar_lea.vmem %s2, %s243
        %s245 = sadd.s32 %s19, 2
      $region36: #{att_up_forward_pallas.5} parent=23 // pred_fallthru
        _
    $region24: #{att_up_forward_pallas.5} parent=5 // pred_fallthru
      _
    %p246 = scmp.le.s32.totalorder 1, %s11
    %p247 = scmp.lt.s32.totalorder %s11, 33
    %p248 = pnand %p246, %p247
    %p249 = pneg %p248
    // Predicated region
    $region37: #{att_up_forward_pallas.5} parent=5 // pred_check
      _
    $region38: #{att_up_forward_pallas.5} parent=5 // pred_check_branch
      %251 = sbr.rel (%p248) target = $region40
    $region39: #{att_up_forward_pallas.5} parent=5 // pred_region
      %s252 = ssub.s32 %s11, 1
      %p253 = scmp.lt.s32.totalorder %s20, 1
      %s254 = scalar_select %p253, %s20, 1
      %p255 = scmp.lt.s32.totalorder %s21, 17
      %s256 = scalar_select %p255, %s21, 17
      %s257 = smul.addr %s256, 3
      %s258 = smul.addr %s254, 54
      %s259 = sadd.s32 %s257, %s258
      %s260 = smul.addr %s259, 4
      %s261 = scalar_lea.vmem %s0, %s260
      %p262 = pneg %p51
      %p263 = pneg %p48
      %s264 = sadd.s32 %s21, 1
      %p265 = scmp.lt.s32.totalorder %s20, 1
      %s266 = scalar_select %p265, %s20, 1
      %p267 = scmp.lt.s32.totalorder %s264, 17
      %s268 = scalar_select %p267, %s264, 17
      %s269 = smul.addr %s268, 3
      %s270 = smul.addr %s266, 54
      %s271 = sadd.s32 %s269, %s270
      %s272 = smul.addr %s271, 4
      %s273 = scalar_lea.vmem %s1, %s272
      %p274 = pneg %p81
      %p275 = pneg %p78
      %s276 = sadd.s32 %s21, 2
      %p277 = scmp.lt.s32.totalorder %s20, 1
      %s278 = scalar_select %p277, %s20, 1
      %p279 = scmp.lt.s32.totalorder %s276, 17
      %s280 = scalar_select %p279, %s276, 17
      %s281 = smul.addr %s280, 3
      %s282 = smul.addr %s278, 54
      %s283 = sadd.s32 %s281, %s282
      %s284 = smul.addr %s283, 4
      %s285 = scalar_lea.vmem %s2, %s284
      %p286 = pneg %p111
      %p287 = pneg %p108
      %p288 = pneg %p132
      %p289 = pneg %p129
      %p290 = pneg %p153
      %p291 = pneg %p150
      %p292 = pneg %p181
      %p293 = pneg %p178
      %p294 = scmp.lt.s32.totalorder %s20, 1
      %s295 = scalar_select %p294, %s20, 1
      %p296 = scmp.lt.s32.totalorder %s21, 15
      %s297 = scalar_select %p296, %s21, 15
      %s298 = smul.addr %s297, 2
      %s299 = smul.addr %s295, 32
      %s300 = sadd.s32 %s298, %s299
      %s301 = smul.addr %s300, 8
      %s302 = scalar_lea.vmem %s5, %s301
      %p303 = scmp.lt.s32.totalorder %s20, 1
      %s304 = scalar_select %p303, %s20, 1
      %p305 = scmp.lt.s32.totalorder %s21, 17
      %s306 = scalar_select %p305, %s21, 17
      %s307 = smul.addr %s306, 3
      %s308 = smul.addr %s304, 54
      %s309 = sadd.s32 %s307, %s308
      %s310 = smul.addr %s309, 4
      %s311 = scalar_lea.vmem %s0, %s310
      %s312 = sadd.s32 %s21, 1
      %p313 = scmp.lt.s32.totalorder %s20, 1
      %s314 = scalar_select %p313, %s20, 1
      %p315 = scmp.lt.s32.totalorder %s312, 17
      %s316 = scalar_select %p315, %s312, 17
      %s317 = smul.addr %s316, 3
      %s318 = smul.addr %s314, 54
      %s319 = sadd.s32 %s317, %s318
      %s320 = smul.addr %s319, 4
      %s321 = scalar_lea.vmem %s1, %s320
      %s322 = sadd.s32 %s21, 1
      %s323 = sadd.s32 %s21, 2
      %p324 = scmp.lt.s32.totalorder %s20, 1
      %s325 = scalar_select %p324, %s20, 1
      %p326 = scmp.lt.s32.totalorder %s323, 17
      %s327 = scalar_select %p326, %s323, 17
      %s328 = smul.addr %s327, 3
      %s329 = smul.addr %s325, 54
      %s330 = sadd.s32 %s328, %s329
      %s331 = smul.addr %s330, 4
      %s332 = scalar_lea.vmem %s2, %s331
      %s333 = sadd.s32 %s21, 2
      %p334 = scmp.lt.s32.totalorder %s20, 1
      %s335 = scalar_select %p334, %s20, 1
      %p336 = scmp.lt.s32.totalorder %s21, 15
      %s337 = scalar_select %p336, %s21, 15
      %s338 = smul.addr %s337, 2
      %s339 = smul.addr %s335, 32
      %s340 = sadd.s32 %s338, %s339
      %s341 = smul.addr %s340, 8
      %s342 = scalar_lea.vmem %s5, %s341
      %v344 = vld [vmem:[%s311] sm:$0xf]
      %v345 = vld [vmem:[%s311 + $0x4] sm:$0xf]
      %v346 = vld [vmem:[%s3] sm:$0x3]
      %v347 = vld [vmem:[%s311 + $0x8] sm:$0x1]
      %s348 = scalar_lea.vmem %s3, 2
      %v349 = vld [vmem:[%s348] sm:$0x3]
      %v353 = vunpack.c.l.b16 %v344
      %v354 = vunpack.c.l.b16 %v345
      %v355 = vunpack.c.l.b16 %v347
      %v356 = vpack.c.b16 %v354, %v353
      %v357 = vpack.c.b16 %v355, %v355
      %vm358 = vsmask.f32 7424
      %v360 = vshrl.u32 %v356, 16
      %v362 = vshll.u32 %v356, 16
      %v364 = vrot.slane %v362, 1
      %v365 = vor.u32 %v360, %v364
      %v367 = vshll.u32 %v357, 16
      %v369 = vrot.slane %v367, 1
      %v370 = vsel %vm358, %v365, %v369
      %vm371 = vcmask 31744
      %v373 = vsel %vm371, %v370, 0
      %vm375 = vcmask 1041408
      %v377 = vsel %vm375, %v349, 0
      %379 = vmatprep.subr.bf16.mxu0 0
      %380 = vmatpush1.bf16.msra.mxu0 %v377
      %381 = vmatprep.subr.bf16.mxu0 0
      %382 = vmatpush1.bf16.msra.mxu0 0
      %383 = vmatprep.subr.bf16.mxu0 0
      %384 = vmatpush1.bf16.msra.mxu0 0
      %385 = vmatprep.subr.bf16.mxu0 0
      %386 = vmatpush1.bf16.msra.mxu0 0
      %387 = vmatprep.subr.bf16.mxu0 0
      %388 = vmatpush1.bf16.msra.mxu0 0
      %389 = vmatprep.subr.bf16.mxu0 0
      %390 = vmatpush1.bf16.msra.mxu0 0
      %391 = vmatprep.subr.bf16.mxu0 0
      %392 = vmatpush1.bf16.msra.mxu0 0
      %393 = vmatprep.subr.bf16.mxu0 0
      %394 = vmatpush1.bf16.msra.mxu0 0
      %395 = vmatprep.subr.bf16.mxu0 0
      %396 = vmatpush1.bf16.msra.mxu0 0
      %397 = vmatprep.subr.bf16.mxu0 0
      %398 = vmatpush1.bf16.msra.mxu0 0
      %399 = vmatprep.subr.bf16.mxu0 0
      %400 = vmatpush1.bf16.msra.mxu0 0
      %401 = vmatprep.subr.bf16.mxu0 0
      %402 = vmatpush1.bf16.msra.mxu0 0
      %403 = vmatprep.subr.bf16.mxu0 0
      %404 = vmatpush1.bf16.msra.mxu0 0
      %405 = vmatprep.subr.bf16.mxu0 0
      %406 = vmatpush1.bf16.msra.mxu0 0
      %407 = vmatprep.subr.bf16.mxu0 0
      %408 = vmatpush1.bf16.msra.mxu0 0
      %409 = vmatprep.subr.bf16.mxu0 0
      %410 = vmatpush1.bf16.msra.mxu0 0
      %411 = vmatprep.mubr.bf16.mxu0 0
      %412 = vmatmul.mubr.bf16.gmra.mrb[0].mxu0 %v373
      %v413 = vpop.f32.mrb[0].mxu0
      %v414 = vadd.f32 0.0, %v413
      %v415 = vpop.f32.mrb[0].mxu0
      %v416 = vpop.f32.mrb[0].mxu0
      %v417 = vadd.f32 0.0, %v416
      %v418 = vpop.f32.mrb[0].mxu0
      %419 = vdwg.mxu0
      %v420 = vsel %vm371, %v356, 0
      %v423 = vsel %vm375, %v346, 0
      %425 = vmatprep.subr.bf16.mxu0 0
      %426 = vmatpush1.bf16.msra.mxu0 %v423
      %427 = vmatprep.subr.bf16.mxu0 0
      %428 = vmatpush1.bf16.msra.mxu0 0
      %429 = vmatprep.subr.bf16.mxu0 0
      %430 = vmatpush1.bf16.msra.mxu0 0
      %431 = vmatprep.subr.bf16.mxu0 0
      %432 = vmatpush1.bf16.msra.mxu0 0
      %433 = vmatprep.subr.bf16.mxu0 0
      %434 = vmatpush1.bf16.msra.mxu0 0
      %435 = vmatprep.subr.bf16.mxu0 0
      %436 = vmatpush1.bf16.msra.mxu0 0
      %437 = vmatprep.subr.bf16.mxu0 0
      %438 = vmatpush1.bf16.msra.mxu0 0
      %439 = vmatprep.subr.bf16.mxu0 0
      %440 = vmatpush1.bf16.msra.mxu0 0
      %441 = vmatprep.subr.bf16.mxu0 0
      %442 = vmatpush1.bf16.msra.mxu0 0
      %443 = vmatprep.subr.bf16.mxu0 0
      %444 = vmatpush1.bf16.msra.mxu0 0
      %445 = vmatprep.subr.bf16.mxu0 0
      %446 = vmatpush1.bf16.msra.mxu0 0
      %447 = vmatprep.subr.bf16.mxu0 0
      %448 = vmatpush1.bf16.msra.mxu0 0
      %449 = vmatprep.subr.bf16.mxu0 0
      %450 = vmatpush1.bf16.msra.mxu0 0
      %451 = vmatprep.subr.bf16.mxu0 0
      %452 = vmatpush1.bf16.msra.mxu0 0
      %453 = vmatprep.subr.bf16.mxu0 0
      %454 = vmatpush1.bf16.msra.mxu0 0
      %455 = vmatprep.subr.bf16.mxu0 0
      %456 = vmatpush1.bf16.msra.mxu0 0
      %457 = vmatprep.mubr.bf16.mxu0 0
      %458 = vmatmul.mubr.bf16.gmra.mrb[0].mxu0 %v420
      %v459 = vpop.f32.mrb[0].mxu0
      %v460 = vadd.f32 %v414, %v459
      %v461 = vpop.f32.mrb[0].mxu0
      %v462 = vpop.f32.mrb[0].mxu0
      %v463 = vadd.f32 %v417, %v462
      %v464 = vpop.f32.mrb[0].mxu0
      %465 = vdwg.mxu0
      %v466 = vld [vmem:[%s311] sm:$0xe]
      %s467 = scalar_lea.vmem %s3, 4
      %v468 = vld [vmem:[%s467] sm:$0x3]
      %v470 = vunpack.c.l.b16 %v466
      %v471 = vpack.c.b16 %v354, %v470
      %vm472 = vcmask 1046528
      %v473 = vrot.slane %v471, 1
      %v474 = vrot.slane %v357, 1
      %v475 = vsel %vm472, %v473, %v474
      %v477 = vsel %vm371, %v475, 0
      %v480 = vsel %vm375, %v468, 0
      %482 = vmatprep.subr.bf16.mxu0 0
      %483 = vmatpush1.bf16.msra.mxu0 %v480
      %484 = vmatprep.subr.bf16.mxu0 0
      %485 = vmatpush1.bf16.msra.mxu0 0
      %486 = vmatprep.subr.bf16.mxu0 0
      %487 = vmatpush1.bf16.msra.mxu0 0
      %488 = vmatprep.subr.bf16.mxu0 0
      %489 = vmatpush1.bf16.msra.mxu0 0
      %490 = vmatprep.subr.bf16.mxu0 0
      %491 = vmatpush1.bf16.msra.mxu0 0
      %492 = vmatprep.subr.bf16.mxu0 0
      %493 = vmatpush1.bf16.msra.mxu0 0
      %494 = vmatprep.subr.bf16.mxu0 0
      %495 = vmatpush1.bf16.msra.mxu0 0
      %496 = vmatprep.subr.bf16.mxu0 0
      %497 = vmatpush1.bf16.msra.mxu0 0
      %498 = vmatprep.subr.bf16.mxu0 0
      %499 = vmatpush1.bf16.msra.mxu0 0
      %500 = vmatprep.subr.bf16.mxu0 0
      %501 = vmatpush1.bf16.msra.mxu0 0
      %502 = vmatprep.subr.bf16.mxu0 0
      %503 = vmatpush1.bf16.msra.mxu0 0
      %504 = vmatprep.subr.bf16.mxu0 0
      %505 = vmatpush1.bf16.msra.mxu0 0
      %506 = vmatprep.subr.bf16.mxu0 0
      %507 = vmatpush1.bf16.msra.mxu0 0
      %508 = vmatprep.subr.bf16.mxu0 0
      %509 = vmatpush1.bf16.msra.mxu0 0
      %510 = vmatprep.subr.bf16.mxu0 0
      %511 = vmatpush1.bf16.msra.mxu0 0
      %512 = vmatprep.subr.bf16.mxu0 0
      %513 = vmatpush1.bf16.msra.mxu0 0
      %514 = vmatprep.mubr.bf16.mxu0 0
      %515 = vmatmul.mubr.bf16.gmra.mrb[0].mxu0 %v477
      %v516 = vpop.f32.mrb[0].mxu0
      %v517 = vadd.f32 0.0, %v516
      %v518 = vpop.f32.mrb[0].mxu0
      %v519 = vpop.f32.mrb[0].mxu0
      %v520 = vadd.f32 0.0, %v519
      %v521 = vpop.f32.mrb[0].mxu0
      %522 = vdwg.mxu0
      %v523 = vadd.f32 %v460, %v517
      %v524 = vadd.f32 %v463, %v520
      %v525 = vld [vmem:[%s321] sm:$0xf]
      %v526 = vld [vmem:[%s321 + $0x4] sm:$0xf]
      %s527 = scalar_lea.vmem %s3, 6
      %v528 = vld [vmem:[%s527] sm:$0x3]
      %v531 = vunpack.c.l.b16 %v525
      %v532 = vunpack.c.l.b16 %v526
      %v533 = vpack.c.b16 %v532, %v531
      %v535 = vsel %vm371, %v533, 0
      %v538 = vsel %vm375, %v528, 0
      %540 = vmatprep.subr.bf16.mxu0 0
      %541 = vmatpush1.bf16.msra.mxu0 %v538
      %542 = vmatprep.subr.bf16.mxu0 0
      %543 = vmatpush1.bf16.msra.mxu0 0
      %544 = vmatprep.subr.bf16.mxu0 0
      %545 = vmatpush1.bf16.msra.mxu0 0
      %546 = vmatprep.subr.bf16.mxu0 0
      %547 = vmatpush1.bf16.msra.mxu0 0
      %548 = vmatprep.subr.bf16.mxu0 0
      %549 = vmatpush1.bf16.msra.mxu0 0
      %550 = vmatprep.subr.bf16.mxu0 0
      %551 = vmatpush1.bf16.msra.mxu0 0
      %552 = vmatprep.subr.bf16.mxu0 0
      %553 = vmatpush1.bf16.msra.mxu0 0
      %554 = vmatprep.subr.bf16.mxu0 0
      %555 = vmatpush1.bf16.msra.mxu0 0
      %556 = vmatprep.subr.bf16.mxu0 0
      %557 = vmatpush1.bf16.msra.mxu0 0
      %558 = vmatprep.subr.bf16.mxu0 0
      %559 = vmatpush1.bf16.msra.mxu0 0
      %560 = vmatprep.subr.bf16.mxu0 0
      %561 = vmatpush1.bf16.msra.mxu0 0
      %562 = vmatprep.subr.bf16.mxu0 0
      %563 = vmatpush1.bf16.msra.mxu0 0
      %564 = vmatprep.subr.bf16.mxu0 0
      %565 = vmatpush1.bf16.msra.mxu0 0
      %566 = vmatprep.subr.bf16.mxu0 0
      %567 = vmatpush1.bf16.msra.mxu0 0
      %568 = vmatprep.subr.bf16.mxu0 0
      %569 = vmatpush1.bf16.msra.mxu0 0
      %570 = vmatprep.subr.bf16.mxu0 0
      %571 = vmatpush1.bf16.msra.mxu0 0
      %572 = vmatprep.mubr.bf16.mxu0 0
      %573 = vmatmul.mubr.bf16.gmra.mrb[0].mxu0 %v535
      %v574 = vpop.f32.mrb[0].mxu0
      %v575 = vadd.f32 0.0, %v574
      %v576 = vpop.f32.mrb[0].mxu0
      %v577 = vpop.f32.mrb[0].mxu0
      %v578 = vadd.f32 0.0, %v577
      %v579 = vpop.f32.mrb[0].mxu0
      %580 = vdwg.mxu0
      %v581 = vadd.f32 %v523, %v575
      %v582 = vadd.f32 %v524, %v578
      %v583 = vld [vmem:[%s321] sm:$0xf]
      %v584 = vld [vmem:[%s321 + $0x4] sm:$0xf]
      %v585 = vld [vmem:[%s321 + $0x8] sm:$0x1]
      %s586 = scalar_lea.vmem %s3, 8
      %v587 = vld [vmem:[%s586] sm:$0x3]
      %v591 = vunpack.c.l.b16 %v583
      %v592 = vunpack.c.l.b16 %v584
      %v593 = vunpack.c.l.b16 %v585
      %v594 = vpack.c.b16 %v592, %v591
      %v595 = vpack.c.b16 %v593, %v593
      %v597 = vshrl.u32 %v594, 16
      %v599 = vshll.u32 %v594, 16
      %v601 = vrot.slane %v599, 1
      %v602 = vor.u32 %v597, %v601
      %v604 = vshll.u32 %v595, 16
      %v606 = vrot.slane %v604, 1
      %v607 = vsel %vm358, %v602, %v606
      %v609 = vsel %vm371, %v607, 0
      %v612 = vsel %vm375, %v587, 0
      %614 = vmatprep.subr.bf16.mxu0 0
      %615 = vmatpush1.bf16.msra.mxu0 %v612
      %616 = vmatprep.subr.bf16.mxu0 0
      %617 = vmatpush1.bf16.msra.mxu0 0
      %618 = vmatprep.subr.bf16.mxu0 0
      %619 = vmatpush1.bf16.msra.mxu0 0
      %620 = vmatprep.subr.bf16.mxu0 0
      %621 = vmatpush1.bf16.msra.mxu0 0
      %622 = vmatprep.subr.bf16.mxu0 0
      %623 = vmatpush1.bf16.msra.mxu0 0
      %624 = vmatprep.subr.bf16.mxu0 0
      %625 = vmatpush1.bf16.msra.mxu0 0
      %626 = vmatprep.subr.bf16.mxu0 0
      %627 = vmatpush1.bf16.msra.mxu0 0
      %628 = vmatprep.subr.bf16.mxu0 0
      %629 = vmatpush1.bf16.msra.mxu0 0
      %630 = vmatprep.subr.bf16.mxu0 0
      %631 = vmatpush1.bf16.msra.mxu0 0
      %632 = vmatprep.subr.bf16.mxu0 0
      %633 = vmatpush1.bf16.msra.mxu0 0
      %634 = vmatprep.subr.bf16.mxu0 0
      %635 = vmatpush1.bf16.msra.mxu0 0
      %636 = vmatprep.subr.bf16.mxu0 0
      %637 = vmatpush1.bf16.msra.mxu0 0
      %638 = vmatprep.subr.bf16.mxu0 0
      %639 = vmatpush1.bf16.msra.mxu0 0
      %640 = vmatprep.subr.bf16.mxu0 0
      %641 = vmatpush1.bf16.msra.mxu0 0
      %642 = vmatprep.subr.bf16.mxu0 0
      %643 = vmatpush1.bf16.msra.mxu0 0
      %644 = vmatprep.subr.bf16.mxu0 0
      %645 = vmatpush1.bf16.msra.mxu0 0
      %646 = vmatprep.mubr.bf16.mxu0 0
      %647 = vmatmul.mubr.bf16.gmra.mrb[0].mxu0 %v609
      %v648 = vpop.f32.mrb[0].mxu0
      %v649 = vadd.f32 0.0, %v648
      %v650 = vpop.f32.mrb[0].mxu0
      %v651 = vpop.f32.mrb[0].mxu0
      %v652 = vadd.f32 0.0, %v651
      %v653 = vpop.f32.mrb[0].mxu0
      %654 = vdwg.mxu0
      %v655 = vadd.f32 %v581, %v649
      %v656 = vadd.f32 %v582, %v652
      %v657 = vld [vmem:[%s321] sm:$0xe]
      %s658 = scalar_lea.vmem %s3, 10
      %v659 = vld [vmem:[%s658] sm:$0x3]
      %v661 = vunpack.c.l.b16 %v657
      %v662 = vpack.c.b16 %v592, %v661
      %v663 = vrot.slane %v662, 1
      %v664 = vrot.slane %v595, 1
      %v665 = vsel %vm472, %v663, %v664
      %v667 = vsel %vm371, %v665, 0
      %v670 = vsel %vm375, %v659, 0
      %672 = vmatprep.subr.bf16.mxu0 0
      %673 = vmatpush1.bf16.msra.mxu0 %v670
      %674 = vmatprep.subr.bf16.mxu0 0
      %675 = vmatpush1.bf16.msra.mxu0 0
      %676 = vmatprep.subr.bf16.mxu0 0
      %677 = vmatpush1.bf16.msra.mxu0 0
      %678 = vmatprep.subr.bf16.mxu0 0
      %679 = vmatpush1.bf16.msra.mxu0 0
      %680 = vmatprep.subr.bf16.mxu0 0
      %681 = vmatpush1.bf16.msra.mxu0 0
      %682 = vmatprep.subr.bf16.mxu0 0
      %683 = vmatpush1.bf16.msra.mxu0 0
      %684 = vmatprep.subr.bf16.mxu0 0
      %685 = vmatpush1.bf16.msra.mxu0 0
      %686 = vmatprep.subr.bf16.mxu0 0
      %687 = vmatpush1.bf16.msra.mxu0 0
      %688 = vmatprep.subr.bf16.mxu0 0
      %689 = vmatpush1.bf16.msra.mxu0 0
      %690 = vmatprep.subr.bf16.mxu0 0
      %691 = vmatpush1.bf16.msra.mxu0 0
      %692 = vmatprep.subr.bf16.mxu0 0
      %693 = vmatpush1.bf16.msra.mxu0 0
      %694 = vmatprep.subr.bf16.mxu0 0
      %695 = vmatpush1.bf16.msra.mxu0 0
      %696 = vmatprep.subr.bf16.mxu0 0
      %697 = vmatpush1.bf16.msra.mxu0 0
      %698 = vmatprep.subr.bf16.mxu0 0
      %699 = vmatpush1.bf16.msra.mxu0 0
      %700 = vmatprep.subr.bf16.mxu0 0
      %701 = vmatpush1.bf16.msra.mxu0 0
      %702 = vmatprep.subr.bf16.mxu0 0
      %703 = vmatpush1.bf16.msra.mxu0 0
      %704 = vmatprep.mubr.bf16.mxu0 0
      %705 = vmatmul.mubr.bf16.gmra.mrb[0].mxu0 %v667
      %v706 = vpop.f32.mrb[0].mxu0
      %v707 = vadd.f32 0.0, %v706
      %v708 = vpop.f32.mrb[0].mxu0
      %v709 = vpop.f32.mrb[0].mxu0
      %v710 = vadd.f32 0.0, %v709
      %v711 = vpop.f32.mrb[0].mxu0
      %712 = vdwg.mxu0
      %v713 = vadd.f32 %v655, %v707
      %v714 = vadd.f32 %v656, %v710
      %v715 = vld [vmem:[%s332] sm:$0xf]
      %v716 = vld [vmem:[%s332 + $0x4] sm:$0xf]
      %s717 = scalar_lea.vmem %s3, 12
      %v718 = vld [vmem:[%s717] sm:$0x3]
      %v721 = vunpack.c.l.b16 %v715
      %v722 = vunpack.c.l.b16 %v716
      %v723 = vpack.c.b16 %v722, %v721
      %v725 = vsel %vm371, %v723, 0
      %v728 = vsel %vm375, %v718, 0
      %730 = vmatprep.subr.bf16.mxu0 0
      %731 = vmatpush1.bf16.msra.mxu0 %v728
      %732 = vmatprep.subr.bf16.mxu0 0
      %733 = vmatpush1.bf16.msra.mxu0 0
      %734 = vmatprep.subr.bf16.mxu0 0
      %735 = vmatpush1.bf16.msra.mxu0 0
      %736 = vmatprep.subr.bf16.mxu0 0
      %737 = vmatpush1.bf16.msra.mxu0 0
      %738 = vmatprep.subr.bf16.mxu0 0
      %739 = vmatpush1.bf16.msra.mxu0 0
      %740 = vmatprep.subr.bf16.mxu0 0
      %741 = vmatpush1.bf16.msra.mxu0 0
      %742 = vmatprep.subr.bf16.mxu0 0
      %743 = vmatpush1.bf16.msra.mxu0 0
      %744 = vmatprep.subr.bf16.mxu0 0
      %745 = vmatpush1.bf16.msra.mxu0 0
      %746 = vmatprep.subr.bf16.mxu0 0
      %747 = vmatpush1.bf16.msra.mxu0 0
      %748 = vmatprep.subr.bf16.mxu0 0
      %749 = vmatpush1.bf16.msra.mxu0 0
      %750 = vmatprep.subr.bf16.mxu0 0
      %751 = vmatpush1.bf16.msra.mxu0 0
      %752 = vmatprep.subr.bf16.mxu0 0
      %753 = vmatpush1.bf16.msra.mxu0 0
      %754 = vmatprep.subr.bf16.mxu0 0
      %755 = vmatpush1.bf16.msra.mxu0 0
      %756 = vmatprep.subr.bf16.mxu0 0
      %757 = vmatpush1.bf16.msra.mxu0 0
      %758 = vmatprep.subr.bf16.mxu0 0
      %759 = vmatpush1.bf16.msra.mxu0 0
      %760 = vmatprep.subr.bf16.mxu0 0
      %761 = vmatpush1.bf16.msra.mxu0 0
      %762 = vmatprep.mubr.bf16.mxu0 0
      %763 = vmatmul.mubr.bf16.gmra.mrb[0].mxu0 %v725
      %v764 = vpop.f32.mrb[0].mxu0
      %v765 = vadd.f32 0.0, %v764
      %v766 = vpop.f32.mrb[0].mxu0
      %v767 = vpop.f32.mrb[0].mxu0
      %v768 = vadd.f32 0.0, %v767
      %v769 = vpop.f32.mrb[0].mxu0
      %770 = vdwg.mxu0
      %v771 = vadd.f32 %v713, %v765
      %v772 = vadd.f32 %v714, %v768
      %v773 = vld [vmem:[%s332] sm:$0xf]
      %v774 = vld [vmem:[%s332 + $0x4] sm:$0xf]
      %v775 = vld [vmem:[%s332 + $0x8] sm:$0x1]
      %s776 = scalar_lea.vmem %s3, 14
      %v777 = vld [vmem:[%s776] sm:$0x3]
      %v781 = vunpack.c.l.b16 %v773
      %v782 = vunpack.c.l.b16 %v774
      %v783 = vunpack.c.l.b16 %v775
      %v784 = vpack.c.b16 %v782, %v781
      %v785 = vpack.c.b16 %v783, %v783
      %v787 = vshrl.u32 %v784, 16
      %v789 = vshll.u32 %v784, 16
      %v791 = vrot.slane %v789, 1
      %v792 = vor.u32 %v787, %v791
      %v794 = vshll.u32 %v785, 16
      %v796 = vrot.slane %v794, 1
      %v797 = vsel %vm358, %v792, %v796
      %v799 = vsel %vm371, %v797, 0
      %v802 = vsel %vm375, %v777, 0
      %804 = vmatprep.subr.bf16.mxu0 0
      %805 = vmatpush1.bf16.msra.mxu0 %v802
      %806 = vmatprep.subr.bf16.mxu0 0
      %807 = vmatpush1.bf16.msra.mxu0 0
      %808 = vmatprep.subr.bf16.mxu0 0
      %809 = vmatpush1.bf16.msra.mxu0 0
      %810 = vmatprep.subr.bf16.mxu0 0
      %811 = vmatpush1.bf16.msra.mxu0 0
      %812 = vmatprep.subr.bf16.mxu0 0
      %813 = vmatpush1.bf16.msra.mxu0 0
      %814 = vmatprep.subr.bf16.mxu0 0
      %815 = vmatpush1.bf16.msra.mxu0 0
      %816 = vmatprep.subr.bf16.mxu0 0
      %817 = vmatpush1.bf16.msra.mxu0 0
      %818 = vmatprep.subr.bf16.mxu0 0
      %819 = vmatpush1.bf16.msra.mxu0 0
      %820 = vmatprep.subr.bf16.mxu0 0
      %821 = vmatpush1.bf16.msra.mxu0 0
      %822 = vmatprep.subr.bf16.mxu0 0
      %823 = vmatpush1.bf16.msra.mxu0 0
      %824 = vmatprep.subr.bf16.mxu0 0
      %825 = vmatpush1.bf16.msra.mxu0 0
      %826 = vmatprep.subr.bf16.mxu0 0
      %827 = vmatpush1.bf16.msra.mxu0 0
      %828 = vmatprep.subr.bf16.mxu0 0
      %829 = vmatpush1.bf16.msra.mxu0 0
      %830 = vmatprep.subr.bf16.mxu0 0
      %831 = vmatpush1.bf16.msra.mxu0 0
      %832 = vmatprep.subr.bf16.mxu0 0
      %833 = vmatpush1.bf16.msra.mxu0 0
      %834 = vmatprep.subr.bf16.mxu0 0
      %835 = vmatpush1.bf16.msra.mxu0 0
      %836 = vmatprep.mubr.bf16.mxu0 0
      %837 = vmatmul.mubr.bf16.gmra.mrb[0].mxu0 %v799
      %v838 = vpop.f32.mrb[0].mxu0
      %v839 = vadd.f32 0.0, %v838
      %v840 = vpop.f32.mrb[0].mxu0
      %v841 = vpop.f32.mrb[0].mxu0
      %v842 = vadd.f32 0.0, %v841
      %v843 = vpop.f32.mrb[0].mxu0
      %844 = vdwg.mxu0
      %v845 = vadd.f32 %v771, %v839
      %v846 = vadd.f32 %v772, %v842
      %v847 = vld [vmem:[%s332] sm:$0xe]
      %s848 = scalar_lea.vmem %s3, 16
      %v849 = vld [vmem:[%s848] sm:$0x3]
      %v851 = vunpack.c.l.b16 %v847
      %v852 = vpack.c.b16 %v782, %v851
      %v853 = vrot.slane %v852, 1
      %v854 = vrot.slane %v785, 1
      %v855 = vsel %vm472, %v853, %v854
      %v857 = vsel %vm371, %v855, 0
      %v860 = vsel %vm375, %v849, 0
      %862 = vmatprep.subr.bf16.mxu0 0
      %863 = vmatpush1.bf16.msra.mxu0 %v860
      %864 = vmatprep.subr.bf16.mxu0 0
      %865 = vmatpush1.bf16.msra.mxu0 0
      %866 = vmatprep.subr.bf16.mxu0 0
      %867 = vmatpush1.bf16.msra.mxu0 0
      %868 = vmatprep.subr.bf16.mxu0 0
      %869 = vmatpush1.bf16.msra.mxu0 0
      %870 = vmatprep.subr.bf16.mxu0 0
      %871 = vmatpush1.bf16.msra.mxu0 0
      %872 = vmatprep.subr.bf16.mxu0 0
      %873 = vmatpush1.bf16.msra.mxu0 0
      %874 = vmatprep.subr.bf16.mxu0 0
      %875 = vmatpush1.bf16.msra.mxu0 0
      %876 = vmatprep.subr.bf16.mxu0 0
      %877 = vmatpush1.bf16.msra.mxu0 0
      %878 = vmatprep.subr.bf16.mxu0 0
      %879 = vmatpush1.bf16.msra.mxu0 0
      %880 = vmatprep.subr.bf16.mxu0 0
      %881 = vmatpush1.bf16.msra.mxu0 0
      %882 = vmatprep.subr.bf16.mxu0 0
      %883 = vmatpush1.bf16.msra.mxu0 0
      %884 = vmatprep.subr.bf16.mxu0 0
      %885 = vmatpush1.bf16.msra.mxu0 0
      %886 = vmatprep.subr.bf16.mxu0 0
      %887 = vmatpush1.bf16.msra.mxu0 0
      %888 = vmatprep.subr.bf16.mxu0 0
      %889 = vmatpush1.bf16.msra.mxu0 0
      %890 = vmatprep.subr.bf16.mxu0 0
      %891 = vmatpush1.bf16.msra.mxu0 0
      %892 = vmatprep.subr.bf16.mxu0 0
      %893 = vmatpush1.bf16.msra.mxu0 0
      %894 = vmatprep.mubr.bf16.mxu0 0
      %895 = vmatmul.mubr.bf16.gmra.mrb[0].mxu0 %v857
      %v896 = vpop.f32.mrb[0].mxu0
      %v897 = vadd.f32 0.0, %v896
      %v898 = vpop.f32.mrb[0].mxu0
      %v899 = vpop.f32.mrb[0].mxu0
      %v900 = vadd.f32 0.0, %v899
      %v901 = vpop.f32.mrb[0].mxu0
      %902 = vdwg.mxu0
      %v903 = vadd.f32 %v845, %v897
      %v904 = vadd.f32 %v846, %v900
      %v905 = vld [vmem:[%s4] sm:$0x1]
      %v907 = vlaneseq
      %v908 = vshrl.u32 %v907, 7
      %v909 = vsub.s32 0, %v908
      %v910 = vrot.slane %v905, %v909
      %v912 = vadd.f32 %v903, %v910
      %v913 = vadd.f32 %v904, %v910
      %v914 = vmax.f32 %v912, 0.0
      %v915 = vmax.f32 %v913, 0.0
      %916 = vst.msk [vmem:[%s342] sm:$0xff] %vm371, %v914
      %917 = vst.msk [vmem:[%s342 + $0x8] sm:$0xff] %vm371, %v915
      %p918 = scmp.lt.s32.totalorder %s20, 1
      %s919 = scalar_select %p918, %s20, 1
      %p920 = scmp.lt.s32.totalorder %s21, 15
      %s921 = scalar_select %p920, %s21, 15
      %s922 = smul.addr %s921, 2
      %s923 = smul.addr %s919, 32
      %s924 = sadd.s32 %s922, %s923
      %s925 = smul.addr %s924, 8
      %s926 = scalar_lea.vmem %s5, %s925
      // Predicated region
      $region41: #{att_up_forward_pallas.5} parent=39 // pred_check
        %p927 = pneg %p178
      $region42: #{att_up_forward_pallas.5} parent=39 // pred_check_branch
        %929 = sbr.rel (%p927) target = $region44
      $region43: #{att_up_forward_pallas.5} parent=39 // pred_region
        _
      $region44: #{att_up_forward_pallas.5} parent=39 // pred_fallthru
        _
    $region40: #{att_up_forward_pallas.5} parent=5 // pred_fallthru
      _
    %p930 = scmp.le.s32.totalorder 2, %s11
    // Predicated region
    $region45: #{att_up_forward_pallas.5} parent=5 // pred_check
      %p931 = pneg %p930
    $region46: #{att_up_forward_pallas.5} parent=5 // pred_check_branch
      %933 = sbr.rel (%p931) target = $region48
    $region47: #{att_up_forward_pallas.5} parent=5 // pred_region
      %s934 = ssub.s32 %s11, 2
      // Predicated region
      $region49: #{att_up_forward_pallas.5} parent=47 // pred_check
        %p935 = pneg %p184
      $region50: #{att_up_forward_pallas.5} parent=47 // pred_check_branch
        %937 = sbr.rel (%p935) target = $region52
      $region51: #{att_up_forward_pallas.5} parent=47 // pred_region
        %p938 = scmp.lt.s32.totalorder %s22, 1
        %s939 = scalar_select %p938, %s22, 1
        %p940 = scmp.lt.s32.totalorder %s23, 15
        %s941 = scalar_select %p940, %s23, 15
        %s942 = smul.addr %s941, 2
        %s943 = smul.addr %s939, 32
        %s944 = sadd.s32 %s942, %s943
        %s945 = smul.addr %s944, 8
        %s946 = scalar_lea.vmem %s5, %s945
      $region52: #{att_up_forward_pallas.5} parent=47 // pred_fallthru
        _
    $region48: #{att_up_forward_pallas.5} parent=5 // pred_fallthru
      _
  $region6: #{att_up_forward_pallas.5} parent=0 // loop_footer
    %s15 = sadd.s32 1, %s11
  $region7: #{att_up_forward_pallas.5} parent=0 // loop_footer_branch
    %10 = sbr.rel target = $region3
  $region8: #{att_up_forward_pallas.5} parent=0 // loop_exit
    _

// kernel: att_up_forward_pallas.4
$region0: #{att_up_forward_pallas.4}
  #allocation0 [shape = 'u32[]', space=smem, size = 0x4, offset = 0x4, fixed_abs, tag = 'smem constant byte address 0x4 - core index']
  #allocation1 [shape = 'u32[144,128]{1,0:T(1,128)}', space=vmem, size = 0x12000, scoped, tag = 'internal scratch']
  #allocation2 [shape = 'bf16[18,4]{1,0:T(8,128)(2,1)}', space=vmem, size = 0x1800, scoped, tag = 'scratch operand']
  #allocation3 [shape = 'f32[1,1]{1,0:T(1,128)S(1)}', space=vmem, size = 0x200, scoped, tag = 'scoped memory for att_up_forward_pallas.4']
  %s0 = inlined_call_operand.vmem [shape: bf16[2,18,18,4], index: 0, kind: input, shape index: {}, may-alias: {0,1,2}]
  %s1 = inlined_call_operand.vmem [shape: bf16[2,18,18,4], index: 1, kind: input, shape index: {}, may-alias: {0,1,2}]
  %s2 = inlined_call_operand.vmem [shape: bf16[2,18,18,4], index: 2, kind: input, shape index: {}, may-alias: {0,1,2}]
  %s3 = inlined_call_operand.vmem [shape: bf16[2,18,18,4], index: 3, kind: input, shape index: {}, may-alias: {3,4,5}]
  %s4 = inlined_call_operand.vmem [shape: bf16[2,18,18,4], index: 4, kind: input, shape index: {}, may-alias: {3,4,5}]
  %s5 = inlined_call_operand.vmem [shape: bf16[2,18,18,4], index: 5, kind: input, shape index: {}, may-alias: {3,4,5}]
  %s6 = inlined_call_operand.vmem [shape: bf16[4,2], index: 6, kind: input, shape index: {}]
  %s7 = inlined_call_operand.vmem [shape: bf16[4,2], index: 7, kind: input, shape index: {}]
  %s8 = inlined_call_operand.vmem [shape: f32[1,2], index: 8, kind: input, shape index: {}]
  %s9 = inlined_call_operand.vmem [shape: f32[1,2], index: 9, kind: input, shape index: {}]
  %s10 = inlined_call_operand.<no memory space> [shape: f32[1,1], index: 10, kind: input, shape index: {}]
  %s11 = inlined_call_operand.vmem [shape: bf16[9,4,4], index: 11, kind: input, shape index: {}]
  %s12 = inlined_call_operand.vmem [shape: bf16[9,4,4], index: 12, kind: input, shape index: {}]
  %s13 = inlined_call_operand.vmem [shape: f32[1,4], index: 13, kind: input, shape index: {}]
  %s14 = inlined_call_operand.vmem [shape: bf16[2,16,16,4], index: 14, kind: output, shape index: {}]
  %s15 = sld [smem:[#allocation0]]
  $region89: #{att_up_forward_pallas.4} parent=0
    _
  %s17 = ssub.s32 1, %s15
  %s18 = scalar_select 0, %s17, %s15
  %v19 = vstv %s10
  %20 = vst [vmem:[#allocation3] sm:$0x1] %v19
  loop: start=0, step=1, limit=34
  $region2: #{att_up_forward_pallas.4} parent=0 // loop_pre_header
    _
  $region3: #{att_up_forward_pallas.4} parent=0 // loop_header
    %s22 = sphi 0, %s26
    %p23 = scmp.ge.s32.totalorder %s22, 34
    %s29 = sphi 0, %s41
    %s30 = sphi 0, %s37
    %s31 = sphi 0, %s29
    %s32 = sphi 0, %s30
    %s33 = sphi 0, %s31
    %s34 = sphi 0, %s32
    %s46 = sphi 0, %s48
    %s49 = sphi 0, %s46
    %s50 = sphi 0, %s49
    %s66 = sphi 0, %s50
    %s76 = sphi 0, %s78
    %s79 = sphi 0, %s76
    %s80 = sphi 0, %s79
    %s96 = sphi 0, %s80
    %s106 = sphi 0, %s108
    %s109 = sphi 0, %s106
    %s110 = sphi 0, %s109
    %s126 = sphi 0, %s110
    %s134 = sphi 0, %s136
    %s137 = sphi 0, %s134
    %s138 = sphi 0, %s137
    %s154 = sphi 0, %s138
    %s164 = sphi 0, %s166
    %s167 = sphi 0, %s164
    %s168 = sphi 0, %s167
    %s184 = sphi 0, %s168
    %s194 = sphi 0, %s196
    %s197 = sphi 0, %s194
    %s198 = sphi 0, %s197
    %s214 = sphi 0, %s198
    %s218 = sphi 0, %s218
    %s220 = sphi 0, %s218
    %s221 = sphi 0, %s220
    %s235 = sphi 0, %s221
    %s239 = sphi 0, %s239
    %s241 = sphi 0, %s239
    %s242 = sphi 0, %s241
    %s256 = sphi 0, %s242
    %s260 = sphi 0, %s260
    %s262 = sphi 0, %s260
    %s263 = sphi 0, %s262
    %s277 = sphi 0, %s263
    %s281 = sphi 0, %s281
    %s283 = sphi 0, %s281
    %s284 = sphi 0, %s283
    %s298 = sphi 0, %s284
    %s302 = sphi 0, %s302
    %s304 = sphi 0, %s302
    %s305 = sphi 0, %s304
    %s319 = sphi 0, %s305
    %s323 = sphi 0, %s323
    %s325 = sphi 0, %s323
    %s326 = sphi 0, %s325
    %s340 = sphi 0, %s326
    %s344 = sphi 0, %s344
    %s346 = sphi 0, %s344
    %s347 = sphi 0, %s346
    %s361 = sphi 0, %s347
    %s365 = sphi 0, %s365
    %s367 = sphi 0, %s365
    %s368 = sphi 0, %s367
    %s382 = sphi 0, %s368
    %s390 = sphi 0, %s392
    %s393 = sphi 0, %s390
    %s394 = sphi 0, %s393
    %s410 = sphi 0, %s394
  $region4: #{att_up_forward_pallas.4} parent=0 // loop_header_branch
    %25 = sbr.rel (%p23) target = $region8
  $region5: #{att_up_forward_pallas.4} parent=0 // loop_body
    %s27 = ssub.s32 %s22, 1
    %s28 = ssub.s32 %s22, 2
    %s35 = sadd.s32 1, %s30
    %p36 = scmp.ge.s32.totalorder %s35, 16
    %s37 = scalar_select %p36, 0, %s35
    %s38 = sadd.s32 1, %s29
    %s39 = scalar_select %p36, %s38, %s29
    %p40 = scmp.ge.s32.totalorder %s39, 2
    %s41 = scalar_select %p40, 0, %s39
    %s42 = ssub.s32 %s29, %s41
    %s43 = ssub.s32 %s30, %s37
    %s44 = sor.u32 %s42, %s43
    %p45 = scmp.eq.s32.totalorder %s44, 0
    %s47 = sadd.s32 %s46, 1
    %s48 = scalar_select %p45, %s46, %s47
    %p51 = pneg %p45
    %p52 = scmp.eq.s32.totalorder %s22, 31
    %p53 = por %p51, %p52
    %p54 = scmp.ne.s32.totalorder %s46, %s49
    %p55 = scmp.eq.s32.totalorder %s22, 0
    %p56 = por %p54, %p55
    %p57 = scmp.ne.s32.totalorder %s46, %s49
    %p58 = scmp.eq.s32.totalorder %s27, 31
    %p59 = por %p57, %p58
    %p60 = scmp.ne.s32.totalorder %s49, %s50
    %p61 = scmp.eq.s32.totalorder %s27, 0
    %p62 = por %p60, %p61
    %p63 = scmp.ne.s32.totalorder %s49, %s50
    %p64 = scmp.eq.s32.totalorder %s28, 31
    %p65 = por %p63, %p64
    %p67 = scmp.ne.s32.totalorder %s50, %s66
    %p68 = scmp.eq.s32.totalorder %s28, 0
    %p69 = por %p67, %p68
    %s70 = sadd.s32 %s30, 1
    %s71 = sadd.s32 %s37, 1
    %s72 = ssub.s32 %s29, %s41
    %s73 = ssub.s32 %s70, %s71
    %s74 = sor.u32 %s72, %s73
    %p75 = scmp.eq.s32.totalorder %s74, 0
    %s77 = sadd.s32 %s76, 1
    %s78 = scalar_select %p75, %s76, %s77
    %p81 = pneg %p75
    %p82 = scmp.eq.s32.totalorder %s22, 31
    %p83 = por %p81, %p82
    %p84 = scmp.ne.s32.totalorder %s76, %s79
    %p85 = scmp.eq.s32.totalorder %s22, 0
    %p86 = por %p84, %p85
    %p87 = scmp.ne.s32.totalorder %s76, %s79
    %p88 = scmp.eq.s32.totalorder %s27, 31
    %p89 = por %p87, %p88
    %p90 = scmp.ne.s32.totalorder %s79, %s80
    %p91 = scmp.eq.s32.totalorder %s27, 0
    %p92 = por %p90, %p91
    %p93 = scmp.ne.s32.totalorder %s79, %s80
    %p94 = scmp.eq.s32.totalorder %s28, 31
    %p95 = por %p93, %p94
    %p97 = scmp.ne.s32.totalorder %s80, %s96
    %p98 = scmp.eq.s32.totalorder %s28, 0
    %p99 = por %p97, %p98
    %s100 = sadd.s32 %s30, 2
    %s101 = sadd.s32 %s37, 2
    %s102 = ssub.s32 %s29, %s41
    %s103 = ssub.s32 %s100, %s101
    %s104 = sor.u32 %s102, %s103
    %p105 = scmp.eq.s32.totalorder %s104, 0
    %s107 = sadd.s32 %s106, 1
    %s108 = scalar_select %p105, %s106, %s107
    %p111 = pneg %p105
    %p112 = scmp.eq.s32.totalorder %s22, 31
    %p113 = por %p111, %p112
    %p114 = scmp.ne.s32.totalorder %s106, %s109
    %p115 = scmp.eq.s32.totalorder %s22, 0
    %p116 = por %p114, %p115
    %p117 = scmp.ne.s32.totalorder %s106, %s109
    %p118 = scmp.eq.s32.totalorder %s27, 31
    %p119 = por %p117, %p118
    %p120 = scmp.ne.s32.totalorder %s109, %s110
    %p121 = scmp.eq.s32.totalorder %s27, 0
    %p122 = por %p120, %p121
    %p123 = scmp.ne.s32.totalorder %s109, %s110
    %p124 = scmp.eq.s32.totalorder %s28, 31
    %p125 = por %p123, %p124
    %p127 = scmp.ne.s32.totalorder %s110, %s126
    %p128 = scmp.eq.s32.totalorder %s28, 0
    %p129 = por %p127, %p128
    %s130 = ssub.s32 %s29, %s41
    %s131 = ssub.s32 %s30, %s37
    %s132 = sor.u32 %s130, %s131
    %p133 = scmp.eq.s32.totalorder %s132, 0
    %s135 = sadd.s32 %s134, 1
    %s136 = scalar_select %p133, %s134, %s135
    %p139 = pneg %p133
    %p140 = scmp.eq.s32.totalorder %s22, 31
    %p141 = por %p139, %p140
    %p142 = scmp.ne.s32.totalorder %s134, %s137
    %p143 = scmp.eq.s32.totalorder %s22, 0
    %p144 = por %p142, %p143
    %p145 = scmp.ne.s32.totalorder %s134, %s137
    %p146 = scmp.eq.s32.totalorder %s27, 31
    %p147 = por %p145, %p146
    %p148 = scmp.ne.s32.totalorder %s137, %s138
    %p149 = scmp.eq.s32.totalorder %s27, 0
    %p150 = por %p148, %p149
    %p151 = scmp.ne.s32.totalorder %s137, %s138
    %p152 = scmp.eq.s32.totalorder %s28, 31
    %p153 = por %p151, %p152
    %p155 = scmp.ne.s32.totalorder %s138, %s154
    %p156 = scmp.eq.s32.totalorder %s28, 0
    %p157 = por %p155, %p156
    %s158 = sadd.s32 %s30, 1
    %s159 = sadd.s32 %s37, 1
    %s160 = ssub.s32 %s29, %s41
    %s161 = ssub.s32 %s158, %s159
    %s162 = sor.u32 %s160, %s161
    %p163 = scmp.eq.s32.totalorder %s162, 0
    %s165 = sadd.s32 %s164, 1
    %s166 = scalar_select %p163, %s164, %s165
    %p169 = pneg %p163
    %p170 = scmp.eq.s32.totalorder %s22, 31
    %p171 = por %p169, %p170
    %p172 = scmp.ne.s32.totalorder %s164, %s167
    %p173 = scmp.eq.s32.totalorder %s22, 0
    %p174 = por %p172, %p173
    %p175 = scmp.ne.s32.totalorder %s164, %s167
    %p176 = scmp.eq.s32.totalorder %s27, 31
    %p177 = por %p175, %p176
    %p178 = scmp.ne.s32.totalorder %s167, %s168
    %p179 = scmp.eq.s32.totalorder %s27, 0
    %p180 = por %p178, %p179
    %p181 = scmp.ne.s32.totalorder %s167, %s168
    %p182 = scmp.eq.s32.totalorder %s28, 31
    %p183 = por %p181, %p182
    %p185 = scmp.ne.s32.totalorder %s168, %s184
    %p186 = scmp.eq.s32.totalorder %s28, 0
    %p187 = por %p185, %p186
    %s188 = sadd.s32 %s30, 2
    %s189 = sadd.s32 %s37, 2
    %s190 = ssub.s32 %s29, %s41
    %s191 = ssub.s32 %s188, %s189
    %s192 = sor.u32 %s190, %s191
    %p193 = scmp.eq.s32.totalorder %s192, 0
    %s195 = sadd.s32 %s194, 1
    %s196 = scalar_select %p193, %s194, %s195
    %p199 = pneg %p193
    %p200 = scmp.eq.s32.totalorder %s22, 31
    %p201 = por %p199, %p200
    %p202 = scmp.ne.s32.totalorder %s194, %s197
    %p203 = scmp.eq.s32.totalorder %s22, 0
    %p204 = por %p202, %p203
    %p205 = scmp.ne.s32.totalorder %s194, %s197
    %p206 = scmp.eq.s32.totalorder %s27, 31
    %p207 = por %p205, %p206
    %p208 = scmp.ne.s32.totalorder %s197, %s198
    %p209 = scmp.eq.s32.totalorder %s27, 0
    %p210 = por %p208, %p209
    %p211 = scmp.ne.s32.totalorder %s197, %s198
    %p212 = scmp.eq.s32.totalorder %s28, 31
    %p213 = por %p211, %p212
    %p215 = scmp.ne.s32.totalorder %s198, %s214
    %p216 = scmp.eq.s32.totalorder %s28, 0
    %p217 = por %p215, %p216
    %s219 = sadd.s32 %s218, 1
    %p222 = scmp.eq.s32.totalorder %s22, 31
    %p223 = scmp.ne.s32.totalorder %s218, %s220
    %p224 = scmp.eq.s32.totalorder %s22, 0
    %p225 = por %p223, %p224
    %p226 = scmp.ne.s32.totalorder %s218, %s220
    %p227 = scmp.eq.s32.totalorder %s27, 31
    %p228 = por %p226, %p227
    %p229 = scmp.ne.s32.totalorder %s220, %s221
    %p230 = scmp.eq.s32.totalorder %s27, 0
    %p231 = por %p229, %p230
    %p232 = scmp.ne.s32.totalorder %s220, %s221
    %p233 = scmp.eq.s32.totalorder %s28, 31
    %p234 = por %p232, %p233
    %p236 = scmp.ne.s32.totalorder %s221, %s235
    %p237 = scmp.eq.s32.totalorder %s28, 0
    %p238 = por %p236, %p237
    %s240 = sadd.s32 %s239, 1
    %p243 = scmp.eq.s32.totalorder %s22, 31
    %p244 = scmp.ne.s32.totalorder %s239, %s241
    %p245 = scmp.eq.s32.totalorder %s22, 0
    %p246 = por %p244, %p245
    %p247 = scmp.ne.s32.totalorder %s239, %s241
    %p248 = scmp.eq.s32.totalorder %s27, 31
    %p249 = por %p247, %p248
    %p250 = scmp.ne.s32.totalorder %s241, %s242
    %p251 = scmp.eq.s32.totalorder %s27, 0
    %p252 = por %p250, %p251
    %p253 = scmp.ne.s32.totalorder %s241, %s242
    %p254 = scmp.eq.s32.totalorder %s28, 31
    %p255 = por %p253, %p254
    %p257 = scmp.ne.s32.totalorder %s242, %s256
    %p258 = scmp.eq.s32.totalorder %s28, 0
    %p259 = por %p257, %p258
    %s261 = sadd.s32 %s260, 1
    %p264 = scmp.eq.s32.totalorder %s22, 31
    %p265 = scmp.ne.s32.totalorder %s260, %s262
    %p266 = scmp.eq.s32.totalorder %s22, 0
    %p267 = por %p265, %p266
    %p268 = scmp.ne.s32.totalorder %s260, %s262
    %p269 = scmp.eq.s32.totalorder %s27, 31
    %p270 = por %p268, %p269
    %p271 = scmp.ne.s32.totalorder %s262, %s263
    %p272 = scmp.eq.s32.totalorder %s27, 0
    %p273 = por %p271, %p272
    %p274 = scmp.ne.s32.totalorder %s262, %s263
    %p275 = scmp.eq.s32.totalorder %s28, 31
    %p276 = por %p274, %p275
    %p278 = scmp.ne.s32.totalorder %s263, %s277
    %p279 = scmp.eq.s32.totalorder %s28, 0
    %p280 = por %p278, %p279
    %s282 = sadd.s32 %s281, 1
    %p285 = scmp.eq.s32.totalorder %s22, 31
    %p286 = scmp.ne.s32.totalorder %s281, %s283
    %p287 = scmp.eq.s32.totalorder %s22, 0
    %p288 = por %p286, %p287
    %p289 = scmp.ne.s32.totalorder %s281, %s283
    %p290 = scmp.eq.s32.totalorder %s27, 31
    %p291 = por %p289, %p290
    %p292 = scmp.ne.s32.totalorder %s283, %s284
    %p293 = scmp.eq.s32.totalorder %s27, 0
    %p294 = por %p292, %p293
    %p295 = scmp.ne.s32.totalorder %s283, %s284
    %p296 = scmp.eq.s32.totalorder %s28, 31
    %p297 = por %p295, %p296
    %p299 = scmp.ne.s32.totalorder %s284, %s298
    %p300 = scmp.eq.s32.totalorder %s28, 0
    %p301 = por %p299, %p300
    %s303 = sadd.s32 %s302, 1
    %p306 = scmp.eq.s32.totalorder %s22, 31
    %p307 = scmp.ne.s32.totalorder %s302, %s304
    %p308 = scmp.eq.s32.totalorder %s22, 0
    %p309 = por %p307, %p308
    %p310 = scmp.ne.s32.totalorder %s302, %s304
    %p311 = scmp.eq.s32.totalorder %s27, 31
    %p312 = por %p310, %p311
    %p313 = scmp.ne.s32.totalorder %s304, %s305
    %p314 = scmp.eq.s32.totalorder %s27, 0
    %p315 = por %p313, %p314
    %p316 = scmp.ne.s32.totalorder %s304, %s305
    %p317 = scmp.eq.s32.totalorder %s28, 31
    %p318 = por %p316, %p317
    %p320 = scmp.ne.s32.totalorder %s305, %s319
    %p321 = scmp.eq.s32.totalorder %s28, 0
    %p322 = por %p320, %p321
    %s324 = sadd.s32 %s323, 1
    %p327 = scmp.eq.s32.totalorder %s22, 31
    %p328 = scmp.ne.s32.totalorder %s323, %s325
    %p329 = scmp.eq.s32.totalorder %s22, 0
    %p330 = por %p328, %p329
    %p331 = scmp.ne.s32.totalorder %s323, %s325
    %p332 = scmp.eq.s32.totalorder %s27, 31
    %p333 = por %p331, %p332
    %p334 = scmp.ne.s32.totalorder %s325, %s326
    %p335 = scmp.eq.s32.totalorder %s27, 0
    %p336 = por %p334, %p335
    %p337 = scmp.ne.s32.totalorder %s325, %s326
    %p338 = scmp.eq.s32.totalorder %s28, 31
    %p339 = por %p337, %p338
    %p341 = scmp.ne.s32.totalorder %s326, %s340
    %p342 = scmp.eq.s32.totalorder %s28, 0
    %p343 = por %p341, %p342
    %s345 = sadd.s32 %s344, 1
    %p348 = scmp.eq.s32.totalorder %s22, 31
    %p349 = scmp.ne.s32.totalorder %s344, %s346
    %p350 = scmp.eq.s32.totalorder %s22, 0
    %p351 = por %p349, %p350
    %p352 = scmp.ne.s32.totalorder %s344, %s346
    %p353 = scmp.eq.s32.totalorder %s27, 31
    %p354 = por %p352, %p353
    %p355 = scmp.ne.s32.totalorder %s346, %s347
    %p356 = scmp.eq.s32.totalorder %s27, 0
    %p357 = por %p355, %p356
    %p358 = scmp.ne.s32.totalorder %s346, %s347
    %p359 = scmp.eq.s32.totalorder %s28, 31
    %p360 = por %p358, %p359
    %p362 = scmp.ne.s32.totalorder %s347, %s361
    %p363 = scmp.eq.s32.totalorder %s28, 0
    %p364 = por %p362, %p363
    %s366 = sadd.s32 %s365, 1
    %p369 = scmp.eq.s32.totalorder %s22, 31
    %p370 = scmp.ne.s32.totalorder %s365, %s367
    %p371 = scmp.eq.s32.totalorder %s22, 0
    %p372 = por %p370, %p371
    %p373 = scmp.ne.s32.totalorder %s365, %s367
    %p374 = scmp.eq.s32.totalorder %s27, 31
    %p375 = por %p373, %p374
    %p376 = scmp.ne.s32.totalorder %s367, %s368
    %p377 = scmp.eq.s32.totalorder %s27, 0
    %p378 = por %p376, %p377
    %p379 = scmp.ne.s32.totalorder %s367, %s368
    %p380 = scmp.eq.s32.totalorder %s28, 31
    %p381 = por %p379, %p380
    %p383 = scmp.ne.s32.totalorder %s368, %s382
    %p384 = scmp.eq.s32.totalorder %s28, 0
    %p385 = por %p383, %p384
    %s386 = ssub.s32 %s29, %s41
    %s387 = ssub.s32 %s30, %s37
    %s388 = sor.u32 %s386, %s387
    %p389 = scmp.eq.s32.totalorder %s388, 0
    %s391 = sadd.s32 %s390, 1
    %s392 = scalar_select %p389, %s390, %s391
    %p395 = pneg %p389
    %p396 = scmp.eq.s32.totalorder %s22, 31
    %p397 = por %p395, %p396
    %p398 = scmp.ne.s32.totalorder %s390, %s393
    %p399 = scmp.eq.s32.totalorder %s22, 0
    %p400 = por %p398, %p399
    %p401 = scmp.ne.s32.totalorder %s390, %s393
    %p402 = scmp.eq.s32.totalorder %s27, 31
    %p403 = por %p401, %p402
    %p404 = scmp.ne.s32.totalorder %s393, %s394
    %p405 = scmp.eq.s32.totalorder %s27, 0
    %p406 = por %p404, %p405
    %p407 = scmp.ne.s32.totalorder %s393, %s394
    %p408 = scmp.eq.s32.totalorder %s28, 31
    %p409 = por %p407, %p408
    %p411 = scmp.ne.s32.totalorder %s394, %s410
    %p412 = scmp.eq.s32.totalorder %s28, 0
    %p413 = por %p411, %p412
    %p414 = scmp.le.s32.totalorder 1, %s22
    %p415 = scmp.lt.s32.totalorder %s22, 33
    %p416 = pnand %p414, %p415
    %p417 = pneg %p416
    // Predicated region
    $region9: #{att_up_forward_pallas.4} parent=5 // pred_check
      _
    $region10: #{att_up_forward_pallas.4} parent=5 // pred_check_branch
      %419 = sbr.rel (%p416) target = $region12
    $region11: #{att_up_forward_pallas.4} parent=5 // pred_region
      %s420 = ssub.s32 %s22, 1
      // Predicated region
      $region13: #{att_up_forward_pallas.4} parent=11 // pred_check
        %p421 = pneg %p231
      $region14: #{att_up_forward_pallas.4} parent=11 // pred_check_branch
        %423 = sbr.rel (%p421) target = $region16
      $region15: #{att_up_forward_pallas.4} parent=11 // pred_region
        _
      $region16: #{att_up_forward_pallas.4} parent=11 // pred_fallthru
        _
      // Predicated region
      $region17: #{att_up_forward_pallas.4} parent=11 // pred_check
        %p424 = pneg %p252
      $region18: #{att_up_forward_pallas.4} parent=11 // pred_check_branch
        %426 = sbr.rel (%p424) target = $region20
      $region19: #{att_up_forward_pallas.4} parent=11 // pred_region
        _
      $region20: #{att_up_forward_pallas.4} parent=11 // pred_fallthru
        _
      // Predicated region
      $region21: #{att_up_forward_pallas.4} parent=11 // pred_check
        %p427 = pneg %p273
      $region22: #{att_up_forward_pallas.4} parent=11 // pred_check_branch
        %429 = sbr.rel (%p427) target = $region24
      $region23: #{att_up_forward_pallas.4} parent=11 // pred_region
        _
      $region24: #{att_up_forward_pallas.4} parent=11 // pred_fallthru
        _
      // Predicated region
      $region25: #{att_up_forward_pallas.4} parent=11 // pred_check
        %p430 = pneg %p294
      $region26: #{att_up_forward_pallas.4} parent=11 // pred_check_branch
        %432 = sbr.rel (%p430) target = $region28
      $region27: #{att_up_forward_pallas.4} parent=11 // pred_region
        _
      $region28: #{att_up_forward_pallas.4} parent=11 // pred_fallthru
        _
      // Predicated region
      $region29: #{att_up_forward_pallas.4} parent=11 // pred_check
        %p433 = pneg %p315
      $region30: #{att_up_forward_pallas.4} parent=11 // pred_check_branch
        %435 = sbr.rel (%p433) target = $region32
      $region31: #{att_up_forward_pallas.4} parent=11 // pred_region
        _
      $region32: #{att_up_forward_pallas.4} parent=11 // pred_fallthru
        _
      // Predicated region
      $region33: #{att_up_forward_pallas.4} parent=11 // pred_check
        %p436 = pneg %p336
      $region34: #{att_up_forward_pallas.4} parent=11 // pred_check_branch
        %438 = sbr.rel (%p436) target = $region36
      $region35: #{att_up_forward_pallas.4} parent=11 // pred_region
        _
      $region36: #{att_up_forward_pallas.4} parent=11 // pred_fallthru
        _
      // Predicated region
      $region37: #{att_up_forward_pallas.4} parent=11 // pred_check
        %p439 = pneg %p357
      $region38: #{att_up_forward_pallas.4} parent=11 // pred_check_branch
        %441 = sbr.rel (%p439) target = $region40
      $region39: #{att_up_forward_pallas.4} parent=11 // pred_region
        _
      $region40: #{att_up_forward_pallas.4} parent=11 // pred_fallthru
        _
      // Predicated region
      $region41: #{att_up_forward_pallas.4} parent=11 // pred_check
        %p442 = pneg %p378
      $region42: #{att_up_forward_pallas.4} parent=11 // pred_check_branch
        %444 = sbr.rel (%p442) target = $region44
      $region43: #{att_up_forward_pallas.4} parent=11 // pred_region
        _
      $region44: #{att_up_forward_pallas.4} parent=11 // pred_fallthru
        _
    $region12: #{att_up_forward_pallas.4} parent=5 // pred_fallthru
      _
    %p445 = scmp.lt.s32.totalorder %s22, 32
    // Predicated region
    $region45: #{att_up_forward_pallas.4} parent=5 // pred_check
      %p446 = pneg %p445
    $region46: #{att_up_forward_pallas.4} parent=5 // pred_check_branch
      %448 = sbr.rel (%p446) target = $region48
    $region47: #{att_up_forward_pallas.4} parent=5 // pred_region
      // Predicated region
      $region49: #{att_up_forward_pallas.4} parent=47 // pred_check
        %p449 = pneg %p56
      $region50: #{att_up_forward_pallas.4} parent=47 // pred_check_branch
        %451 = sbr.rel (%p449) target = $region52
      $region51: #{att_up_forward_pallas.4} parent=47 // pred_region
        %p452 = scmp.lt.s32.totalorder %s29, 1
        %s453 = scalar_select %p452, %s29, 1
        %p454 = scmp.lt.s32.totalorder %s30, 17
        %s455 = scalar_select %p454, %s30, 17
        %s456 = smul.addr %s455, 3
        %s457 = smul.addr %s453, 54
        %s458 = sadd.s32 %s456, %s457
        %s459 = smul.addr %s458, 4
        %s460 = scalar_lea.vmem %s0, %s459
      $region52: #{att_up_forward_pallas.4} parent=47 // pred_fallthru
        _
      // Predicated region
      $region53: #{att_up_forward_pallas.4} parent=47 // pred_check
        %p461 = pneg %p86
      $region54: #{att_up_forward_pallas.4} parent=47 // pred_check_branch
        %463 = sbr.rel (%p461) target = $region56
      $region55: #{att_up_forward_pallas.4} parent=47 // pred_region
        %s464 = sadd.s32 %s30, 1
        %p465 = scmp.lt.s32.totalorder %s29, 1
        %s466 = scalar_select %p465, %s29, 1
        %p467 = scmp.lt.s32.totalorder %s464, 17
        %s468 = scalar_select %p467, %s464, 17
        %s469 = smul.addr %s468, 3
        %s470 = smul.addr %s466, 54
        %s471 = sadd.s32 %s469, %s470
        %s472 = smul.addr %s471, 4
        %s473 = scalar_lea.vmem %s1, %s472
        %s474 = sadd.s32 %s30, 1
      $region56: #{att_up_forward_pallas.4} parent=47 // pred_fallthru
        _
      // Predicated region
      $region57: #{att_up_forward_pallas.4} parent=47 // pred_check
        %p475 = pneg %p116
      $region58: #{att_up_forward_pallas.4} parent=47 // pred_check_branch
        %477 = sbr.rel (%p475) target = $region60
      $region59: #{att_up_forward_pallas.4} parent=47 // pred_region
        %s478 = sadd.s32 %s30, 2
        %p479 = scmp.lt.s32.totalorder %s29, 1
        %s480 = scalar_select %p479, %s29, 1
        %p481 = scmp.lt.s32.totalorder %s478, 17
        %s482 = scalar_select %p481, %s478, 17
        %s483 = smul.addr %s482, 3
        %s484 = smul.addr %s480, 54
        %s485 = sadd.s32 %s483, %s484
        %s486 = smul.addr %s485, 4
        %s487 = scalar_lea.vmem %s2, %s486
        %s488 = sadd.s32 %s30, 2
      $region60: #{att_up_forward_pallas.4} parent=47 // pred_fallthru
        _
      // Predicated region
      $region61: #{att_up_forward_pallas.4} parent=47 // pred_check
        %p489 = pneg %p144
      $region62: #{att_up_forward_pallas.4} parent=47 // pred_check_branch
        %491 = sbr.rel (%p489) target = $region64
      $region63: #{att_up_forward_pallas.4} parent=47 // pred_region
        %p492 = scmp.lt.s32.totalorder %s29, 1
        %s493 = scalar_select %p492, %s29, 1
        %p494 = scmp.lt.s32.totalorder %s30, 17
        %s495 = scalar_select %p494, %s30, 17
        %s496 = smul.addr %s495, 3
        %s497 = smul.addr %s493, 54
        %s498 = sadd.s32 %s496, %s497
        %s499 = smul.addr %s498, 4
        %s500 = scalar_lea.vmem %s3, %s499
      $region64: #{att_up_forward_pallas.4} parent=47 // pred_fallthru
        _
      // Predicated region
      $region65: #{att_up_forward_pallas.4} parent=47 // pred_check
        %p501 = pneg %p174
      $region66: #{att_up_forward_pallas.4} parent=47 // pred_check_branch
        %503 = sbr.rel (%p501) target = $region68
      $region67: #{att_up_forward_pallas.4} parent=47 // pred_region
        %s504 = sadd.s32 %s30, 1
        %p505 = scmp.lt.s32.totalorder %s29, 1
        %s506 = scalar_select %p505, %s29, 1
        %p507 = scmp.lt.s32.totalorder %s504, 17
        %s508 = scalar_select %p507, %s504, 17
        %s509 = smul.addr %s508, 3
        %s510 = smul.addr %s506, 54
        %s511 = sadd.s32 %s509, %s510
        %s512 = smul.addr %s511, 4
        %s513 = scalar_lea.vmem %s4, %s512
        %s514 = sadd.s32 %s30, 1
      $region68: #{att_up_forward_pallas.4} parent=47 // pred_fallthru
        _
      // Predicated region
      $region69: #{att_up_forward_pallas.4} parent=47 // pred_check
        %p515 = pneg %p204
      $region70: #{att_up_forward_pallas.4} parent=47 // pred_check_branch
        %517 = sbr.rel (%p515) target = $region72
      $region71: #{att_up_forward_pallas.4} parent=47 // pred_region
        %s518 = sadd.s32 %s30, 2
        %p519 = scmp.lt.s32.totalorder %s29, 1
        %s520 = scalar_select %p519, %s29, 1
        %p521 = scmp.lt.s32.totalorder %s518, 17
        %s522 = scalar_select %p521, %s518, 17
        %s523 = smul.addr %s522, 3
        %s524 = smul.addr %s520, 54
        %s525 = sadd.s32 %s523, %s524
        %s526 = smul.addr %s525, 4
        %s527 = scalar_lea.vmem %s5, %s526
        %s528 = sadd.s32 %s30, 2
      $region72: #{att_up_forward_pallas.4} parent=47 // pred_fallthru
        _
    $region48: #{att_up_forward_pallas.4} parent=5 // pred_fallthru
      _
    %p529 = scmp.le.s32.totalorder 1, %s22
    %p530 = scmp.lt.s32.totalorder %s22, 33
    %p531 = pnand %p529, %p530
    %p532 = pneg %p531
    // Predicated region
    $region73: #{att_up_forward_pallas.4} parent=5 // pred_check
      _
    $region74: #{att_up_forward_pallas.4} parent=5 // pred_check_branch
      %534 = sbr.rel (%p531) target = $region76
    $region75: #{att_up_forward_pallas.4} parent=5 // pred_region
      %s535 = ssub.s32 %s22, 1
      %p536 = scmp.lt.s32.totalorder %s31, 1
      %s537 = scalar_select %p536, %s31, 1
      %p538 = scmp.lt.s32.totalorder %s32, 17
      %s539 = scalar_select %p538, %s32, 17
      %s540 = smul.addr %s539, 3
      %s541 = smul.addr %s537, 54
      %s542 = sadd.s32 %s540, %s541
      %s543 = smul.addr %s542, 4
      %s544 = scalar_lea.vmem %s0, %s543
      %p545 = pneg %p62
      %p546 = pneg %p59
      %s547 = sadd.s32 %s32, 1
      %p548 = scmp.lt.s32.totalorder %s31, 1
      %s549 = scalar_select %p548, %s31, 1
      %p550 = scmp.lt.s32.totalorder %s547, 17
      %s551 = scalar_select %p550, %s547, 17
      %s552 = smul.addr %s551, 3
      %s553 = smul.addr %s549, 54
      %s554 = sadd.s32 %s552, %s553
      %s555 = smul.addr %s554, 4
      %s556 = scalar_lea.vmem %s1, %s555
      %p557 = pneg %p92
      %p558 = pneg %p89
      %s559 = sadd.s32 %s32, 2
      %p560 = scmp.lt.s32.totalorder %s31, 1
      %s561 = scalar_select %p560, %s31, 1
      %p562 = scmp.lt.s32.totalorder %s559, 17
      %s563 = scalar_select %p562, %s559, 17
      %s564 = smul.addr %s563, 3
      %s565 = smul.addr %s561, 54
      %s566 = sadd.s32 %s564, %s565
      %s567 = smul.addr %s566, 4
      %s568 = scalar_lea.vmem %s2, %s567
      %p569 = pneg %p122
      %p570 = pneg %p119
      %p571 = scmp.lt.s32.totalorder %s31, 1
      %s572 = scalar_select %p571, %s31, 1
      %p573 = scmp.lt.s32.totalorder %s32, 17
      %s574 = scalar_select %p573, %s32, 17
      %s575 = smul.addr %s574, 3
      %s576 = smul.addr %s572, 54
      %s577 = sadd.s32 %s575, %s576
      %s578 = smul.addr %s577, 4
      %s579 = scalar_lea.vmem %s3, %s578
      %p580 = pneg %p150
      %p581 = pneg %p147
      %s582 = sadd.s32 %s32, 1
      %p583 = scmp.lt.s32.totalorder %s31, 1
      %s584 = scalar_select %p583, %s31, 1
      %p585 = scmp.lt.s32.totalorder %s582, 17
      %s586 = scalar_select %p585, %s582, 17
      %s587 = smul.addr %s586, 3
      %s588 = smul.addr %s584, 54
      %s589 = sadd.s32 %s587, %s588
      %s590 = smul.addr %s589, 4
      %s591 = scalar_lea.vmem %s4, %s590
      %p592 = pneg %p180
      %p593 = pneg %p177
      %s594 = sadd.s32 %s32, 2
      %p595 = scmp.lt.s32.totalorder %s31, 1
      %s596 = scalar_select %p595, %s31, 1
      %p597 = scmp.lt.s32.totalorder %s594, 17
      %s598 = scalar_select %p597, %s594, 17
      %s599 = smul.addr %s598, 3
      %s600 = smul.addr %s596, 54
      %s601 = sadd.s32 %s599, %s600
      %s602 = smul.addr %s601, 4
      %s603 = scalar_lea.vmem %s5, %s602
      %p604 = pneg %p210
      %p605 = pneg %p207
      %p606 = pneg %p231
      %p607 = pneg %p228
      %p608 = pneg %p252
      %p609 = pneg %p249
      %p610 = pneg %p273
      %p611 = pneg %p270
      %p612 = pneg %p294
      %p613 = pneg %p291
      %p614 = pneg %p315
      %p615 = pneg %p312
      %p616 = pneg %p336
      %p617 = pneg %p333
      %p618 = pneg %p357
      %p619 = pneg %p354
      %p620 = pneg %p378
      %p621 = pneg %p375
      %p622 = pneg %p406
      %p623 = pneg %p403
      %p624 = scmp.lt.s32.totalorder %s31, 1
      %s625 = scalar_select %p624, %s31, 1
      %p626 = scmp.lt.s32.totalorder %s32, 15
      %s627 = scalar_select %p626, %s32, 15
      %s628 = smul.addr %s627, 2
      %s629 = smul.addr %s625, 32
      %s630 = sadd.s32 %s628, %s629
      %s631 = smul.addr %s630, 4
      %s632 = scalar_lea.vmem %s14, %s631
      %p633 = scmp.lt.s32.totalorder %s31, 1
      %s634 = scalar_select %p633, %s31, 1
      %p635 = scmp.lt.s32.totalorder %s32, 17
      %s636 = scalar_select %p635, %s32, 17
      %s637 = smul.addr %s636, 3
      %s638 = smul.addr %s634, 54
      %s639 = sadd.s32 %s637, %s638
      %s640 = smul.addr %s639, 4
      %s641 = scalar_lea.vmem %s0, %s640
      %s642 = sadd.s32 %s32, 1
      %p643 = scmp.lt.s32.totalorder %s31, 1
      %s644 = scalar_select %p643, %s31, 1
      %p645 = scmp.lt.s32.totalorder %s642, 17
      %s646 = scalar_select %p645, %s642, 17
      %s647 = smul.addr %s646, 3
      %s648 = smul.addr %s644, 54
      %s649 = sadd.s32 %s647, %s648
      %s650 = smul.addr %s649, 4
      %s651 = scalar_lea.vmem %s1, %s650
      %s652 = sadd.s32 %s32, 1
      %s653 = sadd.s32 %s32, 2
      %p654 = scmp.lt.s32.totalorder %s31, 1
      %s655 = scalar_select %p654, %s31, 1
      %p656 = scmp.lt.s32.totalorder %s653, 17
      %s657 = scalar_select %p656, %s653, 17
      %s658 = smul.addr %s657, 3
      %s659 = smul.addr %s655, 54
      %s660 = sadd.s32 %s658, %s659
      %s661 = smul.addr %s660, 4
      %s662 = scalar_lea.vmem %s2, %s661
      %s663 = sadd.s32 %s32, 2
      %p664 = scmp.lt.s32.totalorder %s31, 1
      %s665 = scalar_select %p664, %s31, 1
      %p666 = scmp.lt.s32.totalorder %s32, 17
      %s667 = scalar_select %p666, %s32, 17
      %s668 = smul.addr %s667, 3
      %s669 = smul.addr %s665, 54
      %s670 = sadd.s32 %s668, %s669
      %s671 = smul.addr %s670, 4
      %s672 = scalar_lea.vmem %s3, %s671
      %s673 = sadd.s32 %s32, 1
      %p674 = scmp.lt.s32.totalorder %s31, 1
      %s675 = scalar_select %p674, %s31, 1
      %p676 = scmp.lt.s32.totalorder %s673, 17
      %s677 = scalar_select %p676, %s673, 17
      %s678 = smul.addr %s677, 3
      %s679 = smul.addr %s675, 54
      %s680 = sadd.s32 %s678, %s679
      %s681 = smul.addr %s680, 4
      %s682 = scalar_lea.vmem %s4, %s681
      %s683 = sadd.s32 %s32, 1
      %s684 = sadd.s32 %s32, 2
      %p685 = scmp.lt.s32.totalorder %s31, 1
      %s686 = scalar_select %p685, %s31, 1
      %p687 = scmp.lt.s32.totalorder %s684, 17
      %s688 = scalar_select %p687, %s684, 17
      %s689 = smul.addr %s688, 3
      %s690 = smul.addr %s686, 54
      %s691 = sadd.s32 %s689, %s690
      %s692 = smul.addr %s691, 4
      %s693 = scalar_lea.vmem %s5, %s692
      %s694 = sadd.s32 %s32, 2
      %p695 = scmp.lt.s32.totalorder %s31, 1
      %s696 = scalar_select %p695, %s31, 1
      %p697 = scmp.lt.s32.totalorder %s32, 15
      %s698 = scalar_select %p697, %s32, 15
      %s699 = smul.addr %s698, 2
      %s700 = smul.addr %s696, 32
      %s701 = sadd.s32 %s699, %s700
      %s702 = smul.addr %s701, 4
      %s703 = scalar_lea.vmem %s14, %s702
      %v705 = vld [vmem:[%s641] sm:$0xf]
      %v706 = vld [vmem:[%s641 + $0x4] sm:$0xf]
      %v707 = vld [vmem:[%s641 + $0x8] sm:$0x1]
      %v708 = vld [vmem:[%s672] sm:$0xf]
      %v709 = vld [vmem:[%s672 + $0x4] sm:$0xf]
      %v710 = vld [vmem:[%s672 + $0x8] sm:$0x1]
      %v711 = vld [vmem:[%s6] sm:$0x3]
      %v712 = vld [vmem:[%s7] sm:$0x3]
      %v716 = vunpack.c.l.b16 %v708
      %v717 = vunpack.c.l.b16 %v709
      %v718 = vunpack.c.l.b16 %v710
      %v719 = vpack.c.b16 %v717, %v716
      %v720 = vpack.c.b16 %v718, %v718
      %vm721 = vcmask 31744
      %v723 = vsel %vm721, %v719, 0
      %v726 = vsel %vm721, %v720, 0
      %vm728 = vcmask 1041408
      %v730 = vsel %vm728, %v712, 0
      %732 = vmatprep.subr.bf16.mxu0 0
      %733 = vmatpush1.bf16.msra.mxu0 %v730
      %734 = vmatprep.subr.bf16.mxu0 0
      %735 = vmatpush1.bf16.msra.mxu0 0
      %736 = vmatprep.subr.bf16.mxu0 0
      %737 = vmatpush1.bf16.msra.mxu0 0
      %738 = vmatprep.subr.bf16.mxu0 0
      %739 = vmatpush1.bf16.msra.mxu0 0
      %740 = vmatprep.subr.bf16.mxu0 0
      %741 = vmatpush1.bf16.msra.mxu0 0
      %742 = vmatprep.subr.bf16.mxu0 0
      %743 = vmatpush1.bf16.msra.mxu0 0
      %744 = vmatprep.subr.bf16.mxu0 0
      %745 = vmatpush1.bf16.msra.mxu0 0
      %746 = vmatprep.subr.bf16.mxu0 0
      %747 = vmatpush1.bf16.msra.mxu0 0
      %748 = vmatprep.subr.bf16.mxu0 0
      %749 = vmatpush1.bf16.msra.mxu0 0
      %750 = vmatprep.subr.bf16.mxu0 0
      %751 = vmatpush1.bf16.msra.mxu0 0
      %752 = vmatprep.subr.bf16.mxu0 0
      %753 = vmatpush1.bf16.msra.mxu0 0
      %754 = vmatprep.subr.bf16.mxu0 0
      %755 = vmatpush1.bf16.msra.mxu0 0
      %756 = vmatprep.subr.bf16.mxu0 0
      %757 = vmatpush1.bf16.msra.mxu0 0
      %758 = vmatprep.subr.bf16.mxu0 0
      %759 = vmatpush1.bf16.msra.mxu0 0
      %760 = vmatprep.subr.bf16.mxu0 0
      %761 = vmatpush1.bf16.msra.mxu0 0
      %762 = vmatprep.subr.bf16.mxu0 0
      %763 = vmatpush1.bf16.msra.mxu0 0
      %764 = vmatprep.mubr.bf16.mxu0 0
      %765 = vmatmul.mubr.bf16.gmra.mrb[0].mxu0 %v723
      %v766 = vpop.f32.mrb[0].mxu0
      %v767 = vadd.f32 0.0, %v766
      %v768 = vpop.f32.mrb[0].mxu0
      %v769 = vpop.f32.mrb[0].mxu0
      %v770 = vadd.f32 0.0, %v769
      %v771 = vpop.f32.mrb[0].mxu0
      %772 = vmatprep.mubr.bf16.mxu0 0
      %773 = vmatmul.mubr.bf16.gmra.mrb[0].mxu0 %v726
      %v774 = vpop.f32.mrb[0].mxu0
      %v775 = vadd.f32 0.0, %v774
      %v776 = vpop.f32.mrb[0].mxu0
      %v777 = vpop.f32.mrb[0].mxu0
      %v778 = vpop.f32.mrb[0].mxu0
      %779 = vdwg.mxu0
      %v783 = vunpack.c.l.b16 %v705
      %v784 = vunpack.c.l.b16 %v706
      %v785 = vunpack.c.l.b16 %v707
      %v786 = vpack.c.b16 %v784, %v783
      %v787 = vpack.c.b16 %v785, %v785
      %v789 = vsel %vm721, %v786, 0
      %v792 = vsel %vm721, %v787, 0
      %v795 = vsel %vm728, %v711, 0
      %797 = vmatprep.subr.bf16.mxu0 0
      %798 = vmatpush1.bf16.msra.mxu0 %v795
      %799 = vmatprep.subr.bf16.mxu0 0
      %800 = vmatpush1.bf16.msra.mxu0 0
      %801 = vmatprep.subr.bf16.mxu0 0
      %802 = vmatpush1.bf16.msra.mxu0 0
      %803 = vmatprep.subr.bf16.mxu0 0
      %804 = vmatpush1.bf16.msra.mxu0 0
      %805 = vmatprep.subr.bf16.mxu0 0
      %806 = vmatpush1.bf16.msra.mxu0 0
      %807 = vmatprep.subr.bf16.mxu0 0
      %808 = vmatpush1.bf16.msra.mxu0 0
      %809 = vmatprep.subr.bf16.mxu0 0
      %810 = vmatpush1.bf16.msra.mxu0 0
      %811 = vmatprep.subr.bf16.mxu0 0
      %812 = vmatpush1.bf16.msra.mxu0 0
      %813 = vmatprep.subr.bf16.mxu0 0
      %814 = vmatpush1.bf16.msra.mxu0 0
      %815 = vmatprep.subr.bf16.mxu0 0
      %816 = vmatpush1.bf16.msra.mxu0 0
      %817 = vmatprep.subr.bf16.mxu0 0
      %818 = vmatpush1.bf16.msra.mxu0 0
      %819 = vmatprep.subr.bf16.mxu0 0
      %820 = vmatpush1.bf16.msra.mxu0 0
      %821 = vmatprep.subr.bf16.mxu0 0
      %822 = vmatpush1.bf16.msra.mxu0 0
      %823 = vmatprep.subr.bf16.mxu0 0
      %824 = vmatpush1.bf16.msra.mxu0 0
      %825 = vmatprep.subr.bf16.mxu0 0
      %826 = vmatpush1.bf16.msra.mxu0 0
      %827 = vmatprep.subr.bf16.mxu0 0
      %828 = vmatpush1.bf16.msra.mxu0 0
      %829 = vmatprep.mubr.bf16.mxu0 0
      %830 = vmatmul.mubr.bf16.gmra.mrb[0].mxu0 %v789
      %v831 = vpop.f32.mrb[0].mxu0
      %v832 = vadd.f32 %v767, %v831
      %v833 = vpop.f32.mrb[0].mxu0
      %v834 = vpop.f32.mrb[0].mxu0
      %v835 = vadd.f32 %v770, %v834
      %v836 = vpop.f32.mrb[0].mxu0
      %837 = vmatprep.mubr.bf16.mxu0 0
      %838 = vmatmul.mubr.bf16.gmra.mrb[0].mxu0 %v792
      %v839 = vpop.f32.mrb[0].mxu0
      %v840 = vadd.f32 %v775, %v839
      %v841 = vpop.f32.mrb[0].mxu0
      %v842 = vpop.f32.mrb[0].mxu0
      %v843 = vpop.f32.mrb[0].mxu0
      %844 = vdwg.mxu0
      %v845 = vld [vmem:[%s8] sm:$0x1]
      %v847 = vlaneseq
      %v848 = vshrl.u32 %v847, 7
      %v849 = vsub.s32 0, %v848
      %v850 = vrot.slane %v845, %v849
      %v852 = vadd.f32 %v832, %v850
      %v853 = vadd.f32 %v835, %v850
      %v854 = vadd.f32 %v840, %v850
      %v855 = vmax.f32 %v852, 0.0
      %v856 = vmax.f32 %v853, 0.0
      %v857 = vmax.f32 %v854, 0.0
      %v858 = vld [vmem:[%s9] sm:$0x1]
      %v860 = vlaneseq
      %v861 = vshrl.u32 %v860, 7
      %v862 = vsub.s32 0, %v861
      %v863 = vrot.slane %v858, %v862
      %v865 = vmul.f32 %v855, %v863
      %v866 = vmul.f32 %v856, %v863
      %v867 = vmul.f32 %v857, %v863
      %vm868 = vcmask 15360
      %v869 = vsel %vm868, %v865, 0.0
      %870 = vadd.xlane.f32.xlu0 %v869
      %v871 = vpop.xlane.xlu0 %870
      %v872 = vsel %vm868, %v866, 0.0
      %873 = vadd.xlane.f32.xlu0 %v872
      %v874 = vpop.xlane.xlu0 %873
      %vm875 = vcmask 9216
      %v876 = vsel %vm875, %v867, 0.0
      %877 = vadd.xlane.f32.xlu0 %v876
      %v878 = vpop.xlane.xlu0 %877
      %v879 = vld [vmem:[#allocation3] sm:$0x1]
      %v881 = vlaneseq
      %v882 = vshrl.u32 %v881, 7
      %v883 = vsub.s32 0, %v882
      %v884 = vrot.slane %v879, %v883
      %v886 = vadd.f32 %v871, %v884
      %v887 = vadd.f32 %v874, %v884
      %v888 = vadd.f32 %v878, %v884
      %v889 = vxor.u32 %v886, 2147483648
      %v890 = vxor.u32 %v887, 2147483648
      %v891 = vxor.u32 %v888, 2147483648
      %v892 = vmul.f32 %v889, 1.442695
      %v893 = vpow.pop %v892
      %v894 = vmul.f32 %v890, 1.442695
      %v895 = vpow.pop %v894
      %v896 = vmul.f32 %v891, 1.442695
      %v897 = vpow.pop %v896
      %v898 = vadd.f32 %v893, 1.0
      %v899 = vadd.f32 %v895, 1.0
      %v900 = vadd.f32 %v897, 1.0
      %v901 = vrcp.pop %v898
      %v902 = vmul.f32 1.0, %v901
      %v903 = vrcp.pop %v899
      %v904 = vmul.f32 1.0, %v903
      %v905 = vrcp.pop %v900
      %v906 = vmul.f32 1.0, %v905
      %v907 = vunpack.c.l.bf16 %v708
      %v908 = vunpack.c.l.bf16 %v709
      %v909 = vunpack.c.l.bf16 %v710
      %911 = vset.pattern.permute.xlu0 0
      %912 = vperm.xlu0 %911, %v902
      %v913 = vpop.permute.xlu0 %912
      %916 = vset.pattern.permute.xlu0 0
      %917 = vperm.xlu0 %916, %v904
      %v918 = vpop.permute.xlu0 %917
      %921 = vset.pattern.permute.xlu0 0
      %922 = vperm.xlu0 %921, %v906
      %v923 = vpop.permute.xlu0 %922
      %v925 = vmul.f32 %v907, %v913
      %v926 = vmul.f32 %v908, %v918
      %v927 = vmul.f32 %v909, %v923
      %v928 = vpack.c.bf16 %v926, %v925
      %v929 = vpack.c.bf16 %v927, %v927
      %v932 = vunpack.c.l.b16 %v928
      %v933 = vunpack.c.h.b16 %v928
      %v934 = vunpack.c.l.b16 %v929
      %v935 = vpack.c.b16 %v932, %v932
      %v936 = vpack.c.b16 %v933, %v933
      %v937 = vpack.c.b16 %v934, %v934
      %vm941 = vcmask 27648
      %942 = vst.msk [vmem:[#allocation2] sm:$0xf] %vm941, %v935
      %943 = vst.msk [vmem:[#allocation2 + $0x4] sm:$0xf] %vm941, %v936
      %vm944 = vcmask 24576
      %945 = vst.msk [vmem:[#allocation2 + $0x8] sm:$0x1] %vm944, %v937
      %v946 = vld [vmem:[#allocation2] sm:$0xf]
      %v947 = vld [vmem:[#allocation2 + $0x4] sm:$0xf]
      %v948 = vld [vmem:[%s11] sm:$0x3]
      %v949 = vld [vmem:[%s641] sm:$0xf]
      %v950 = vld [vmem:[%s641 + $0x4] sm:$0xf]
      %v951 = vld [vmem:[%s12] sm:$0x3]
      %v954 = vunpack.c.l.b16 %v949
      %v955 = vunpack.c.l.b16 %v950
      %v956 = vpack.c.b16 %v955, %v954
      %v958 = vsel %vm721, %v956, 0
      %v961 = vsel %vm728, %v951, 0
      %963 = vmatprep.subr.bf16.mxu0 0
      %964 = vmatpush1.bf16.msra.mxu0 %v961
      %965 = vmatprep.subr.bf16.mxu0 0
      %966 = vmatpush1.bf16.msra.mxu0 0
      %967 = vmatprep.subr.bf16.mxu0 0
      %968 = vmatpush1.bf16.msra.mxu0 0
      %969 = vmatprep.subr.bf16.mxu0 0
      %970 = vmatpush1.bf16.msra.mxu0 0
      %971 = vmatprep.subr.bf16.mxu0 0
      %972 = vmatpush1.bf16.msra.mxu0 0
      %973 = vmatprep.subr.bf16.mxu0 0
      %974 = vmatpush1.bf16.msra.mxu0 0
      %975 = vmatprep.subr.bf16.mxu0 0
      %976 = vmatpush1.bf16.msra.mxu0 0
      %977 = vmatprep.subr.bf16.mxu0 0
      %978 = vmatpush1.bf16.msra.mxu0 0
      %979 = vmatprep.subr.bf16.mxu0 0
      %980 = vmatpush1.bf16.msra.mxu0 0
      %981 = vmatprep.subr.bf16.mxu0 0
      %982 = vmatpush1.bf16.msra.mxu0 0
      %983 = vmatprep.subr.bf16.mxu0 0
      %984 = vmatpush1.bf16.msra.mxu0 0
      %985 = vmatprep.subr.bf16.mxu0 0
      %986 = vmatpush1.bf16.msra.mxu0 0
      %987 = vmatprep.subr.bf16.mxu0 0
      %988 = vmatpush1.bf16.msra.mxu0 0
      %989 = vmatprep.subr.bf16.mxu0 0
      %990 = vmatpush1.bf16.msra.mxu0 0
      %991 = vmatprep.subr.bf16.mxu0 0
      %992 = vmatpush1.bf16.msra.mxu0 0
      %993 = vmatprep.subr.bf16.mxu0 0
      %994 = vmatpush1.bf16.msra.mxu0 0
      %995 = vmatprep.mubr.bf16.mxu0 0
      %996 = vmatmul.mubr.bf16.gmra.mrb[0].mxu0 %v958
      %v997 = vpop.f32.mrb[0].mxu0
      %v998 = vadd.f32 0.0, %v997
      %v999 = vpop.f32.mrb[0].mxu0
      %v1000 = vpop.f32.mrb[0].mxu0
      %v1001 = vadd.f32 0.0, %v1000
      %v1002 = vpop.f32.mrb[0].mxu0
      %1003 = vdwg.mxu0
      %v1006 = vunpack.c.l.b16 %v946
      %v1007 = vunpack.c.l.b16 %v947
      %v1008 = vpack.c.b16 %v1007, %v1006
      %v1010 = vsel %vm721, %v1008, 0
      %v1013 = vsel %vm728, %v948, 0
      %1015 = vmatprep.subr.bf16.mxu0 0
      %1016 = vmatpush1.bf16.msra.mxu0 %v1013
      %1017 = vmatprep.subr.bf16.mxu0 0
      %1018 = vmatpush1.bf16.msra.mxu0 0
      %1019 = vmatprep.subr.bf16.mxu0 0
      %1020 = vmatpush1.bf16.msra.mxu0 0
      %1021 = vmatprep.subr.bf16.mxu0 0
      %1022 = vmatpush1.bf16.msra.mxu0 0
      %1023 = vmatprep.subr.bf16.mxu0 0
      %1024 = vmatpush1.bf16.msra.mxu0 0
      %1025 = vmatprep.subr.bf16.mxu0 0
      %1026 = vmatpush1.bf16.msra.mxu0 0
      %1027 = vmatprep.subr.bf16.mxu0 0
      %1028 = vmatpush1.bf16.msra.mxu0 0
      %1029 = vmatprep.subr.bf16.mxu0 0
      %1030 = vmatpush1.bf16.msra.mxu0 0
      %1031 = vmatprep.subr.bf16.mxu0 0
      %1032 = vmatpush1.bf16.msra.mxu0 0
      %1033 = vmatprep.subr.bf16.mxu0 0
      %1034 = vmatpush1.bf16.msra.mxu0 0
      %1035 = vmatprep.subr.bf16.mxu0 0
      %1036 = vmatpush1.bf16.msra.mxu0 0
      %1037 = vmatprep.subr.bf16.mxu0 0
      %1038 = vmatpush1.bf16.msra.mxu0 0
      %1039 = vmatprep.subr.bf16.mxu0 0
      %1040 = vmatpush1.bf16.msra.mxu0 0
      %1041 = vmatprep.subr.bf16.mxu0 0
      %1042 = vmatpush1.bf16.msra.mxu0 0
      %1043 = vmatprep.subr.bf16.mxu0 0
      %1044 = vmatpush1.bf16.msra.mxu0 0
      %1045 = vmatprep.subr.bf16.mxu0 0
      %1046 = vmatpush1.bf16.msra.mxu0 0
      %1047 = vmatprep.mubr.bf16.mxu0 0
      %1048 = vmatmul.mubr.bf16.gmra.mrb[0].mxu0 %v1010
      %v1049 = vpop.f32.mrb[0].mxu0
      %v1050 = vadd.f32 %v998, %v1049
      %v1051 = vpop.f32.mrb[0].mxu0
      %v1052 = vpop.f32.mrb[0].mxu0
      %v1053 = vadd.f32 %v1001, %v1052
      %v1054 = vpop.f32.mrb[0].mxu0
      %1055 = vdwg.mxu0
      %v1056 = vld [vmem:[#allocation2] sm:$0xf]
      %v1057 = vld [vmem:[#allocation2 + $0x4] sm:$0xf]
      %v1058 = vld [vmem:[#allocation2 + $0x8] sm:$0x1]
      %s1059 = scalar_lea.vmem %s11, 2
      %v1060 = vld [vmem:[%s1059] sm:$0x3]
      %v1064 = vunpack.c.l.b16 %v1056
      %v1065 = vunpack.c.l.b16 %v1057
      %v1066 = vunpack.c.l.b16 %v1058
      %v1067 = vpack.c.b16 %v1065, %v1064
      %v1068 = vpack.c.b16 %v1066, %v1066
      %vm1069 = vsmask.f32 7424
      %v1071 = vshrl.u32 %v1067, 16
      %v1073 = vshll.u32 %v1067, 16
      %v1075 = vrot.slane %v1073, 1
      %v1076 = vor.u32 %v1071, %v1075
      %v1078 = vshll.u32 %v1068, 16
      %v1080 = vrot.slane %v1078, 1
      %v1081 = vsel %vm1069, %v1076, %v1080
      %v1083 = vsel %vm721, %v1081, 0
      %v1086 = vsel %vm728, %v1060, 0
      %1088 = vmatprep.subr.bf16.mxu0 0
      %1089 = vmatpush1.bf16.msra.mxu0 %v1086
      %1090 = vmatprep.subr.bf16.mxu0 0
      %1091 = vmatpush1.bf16.msra.mxu0 0
      %1092 = vmatprep.subr.bf16.mxu0 0
      %1093 = vmatpush1.bf16.msra.mxu0 0
      %1094 = vmatprep.subr.bf16.mxu0 0
      %1095 = vmatpush1.bf16.msra.mxu0 0
      %1096 = vmatprep.subr.bf16.mxu0 0
      %1097 = vmatpush1.bf16.msra.mxu0 0
      %1098 = vmatprep.subr.bf16.mxu0 0
      %1099 = vmatpush1.bf16.msra.mxu0 0
      %1100 = vmatprep.subr.bf16.mxu0 0
      %1101 = vmatpush1.bf16.msra.mxu0 0
      %1102 = vmatprep.subr.bf16.mxu0 0
      %1103 = vmatpush1.bf16.msra.mxu0 0
      %1104 = vmatprep.subr.bf16.mxu0 0
      %1105 = vmatpush1.bf16.msra.mxu0 0
      %1106 = vmatprep.subr.bf16.mxu0 0
      %1107 = vmatpush1.bf16.msra.mxu0 0
      %1108 = vmatprep.subr.bf16.mxu0 0
      %1109 = vmatpush1.bf16.msra.mxu0 0
      %1110 = vmatprep.subr.bf16.mxu0 0
      %1111 = vmatpush1.bf16.msra.mxu0 0
      %1112 = vmatprep.subr.bf16.mxu0 0
      %1113 = vmatpush1.bf16.msra.mxu0 0
      %1114 = vmatprep.subr.bf16.mxu0 0
      %1115 = vmatpush1.bf16.msra.mxu0 0
      %1116 = vmatprep.subr.bf16.mxu0 0
      %1117 = vmatpush1.bf16.msra.mxu0 0
      %1118 = vmatprep.subr.bf16.mxu0 0
      %1119 = vmatpush1.bf16.msra.mxu0 0
      %1120 = vmatprep.mubr.bf16.mxu0 0
      %1121 = vmatmul.mubr.bf16.gmra.mrb[0].mxu0 %v1083
      %v1122 = vpop.f32.mrb[0].mxu0
      %v1123 = vadd.f32 0.0, %v1122
      %v1124 = vpop.f32.mrb[0].mxu0
      %v1125 = vpop.f32.mrb[0].mxu0
      %v1126 = vadd.f32 0.0, %v1125
      %v1127 = vpop.f32.mrb[0].mxu0
      %1128 = vdwg.mxu0
      %v1129 = vadd.f32 %v1050, %v1123
      %v1130 = vadd.f32 %v1053, %v1126
      %v1131 = vld [vmem:[%s641] sm:$0xf]
      %v1132 = vld [vmem:[%s641 + $0x4] sm:$0xf]
      %v1133 = vld [vmem:[%s641 + $0x8] sm:$0x1]
      %s1134 = scalar_lea.vmem %s12, 2
      %v1135 = vld [vmem:[%s1134] sm:$0x3]
      %v1139 = vunpack.c.l.b16 %v1131
      %v1140 = vunpack.c.l.b16 %v1132
      %v1141 = vunpack.c.l.b16 %v1133
      %v1142 = vpack.c.b16 %v1140, %v1139
      %v1143 = vpack.c.b16 %v1141, %v1141
      %v1145 = vshrl.u32 %v1142, 16
      %v1147 = vshll.u32 %v1142, 16
      %v1149 = vrot.slane %v1147, 1
      %v1150 = vor.u32 %v1145, %v1149
      %v1152 = vshll.u32 %v1143, 16
      %v1154 = vrot.slane %v1152, 1
      %v1155 = vsel %vm1069, %v1150, %v1154
      %v1157 = vsel %vm721, %v1155, 0
      %v1160 = vsel %vm728, %v1135, 0
      %1162 = vmatprep.subr.bf16.mxu0 0
      %1163 = vmatpush1.bf16.msra.mxu0 %v1160
      %1164 = vmatprep.subr.bf16.mxu0 0
      %1165 = vmatpush1.bf16.msra.mxu0 0
      %1166 = vmatprep.subr.bf16.mxu0 0
      %1167 = vmatpush1.bf16.msra.mxu0 0
      %1168 = vmatprep.subr.bf16.mxu0 0
      %1169 = vmatpush1.bf16.msra.mxu0 0
      %1170 = vmatprep.subr.bf16.mxu0 0
      %1171 = vmatpush1.bf16.msra.mxu0 0
      %1172 = vmatprep.subr.bf16.mxu0 0
      %1173 = vmatpush1.bf16.msra.mxu0 0
      %1174 = vmatprep.subr.bf16.mxu0 0
      %1175 = vmatpush1.bf16.msra.mxu0 0
      %1176 = vmatprep.subr.bf16.mxu0 0
      %1177 = vmatpush1.bf16.msra.mxu0 0
      %1178 = vmatprep.subr.bf16.mxu0 0
      %1179 = vmatpush1.bf16.msra.mxu0 0
      %1180 = vmatprep.subr.bf16.mxu0 0
      %1181 = vmatpush1.bf16.msra.mxu0 0
      %1182 = vmatprep.subr.bf16.mxu0 0
      %1183 = vmatpush1.bf16.msra.mxu0 0
      %1184 = vmatprep.subr.bf16.mxu0 0
      %1185 = vmatpush1.bf16.msra.mxu0 0
      %1186 = vmatprep.subr.bf16.mxu0 0
      %1187 = vmatpush1.bf16.msra.mxu0 0
      %1188 = vmatprep.subr.bf16.mxu0 0
      %1189 = vmatpush1.bf16.msra.mxu0 0
      %1190 = vmatprep.subr.bf16.mxu0 0
      %1191 = vmatpush1.bf16.msra.mxu0 0
      %1192 = vmatprep.subr.bf16.mxu0 0
      %1193 = vmatpush1.bf16.msra.mxu0 0
      %1194 = vmatprep.mubr.bf16.mxu0 0
      %1195 = vmatmul.mubr.bf16.gmra.mrb[0].mxu0 %v1157
      %v1196 = vpop.f32.mrb[0].mxu0
      %v1197 = vadd.f32 0.0, %v1196
      %v1198 = vpop.f32.mrb[0].mxu0
      %v1199 = vpop.f32.mrb[0].mxu0
      %v1200 = vadd.f32 0.0, %v1199
      %v1201 = vpop.f32.mrb[0].mxu0
      %1202 = vdwg.mxu0
      %v1203 = vadd.f32 %v1129, %v1197
      %v1204 = vadd.f32 %v1130, %v1200
      %v1205 = vld [vmem:[#allocation2] sm:$0xe]
      %s1206 = scalar_lea.vmem %s11, 4
      %v1207 = vld [vmem:[%s1206] sm:$0x3]
      %v1209 = vunpack.c.l.b16 %v1205
      %v1210 = vpack.c.b16 %v1065, %v1209
      %vm1211 = vcmask 1046528
      %v1212 = vrot.slane %v1210, 1
      %v1213 = vrot.slane %v1068, 1
      %v1214 = vsel %vm1211, %v1212, %v1213
      %v1216 = vsel %vm721, %v1214, 0
      %v1219 = vsel %vm728, %v1207, 0
      %1221 = vmatprep.subr.bf16.mxu0 0
      %1222 = vmatpush1.bf16.msra.mxu0 %v1219
      %1223 = vmatprep.subr.bf16.mxu0 0
      %1224 = vmatpush1.bf16.msra.mxu0 0
      %1225 = vmatprep.subr.bf16.mxu0 0
      %1226 = vmatpush1.bf16.msra.mxu0 0
      %1227 = vmatprep.subr.bf16.mxu0 0
      %1228 = vmatpush1.bf16.msra.mxu0 0
      %1229 = vmatprep.subr.bf16.mxu0 0
      %1230 = vmatpush1.bf16.msra.mxu0 0
      %1231 = vmatprep.subr.bf16.mxu0 0
      %1232 = vmatpush1.bf16.msra.mxu0 0
      %1233 = vmatprep.subr.bf16.mxu0 0
      %1234 = vmatpush1.bf16.msra.mxu0 0
      %1235 = vmatprep.subr.bf16.mxu0 0
      %1236 = vmatpush1.bf16.msra.mxu0 0
      %1237 = vmatprep.subr.bf16.mxu0 0
      %1238 = vmatpush1.bf16.msra.mxu0 0
      %1239 = vmatprep.subr.bf16.mxu0 0
      %1240 = vmatpush1.bf16.msra.mxu0 0
      %1241 = vmatprep.subr.bf16.mxu0 0
      %1242 = vmatpush1.bf16.msra.mxu0 0
      %1243 = vmatprep.subr.bf16.mxu0 0
      %1244 = vmatpush1.bf16.msra.mxu0 0
      %1245 = vmatprep.subr.bf16.mxu0 0
      %1246 = vmatpush1.bf16.msra.mxu0 0
      %1247 = vmatprep.subr.bf16.mxu0 0
      %1248 = vmatpush1.bf16.msra.mxu0 0
      %1249 = vmatprep.subr.bf16.mxu0 0
      %1250 = vmatpush1.bf16.msra.mxu0 0
      %1251 = vmatprep.subr.bf16.mxu0 0
      %1252 = vmatpush1.bf16.msra.mxu0 0
      %1253 = vmatprep.mubr.bf16.mxu0 0
      %1254 = vmatmul.mubr.bf16.gmra.mrb[0].mxu0 %v1216
      %v1255 = vpop.f32.mrb[0].mxu0
      %v1256 = vadd.f32 0.0, %v1255
      %v1257 = vpop.f32.mrb[0].mxu0
      %v1258 = vpop.f32.mrb[0].mxu0
      %v1259 = vadd.f32 0.0, %v1258
      %v1260 = vpop.f32.mrb[0].mxu0
      %1261 = vdwg.mxu0
      %v1262 = vadd.f32 %v1203, %v1256
      %v1263 = vadd.f32 %v1204, %v1259
      %v1264 = vld [vmem:[%s641] sm:$0xe]
      %s1265 = scalar_lea.vmem %s12, 4
      %v1266 = vld [vmem:[%s1265] sm:$0x3]
      %v1268 = vunpack.c.l.b16 %v1264
      %v1269 = vpack.c.b16 %v1140, %v1268
      %v1270 = vrot.slane %v1269, 1
      %v1271 = vrot.slane %v1143, 1
      %v1272 = vsel %vm1211, %v1270, %v1271
      %v1274 = vsel %vm721, %v1272, 0
      %v1277 = vsel %vm728, %v1266, 0
      %1279 = vmatprep.subr.bf16.mxu0 0
      %1280 = vmatpush1.bf16.msra.mxu0 %v1277
      %1281 = vmatprep.subr.bf16.mxu0 0
      %1282 = vmatpush1.bf16.msra.mxu0 0
      %1283 = vmatprep.subr.bf16.mxu0 0
      %1284 = vmatpush1.bf16.msra.mxu0 0
      %1285 = vmatprep.subr.bf16.mxu0 0
      %1286 = vmatpush1.bf16.msra.mxu0 0
      %1287 = vmatprep.subr.bf16.mxu0 0
      %1288 = vmatpush1.bf16.msra.mxu0 0
      %1289 = vmatprep.subr.bf16.mxu0 0
      %1290 = vmatpush1.bf16.msra.mxu0 0
      %1291 = vmatprep.subr.bf16.mxu0 0
      %1292 = vmatpush1.bf16.msra.mxu0 0
      %1293 = vmatprep.subr.bf16.mxu0 0
      %1294 = vmatpush1.bf16.msra.mxu0 0
      %1295 = vmatprep.subr.bf16.mxu0 0
      %1296 = vmatpush1.bf16.msra.mxu0 0
      %1297 = vmatprep.subr.bf16.mxu0 0
      %1298 = vmatpush1.bf16.msra.mxu0 0
      %1299 = vmatprep.subr.bf16.mxu0 0
      %1300 = vmatpush1.bf16.msra.mxu0 0
      %1301 = vmatprep.subr.bf16.mxu0 0
      %1302 = vmatpush1.bf16.msra.mxu0 0
      %1303 = vmatprep.subr.bf16.mxu0 0
      %1304 = vmatpush1.bf16.msra.mxu0 0
      %1305 = vmatprep.subr.bf16.mxu0 0
      %1306 = vmatpush1.bf16.msra.mxu0 0
      %1307 = vmatprep.subr.bf16.mxu0 0
      %1308 = vmatpush1.bf16.msra.mxu0 0
      %1309 = vmatprep.subr.bf16.mxu0 0
      %1310 = vmatpush1.bf16.msra.mxu0 0
      %1311 = vmatprep.mubr.bf16.mxu0 0
      %1312 = vmatmul.mubr.bf16.gmra.mrb[0].mxu0 %v1274
      %v1313 = vpop.f32.mrb[0].mxu0
      %v1314 = vadd.f32 0.0, %v1313
      %v1315 = vpop.f32.mrb[0].mxu0
      %v1316 = vpop.f32.mrb[0].mxu0
      %v1317 = vadd.f32 0.0, %v1316
      %v1318 = vpop.f32.mrb[0].mxu0
      %1319 = vdwg.mxu0
      %v1320 = vadd.f32 %v1262, %v1314
      %v1321 = vadd.f32 %v1263, %v1317
      %v1322 = vld [vmem:[%s651] sm:$0xf]
      %v1323 = vld [vmem:[%s651 + $0x4] sm:$0xf]
      %v1324 = vld [vmem:[%s651 + $0x8] sm:$0x1]
      %v1325 = vld [vmem:[%s682] sm:$0xf]
      %v1326 = vld [vmem:[%s682 + $0x4] sm:$0xf]
      %v1327 = vld [vmem:[%s682 + $0x8] sm:$0x1]
      %v1328 = vld [vmem:[%s6] sm:$0x3]
      %v1329 = vld [vmem:[%s7] sm:$0x3]
      %v1333 = vunpack.c.l.b16 %v1325
      %v1334 = vunpack.c.l.b16 %v1326
      %v1335 = vunpack.c.l.b16 %v1327
      %v1336 = vpack.c.b16 %v1334, %v1333
      %v1337 = vpack.c.b16 %v1335, %v1335
      %v1339 = vsel %vm721, %v1336, 0
      %v1342 = vsel %vm721, %v1337, 0
      %v1345 = vsel %vm728, %v1329, 0
      %1347 = vmatprep.subr.bf16.mxu0 0
      %1348 = vmatpush1.bf16.msra.mxu0 %v1345
      %1349 = vmatprep.subr.bf16.mxu0 0
      %1350 = vmatpush1.bf16.msra.mxu0 0
      %1351 = vmatprep.subr.bf16.mxu0 0
      %1352 = vmatpush1.bf16.msra.mxu0 0
      %1353 = vmatprep.subr.bf16.mxu0 0
      %1354 = vmatpush1.bf16.msra.mxu0 0
      %1355 = vmatprep.subr.bf16.mxu0 0
      %1356 = vmatpush1.bf16.msra.mxu0 0
      %1357 = vmatprep.subr.bf16.mxu0 0
      %1358 = vmatpush1.bf16.msra.mxu0 0
      %1359 = vmatprep.subr.bf16.mxu0 0
      %1360 = vmatpush1.bf16.msra.mxu0 0
      %1361 = vmatprep.subr.bf16.mxu0 0
      %1362 = vmatpush1.bf16.msra.mxu0 0
      %1363 = vmatprep.subr.bf16.mxu0 0
      %1364 = vmatpush1.bf16.msra.mxu0 0
      %1365 = vmatprep.subr.bf16.mxu0 0
      %1366 = vmatpush1.bf16.msra.mxu0 0
      %1367 = vmatprep.subr.bf16.mxu0 0
      %1368 = vmatpush1.bf16.msra.mxu0 0
      %1369 = vmatprep.subr.bf16.mxu0 0
      %1370 = vmatpush1.bf16.msra.mxu0 0
      %1371 = vmatprep.subr.bf16.mxu0 0
      %1372 = vmatpush1.bf16.msra.mxu0 0
      %1373 = vmatprep.subr.bf16.mxu0 0
      %1374 = vmatpush1.bf16.msra.mxu0 0
      %1375 = vmatprep.subr.bf16.mxu0 0
      %1376 = vmatpush1.bf16.msra.mxu0 0
      %1377 = vmatprep.subr.bf16.mxu0 0
      %1378 = vmatpush1.bf16.msra.mxu0 0
      %1379 = vmatprep.mubr.bf16.mxu0 0
      %1380 = vmatmul.mubr.bf16.gmra.mrb[0].mxu0 %v1339
      %v1381 = vpop.f32.mrb[0].mxu0
      %v1382 = vadd.f32 0.0, %v1381
      %v1383 = vpop.f32.mrb[0].mxu0
      %v1384 = vpop.f32.mrb[0].mxu0
      %v1385 = vadd.f32 0.0, %v1384
      %v1386 = vpop.f32.mrb[0].mxu0
      %1387 = vmatprep.mubr.bf16.mxu0 0
      %1388 = vmatmul.mubr.bf16.gmra.mrb[0].mxu0 %v1342
      %v1389 = vpop.f32.mrb[0].mxu0
      %v1390 = vadd.f32 0.0, %v1389
      %v1391 = vpop.f32.mrb[0].mxu0
      %v1392 = vpop.f32.mrb[0].mxu0
      %v1393 = vpop.f32.mrb[0].mxu0
      %1394 = vdwg.mxu0
      %v1398 = vunpack.c.l.b16 %v1322
      %v1399 = vunpack.c.l.b16 %v1323
      %v1400 = vunpack.c.l.b16 %v1324
      %v1401 = vpack.c.b16 %v1399, %v1398
      %v1402 = vpack.c.b16 %v1400, %v1400
      %v1404 = vsel %vm721, %v1401, 0
      %v1407 = vsel %vm721, %v1402, 0
      %v1410 = vsel %vm728, %v1328, 0
      %1412 = vmatprep.subr.bf16.mxu0 0
      %1413 = vmatpush1.bf16.msra.mxu0 %v1410
      %1414 = vmatprep.subr.bf16.mxu0 0
      %1415 = vmatpush1.bf16.msra.mxu0 0
      %1416 = vmatprep.subr.bf16.mxu0 0
      %1417 = vmatpush1.bf16.msra.mxu0 0
      %1418 = vmatprep.subr.bf16.mxu0 0
      %1419 = vmatpush1.bf16.msra.mxu0 0
      %1420 = vmatprep.subr.bf16.mxu0 0
      %1421 = vmatpush1.bf16.msra.mxu0 0
      %1422 = vmatprep.subr.bf16.mxu0 0
      %1423 = vmatpush1.bf16.msra.mxu0 0
      %1424 = vmatprep.subr.bf16.mxu0 0
      %1425 = vmatpush1.bf16.msra.mxu0 0
      %1426 = vmatprep.subr.bf16.mxu0 0
      %1427 = vmatpush1.bf16.msra.mxu0 0
      %1428 = vmatprep.subr.bf16.mxu0 0
      %1429 = vmatpush1.bf16.msra.mxu0 0
      %1430 = vmatprep.subr.bf16.mxu0 0
      %1431 = vmatpush1.bf16.msra.mxu0 0
      %1432 = vmatprep.subr.bf16.mxu0 0
      %1433 = vmatpush1.bf16.msra.mxu0 0
      %1434 = vmatprep.subr.bf16.mxu0 0
      %1435 = vmatpush1.bf16.msra.mxu0 0
      %1436 = vmatprep.subr.bf16.mxu0 0
      %1437 = vmatpush1.bf16.msra.mxu0 0
      %1438 = vmatprep.subr.bf16.mxu0 0
      %1439 = vmatpush1.bf16.msra.mxu0 0
      %1440 = vmatprep.subr.bf16.mxu0 0
      %1441 = vmatpush1.bf16.msra.mxu0 0
      %1442 = vmatprep.subr.bf16.mxu0 0
      %1443 = vmatpush1.bf16.msra.mxu0 0
      %1444 = vmatprep.mubr.bf16.mxu0 0
      %1445 = vmatmul.mubr.bf16.gmra.mrb[0].mxu0 %v1404
      %v1446 = vpop.f32.mrb[0].mxu0
      %v1447 = vadd.f32 %v1382, %v1446
      %v1448 = vpop.f32.mrb[0].mxu0
      %v1449 = vpop.f32.mrb[0].mxu0
      %v1450 = vadd.f32 %v1385, %v1449
      %v1451 = vpop.f32.mrb[0].mxu0
      %1452 = vmatprep.mubr.bf16.mxu0 0
      %1453 = vmatmul.mubr.bf16.gmra.mrb[0].mxu0 %v1407
      %v1454 = vpop.f32.mrb[0].mxu0
      %v1455 = vadd.f32 %v1390, %v1454
      %v1456 = vpop.f32.mrb[0].mxu0
      %v1457 = vpop.f32.mrb[0].mxu0
      %v1458 = vpop.f32.mrb[0].mxu0
      %1459 = vdwg.mxu0
      %v1460 = vld [vmem:[%s8] sm:$0x1]
      %v1462 = vlaneseq
      %v1463 = vshrl.u32 %v1462, 7
      %v1464 = vsub.s32 0, %v1463
      %v1465 = vrot.slane %v1460, %v1464
      %v1467 = vadd.f32 %v1447, %v1465
      %v1468 = vadd.f32 %v1450, %v1465
      %v1469 = vadd.f32 %v1455, %v1465
      %v1470 = vmax.f32 %v1467, 0.0
      %v1471 = vmax.f32 %v1468, 0.0
      %v1472 = vmax.f32 %v1469, 0.0
      %v1473 = vld [vmem:[%s9] sm:$0x1]
      %v1475 = vlaneseq
      %v1476 = vshrl.u32 %v1475, 7
      %v1477 = vsub.s32 0, %v1476
      %v1478 = vrot.slane %v1473, %v1477
      %v1480 = vmul.f32 %v1470, %v1478
      %v1481 = vmul.f32 %v1471, %v1478
      %v1482 = vmul.f32 %v1472, %v1478
      %v1483 = vsel %vm868, %v1480, 0.0
      %1484 = vadd.xlane.f32.xlu0 %v1483
      %v1485 = vpop.xlane.xlu0 %1484
      %v1486 = vsel %vm868, %v1481, 0.0
      %1487 = vadd.xlane.f32.xlu0 %v1486
      %v1488 = vpop.xlane.xlu0 %1487
      %v1489 = vsel %vm875, %v1482, 0.0
      %1490 = vadd.xlane.f32.xlu0 %v1489
      %v1491 = vpop.xlane.xlu0 %1490
      %v1492 = vld [vmem:[#allocation3] sm:$0x1]
      %v1494 = vlaneseq
      %v1495 = vshrl.u32 %v1494, 7
      %v1496 = vsub.s32 0, %v1495
      %v1497 = vrot.slane %v1492, %v1496
      %v1499 = vadd.f32 %v1485, %v1497
      %v1500 = vadd.f32 %v1488, %v1497
      %v1501 = vadd.f32 %v1491, %v1497
      %v1502 = vxor.u32 %v1499, 2147483648
      %v1503 = vxor.u32 %v1500, 2147483648
      %v1504 = vxor.u32 %v1501, 2147483648
      %v1505 = vmul.f32 %v1502, 1.442695
      %v1506 = vpow.pop %v1505
      %v1507 = vmul.f32 %v1503, 1.442695
      %v1508 = vpow.pop %v1507
      %v1509 = vmul.f32 %v1504, 1.442695
      %v1510 = vpow.pop %v1509
      %v1511 = vadd.f32 %v1506, 1.0
      %v1512 = vadd.f32 %v1508, 1.0
      %v1513 = vadd.f32 %v1510, 1.0
      %v1514 = vrcp.pop %v1511
      %v1515 = vmul.f32 1.0, %v1514
      %v1516 = vrcp.pop %v1512
      %v1517 = vmul.f32 1.0, %v1516
      %v1518 = vrcp.pop %v1513
      %v1519 = vmul.f32 1.0, %v1518
      %v1520 = vunpack.c.l.bf16 %v1325
      %v1521 = vunpack.c.l.bf16 %v1326
      %v1522 = vunpack.c.l.bf16 %v1327
      %1524 = vset.pattern.permute.xlu0 0
      %1525 = vperm.xlu0 %1524, %v1515
      %v1526 = vpop.permute.xlu0 %1525
      %1529 = vset.pattern.permute.xlu0 0
      %1530 = vperm.xlu0 %1529, %v1517
      %v1531 = vpop.permute.xlu0 %1530
      %1534 = vset.pattern.permute.xlu0 0
      %1535 = vperm.xlu0 %1534, %v1519
      %v1536 = vpop.permute.xlu0 %1535
      %v1538 = vmul.f32 %v1520, %v1526
      %v1539 = vmul.f32 %v1521, %v1531
      %v1540 = vmul.f32 %v1522, %v1536
      %v1541 = vpack.c.bf16 %v1539, %v1538
      %v1542 = vpack.c.bf16 %v1540, %v1540
      %v1545 = vunpack.c.l.b16 %v1541
      %v1546 = vunpack.c.h.b16 %v1541
      %v1547 = vunpack.c.l.b16 %v1542
      %v1548 = vpack.c.b16 %v1545, %v1545
      %v1549 = vpack.c.b16 %v1546, %v1546
      %v1550 = vpack.c.b16 %v1547, %v1547
      %1554 = vst.msk [vmem:[#allocation2] sm:$0xf] %vm941, %v1548
      %1555 = vst.msk [vmem:[#allocation2 + $0x4] sm:$0xf] %vm941, %v1549
      %1556 = vst.msk [vmem:[#allocation2 + $0x8] sm:$0x1] %vm944, %v1550
      %v1557 = vld [vmem:[#allocation2] sm:$0xf]
      %v1558 = vld [vmem:[#allocation2 + $0x4] sm:$0xf]
      %s1559 = scalar_lea.vmem %s11, 6
      %v1560 = vld [vmem:[%s1559] sm:$0x3]
      %v1563 = vunpack.c.l.b16 %v1557
      %v1564 = vunpack.c.l.b16 %v1558
      %v1565 = vpack.c.b16 %v1564, %v1563
      %v1567 = vsel %vm721, %v1565, 0
      %v1570 = vsel %vm728, %v1560, 0
      %1572 = vmatprep.subr.bf16.mxu0 0
      %1573 = vmatpush1.bf16.msra.mxu0 %v1570
      %1574 = vmatprep.subr.bf16.mxu0 0
      %1575 = vmatpush1.bf16.msra.mxu0 0
      %1576 = vmatprep.subr.bf16.mxu0 0
      %1577 = vmatpush1.bf16.msra.mxu0 0
      %1578 = vmatprep.subr.bf16.mxu0 0
      %1579 = vmatpush1.bf16.msra.mxu0 0
      %1580 = vmatprep.subr.bf16.mxu0 0
      %1581 = vmatpush1.bf16.msra.mxu0 0
      %1582 = vmatprep.subr.bf16.mxu0 0
      %1583 = vmatpush1.bf16.msra.mxu0 0
      %1584 = vmatprep.subr.bf16.mxu0 0
      %1585 = vmatpush1.bf16.msra.mxu0 0
      %1586 = vmatprep.subr.bf16.mxu0 0
      %1587 = vmatpush1.bf16.msra.mxu0 0
      %1588 = vmatprep.subr.bf16.mxu0 0
      %1589 = vmatpush1.bf16.msra.mxu0 0
      %1590 = vmatprep.subr.bf16.mxu0 0
      %1591 = vmatpush1.bf16.msra.mxu0 0
      %1592 = vmatprep.subr.bf16.mxu0 0
      %1593 = vmatpush1.bf16.msra.mxu0 0
      %1594 = vmatprep.subr.bf16.mxu0 0
      %1595 = vmatpush1.bf16.msra.mxu0 0
      %1596 = vmatprep.subr.bf16.mxu0 0
      %1597 = vmatpush1.bf16.msra.mxu0 0
      %1598 = vmatprep.subr.bf16.mxu0 0
      %1599 = vmatpush1.bf16.msra.mxu0 0
      %1600 = vmatprep.subr.bf16.mxu0 0
      %1601 = vmatpush1.bf16.msra.mxu0 0
      %1602 = vmatprep.subr.bf16.mxu0 0
      %1603 = vmatpush1.bf16.msra.mxu0 0
      %1604 = vmatprep.mubr.bf16.mxu0 0
      %1605 = vmatmul.mubr.bf16.gmra.mrb[0].mxu0 %v1567
      %v1606 = vpop.f32.mrb[0].mxu0
      %v1607 = vadd.f32 0.0, %v1606
      %v1608 = vpop.f32.mrb[0].mxu0
      %v1609 = vpop.f32.mrb[0].mxu0
      %v1610 = vadd.f32 0.0, %v1609
      %v1611 = vpop.f32.mrb[0].mxu0
      %1612 = vdwg.mxu0
      %v1613 = vadd.f32 %v1320, %v1607
      %v1614 = vadd.f32 %v1321, %v1610
      %v1615 = vld [vmem:[%s651] sm:$0xf]
      %v1616 = vld [vmem:[%s651 + $0x4] sm:$0xf]
      %s1617 = scalar_lea.vmem %s12, 6
      %v1618 = vld [vmem:[%s1617] sm:$0x3]
      %v1621 = vunpack.c.l.b16 %v1615
      %v1622 = vunpack.c.l.b16 %v1616
      %v1623 = vpack.c.b16 %v1622, %v1621
      %v1625 = vsel %vm721, %v1623, 0
      %v1628 = vsel %vm728, %v1618, 0
      %1630 = vmatprep.subr.bf16.mxu0 0
      %1631 = vmatpush1.bf16.msra.mxu0 %v1628
      %1632 = vmatprep.subr.bf16.mxu0 0
      %1633 = vmatpush1.bf16.msra.mxu0 0
      %1634 = vmatprep.subr.bf16.mxu0 0
      %1635 = vmatpush1.bf16.msra.mxu0 0
      %1636 = vmatprep.subr.bf16.mxu0 0
      %1637 = vmatpush1.bf16.msra.mxu0 0
      %1638 = vmatprep.subr.bf16.mxu0 0
      %1639 = vmatpush1.bf16.msra.mxu0 0
      %1640 = vmatprep.subr.bf16.mxu0 0
      %1641 = vmatpush1.bf16.msra.mxu0 0
      %1642 = vmatprep.subr.bf16.mxu0 0
      %1643 = vmatpush1.bf16.msra.mxu0 0
      %1644 = vmatprep.subr.bf16.mxu0 0
      %1645 = vmatpush1.bf16.msra.mxu0 0
      %1646 = vmatprep.subr.bf16.mxu0 0
      %1647 = vmatpush1.bf16.msra.mxu0 0
      %1648 = vmatprep.subr.bf16.mxu0 0
      %1649 = vmatpush1.bf16.msra.mxu0 0
      %1650 = vmatprep.subr.bf16.mxu0 0
      %1651 = vmatpush1.bf16.msra.mxu0 0
      %1652 = vmatprep.subr.bf16.mxu0 0
      %1653 = vmatpush1.bf16.msra.mxu0 0
      %1654 = vmatprep.subr.bf16.mxu0 0
      %1655 = vmatpush1.bf16.msra.mxu0 0
      %1656 = vmatprep.subr.bf16.mxu0 0
      %1657 = vmatpush1.bf16.msra.mxu0 0
      %1658 = vmatprep.subr.bf16.mxu0 0
      %1659 = vmatpush1.bf16.msra.mxu0 0
      %1660 = vmatprep.subr.bf16.mxu0 0
      %1661 = vmatpush1.bf16.msra.mxu0 0
      %1662 = vmatprep.mubr.bf16.mxu0 0
      %1663 = vmatmul.mubr.bf16.gmra.mrb[0].mxu0 %v1625
      %v1664 = vpop.f32.mrb[0].mxu0
      %v1665 = vadd.f32 0.0, %v1664
      %v1666 = vpop.f32.mrb[0].mxu0
      %v1667 = vpop.f32.mrb[0].mxu0
      %v1668 = vadd.f32 0.0, %v1667
      %v1669 = vpop.f32.mrb[0].mxu0
      %1670 = vdwg.mxu0
      %v1671 = vadd.f32 %v1613, %v1665
      %v1672 = vadd.f32 %v1614, %v1668
      %v1673 = vld [vmem:[#allocation2] sm:$0xf]
      %v1674 = vld [vmem:[#allocation2 + $0x4] sm:$0xf]
      %v1675 = vld [vmem:[#allocation2 + $0x8] sm:$0x1]
      %s1676 = scalar_lea.vmem %s11, 8
      %v1677 = vld [vmem:[%s1676] sm:$0x3]
      %v1681 = vunpack.c.l.b16 %v1673
      %v1682 = vunpack.c.l.b16 %v1674
      %v1683 = vunpack.c.l.b16 %v1675
      %v1684 = vpack.c.b16 %v1682, %v1681
      %v1685 = vpack.c.b16 %v1683, %v1683
      %v1687 = vshrl.u32 %v1684, 16
      %v1689 = vshll.u32 %v1684, 16
      %v1691 = vrot.slane %v1689, 1
      %v1692 = vor.u32 %v1687, %v1691
      %v1694 = vshll.u32 %v1685, 16
      %v1696 = vrot.slane %v1694, 1
      %v1697 = vsel %vm1069, %v1692, %v1696
      %v1699 = vsel %vm721, %v1697, 0
      %v1702 = vsel %vm728, %v1677, 0
      %1704 = vmatprep.subr.bf16.mxu0 0
      %1705 = vmatpush1.bf16.msra.mxu0 %v1702
      %1706 = vmatprep.subr.bf16.mxu0 0
      %1707 = vmatpush1.bf16.msra.mxu0 0
      %1708 = vmatprep.subr.bf16.mxu0 0
      %1709 = vmatpush1.bf16.msra.mxu0 0
      %1710 = vmatprep.subr.bf16.mxu0 0
      %1711 = vmatpush1.bf16.msra.mxu0 0
      %1712 = vmatprep.subr.bf16.mxu0 0
      %1713 = vmatpush1.bf16.msra.mxu0 0
      %1714 = vmatprep.subr.bf16.mxu0 0
      %1715 = vmatpush1.bf16.msra.mxu0 0
      %1716 = vmatprep.subr.bf16.mxu0 0
      %1717 = vmatpush1.bf16.msra.mxu0 0
      %1718 = vmatprep.subr.bf16.mxu0 0
      %1719 = vmatpush1.bf16.msra.mxu0 0
      %1720 = vmatprep.subr.bf16.mxu0 0
      %1721 = vmatpush1.bf16.msra.mxu0 0
      %1722 = vmatprep.subr.bf16.mxu0 0
      %1723 = vmatpush1.bf16.msra.mxu0 0
      %1724 = vmatprep.subr.bf16.mxu0 0
      %1725 = vmatpush1.bf16.msra.mxu0 0
      %1726 = vmatprep.subr.bf16.mxu0 0
      %1727 = vmatpush1.bf16.msra.mxu0 0
      %1728 = vmatprep.subr.bf16.mxu0 0
      %1729 = vmatpush1.bf16.msra.mxu0 0
      %1730 = vmatprep.subr.bf16.mxu0 0
      %1731 = vmatpush1.bf16.msra.mxu0 0
      %1732 = vmatprep.subr.bf16.mxu0 0
      %1733 = vmatpush1.bf16.msra.mxu0 0
      %1734 = vmatprep.subr.bf16.mxu0 0
      %1735 = vmatpush1.bf16.msra.mxu0 0
      %1736 = vmatprep.mubr.bf16.mxu0 0
      %1737 = vmatmul.mubr.bf16.gmra.mrb[0].mxu0 %v1699
      %v1738 = vpop.f32.mrb[0].mxu0
      %v1739 = vadd.f32 0.0, %v1738
      %v1740 = vpop.f32.mrb[0].mxu0
      %v1741 = vpop.f32.mrb[0].mxu0
      %v1742 = vadd.f32 0.0, %v1741
      %v1743 = vpop.f32.mrb[0].mxu0
      %1744 = vdwg.mxu0
      %v1745 = vadd.f32 %v1671, %v1739
      %v1746 = vadd.f32 %v1672, %v1742
      %v1747 = vld [vmem:[%s651] sm:$0xf]
      %v1748 = vld [vmem:[%s651 + $0x4] sm:$0xf]
      %v1749 = vld [vmem:[%s651 + $0x8] sm:$0x1]
      %s1750 = scalar_lea.vmem %s12, 8
      %v1751 = vld [vmem:[%s1750] sm:$0x3]
      %v1755 = vunpack.c.l.b16 %v1747
      %v1756 = vunpack.c.l.b16 %v1748
      %v1757 = vunpack.c.l.b16 %v1749
      %v1758 = vpack.c.b16 %v1756, %v1755
      %v1759 = vpack.c.b16 %v1757, %v1757
      %v1761 = vshrl.u32 %v1758, 16
      %v1763 = vshll.u32 %v1758, 16
      %v1765 = vrot.slane %v1763, 1
      %v1766 = vor.u32 %v1761, %v1765
      %v1768 = vshll.u32 %v1759, 16
      %v1770 = vrot.slane %v1768, 1
      %v1771 = vsel %vm1069, %v1766, %v1770
      %v1773 = vsel %vm721, %v1771, 0
      %v1776 = vsel %vm728, %v1751, 0
      %1778 = vmatprep.subr.bf16.mxu0 0
      %1779 = vmatpush1.bf16.msra.mxu0 %v1776
      %1780 = vmatprep.subr.bf16.mxu0 0
      %1781 = vmatpush1.bf16.msra.mxu0 0
      %1782 = vmatprep.subr.bf16.mxu0 0
      %1783 = vmatpush1.bf16.msra.mxu0 0
      %1784 = vmatprep.subr.bf16.mxu0 0
      %1785 = vmatpush1.bf16.msra.mxu0 0
      %1786 = vmatprep.subr.bf16.mxu0 0
      %1787 = vmatpush1.bf16.msra.mxu0 0
      %1788 = vmatprep.subr.bf16.mxu0 0
      %1789 = vmatpush1.bf16.msra.mxu0 0
      %1790 = vmatprep.subr.bf16.mxu0 0
      %1791 = vmatpush1.bf16.msra.mxu0 0
      %1792 = vmatprep.subr.bf16.mxu0 0
      %1793 = vmatpush1.bf16.msra.mxu0 0
      %1794 = vmatprep.subr.bf16.mxu0 0
      %1795 = vmatpush1.bf16.msra.mxu0 0
      %1796 = vmatprep.subr.bf16.mxu0 0
      %1797 = vmatpush1.bf16.msra.mxu0 0
      %1798 = vmatprep.subr.bf16.mxu0 0
      %1799 = vmatpush1.bf16.msra.mxu0 0
      %1800 = vmatprep.subr.bf16.mxu0 0
      %1801 = vmatpush1.bf16.msra.mxu0 0
      %1802 = vmatprep.subr.bf16.mxu0 0
      %1803 = vmatpush1.bf16.msra.mxu0 0
      %1804 = vmatprep.subr.bf16.mxu0 0
      %1805 = vmatpush1.bf16.msra.mxu0 0
      %1806 = vmatprep.subr.bf16.mxu0 0
      %1807 = vmatpush1.bf16.msra.mxu0 0
      %1808 = vmatprep.subr.bf16.mxu0 0
      %1809 = vmatpush1.bf16.msra.mxu0 0
      %1810 = vmatprep.mubr.bf16.mxu0 0
      %1811 = vmatmul.mubr.bf16.gmra.mrb[0].mxu0 %v1773
      %v1812 = vpop.f32.mrb[0].mxu0
      %v1813 = vadd.f32 0.0, %v1812
      %v1814 = vpop.f32.mrb[0].mxu0
      %v1815 = vpop.f32.mrb[0].mxu0
      %v1816 = vadd.f32 0.0, %v1815
      %v1817 = vpop.f32.mrb[0].mxu0
      %1818 = vdwg.mxu0
      %v1819 = vadd.f32 %v1745, %v1813
      %v1820 = vadd.f32 %v1746, %v1816
      %v1821 = vld [vmem:[#allocation2] sm:$0xe]
      %s1822 = scalar_lea.vmem %s11, 10
      %v1823 = vld [vmem:[%s1822] sm:$0x3]
      %v1825 = vunpack.c.l.b16 %v1821
      %v1826 = vpack.c.b16 %v1682, %v1825
      %v1827 = vrot.slane %v1826, 1
      %v1828 = vrot.slane %v1685, 1
      %v1829 = vsel %vm1211, %v1827, %v1828
      %v1831 = vsel %vm721, %v1829, 0
      %v1834 = vsel %vm728, %v1823, 0
      %1836 = vmatprep.subr.bf16.mxu0 0
      %1837 = vmatpush1.bf16.msra.mxu0 %v1834
      %1838 = vmatprep.subr.bf16.mxu0 0
      %1839 = vmatpush1.bf16.msra.mxu0 0
      %1840 = vmatprep.subr.bf16.mxu0 0
      %1841 = vmatpush1.bf16.msra.mxu0 0
      %1842 = vmatprep.subr.bf16.mxu0 0
      %1843 = vmatpush1.bf16.msra.mxu0 0
      %1844 = vmatprep.subr.bf16.mxu0 0
      %1845 = vmatpush1.bf16.msra.mxu0 0
      %1846 = vmatprep.subr.bf16.mxu0 0
      %1847 = vmatpush1.bf16.msra.mxu0 0
      %1848 = vmatprep.subr.bf16.mxu0 0
      %1849 = vmatpush1.bf16.msra.mxu0 0
      %1850 = vmatprep.subr.bf16.mxu0 0
      %1851 = vmatpush1.bf16.msra.mxu0 0
      %1852 = vmatprep.subr.bf16.mxu0 0
      %1853 = vmatpush1.bf16.msra.mxu0 0
      %1854 = vmatprep.subr.bf16.mxu0 0
      %1855 = vmatpush1.bf16.msra.mxu0 0
      %1856 = vmatprep.subr.bf16.mxu0 0
      %1857 = vmatpush1.bf16.msra.mxu0 0
      %1858 = vmatprep.subr.bf16.mxu0 0
      %1859 = vmatpush1.bf16.msra.mxu0 0
      %1860 = vmatprep.subr.bf16.mxu0 0
      %1861 = vmatpush1.bf16.msra.mxu0 0
      %1862 = vmatprep.subr.bf16.mxu0 0
      %1863 = vmatpush1.bf16.msra.mxu0 0
      %1864 = vmatprep.subr.bf16.mxu0 0
      %1865 = vmatpush1.bf16.msra.mxu0 0
      %1866 = vmatprep.subr.bf16.mxu0 0
      %1867 = vmatpush1.bf16.msra.mxu0 0
      %1868 = vmatprep.mubr.bf16.mxu0 0
      %1869 = vmatmul.mubr.bf16.gmra.mrb[0].mxu0 %v1831
      %v1870 = vpop.f32.mrb[0].mxu0
      %v1871 = vadd.f32 0.0, %v1870
      %v1872 = vpop.f32.mrb[0].mxu0
      %v1873 = vpop.f32.mrb[0].mxu0
      %v1874 = vadd.f32 0.0, %v1873
      %v1875 = vpop.f32.mrb[0].mxu0
      %1876 = vdwg.mxu0
      %v1877 = vadd.f32 %v1819, %v1871
      %v1878 = vadd.f32 %v1820, %v1874
      %v1879 = vld [vmem:[%s651] sm:$0xe]
      %s1880 = scalar_lea.vmem %s12, 10
      %v1881 = vld [vmem:[%s1880] sm:$0x3]
      %v1883 = vunpack.c.l.b16 %v1879
      %v1884 = vpack.c.b16 %v1756, %v1883
      %v1885 = vrot.slane %v1884, 1
      %v1886 = vrot.slane %v1759, 1
      %v1887 = vsel %vm1211, %v1885, %v1886
      %v1889 = vsel %vm721, %v1887, 0
      %v1892 = vsel %vm728, %v1881, 0
      %1894 = vmatprep.subr.bf16.mxu0 0
      %1895 = vmatpush1.bf16.msra.mxu0 %v1892
      %1896 = vmatprep.subr.bf16.mxu0 0
      %1897 = vmatpush1.bf16.msra.mxu0 0
      %1898 = vmatprep.subr.bf16.mxu0 0
      %1899 = vmatpush1.bf16.msra.mxu0 0
      %1900 = vmatprep.subr.bf16.mxu0 0
      %1901 = vmatpush1.bf16.msra.mxu0 0
      %1902 = vmatprep.subr.bf16.mxu0 0
      %1903 = vmatpush1.bf16.msra.mxu0 0
      %1904 = vmatprep.subr.bf16.mxu0 0
      %1905 = vmatpush1.bf16.msra.mxu0 0
      %1906 = vmatprep.subr.bf16.mxu0 0
      %1907 = vmatpush1.bf16.msra.mxu0 0
      %1908 = vmatprep.subr.bf16.mxu0 0
      %1909 = vmatpush1.bf16.msra.mxu0 0
      %1910 = vmatprep.subr.bf16.mxu0 0
      %1911 = vmatpush1.bf16.msra.mxu0 0
      %1912 = vmatprep.subr.bf16.mxu0 0
      %1913 = vmatpush1.bf16.msra.mxu0 0
      %1914 = vmatprep.subr.bf16.mxu0 0
      %1915 = vmatpush1.bf16.msra.mxu0 0
      %1916 = vmatprep.subr.bf16.mxu0 0
      %1917 = vmatpush1.bf16.msra.mxu0 0
      %1918 = vmatprep.subr.bf16.mxu0 0
      %1919 = vmatpush1.bf16.msra.mxu0 0
      %1920 = vmatprep.subr.bf16.mxu0 0
      %1921 = vmatpush1.bf16.msra.mxu0 0
      %1922 = vmatprep.subr.bf16.mxu0 0
      %1923 = vmatpush1.bf16.msra.mxu0 0
      %1924 = vmatprep.subr.bf16.mxu0 0
      %1925 = vmatpush1.bf16.msra.mxu0 0
      %1926 = vmatprep.mubr.bf16.mxu0 0
      %1927 = vmatmul.mubr.bf16.gmra.mrb[0].mxu0 %v1889
      %v1928 = vpop.f32.mrb[0].mxu0
      %v1929 = vadd.f32 0.0, %v1928
      %v1930 = vpop.f32.mrb[0].mxu0
      %v1931 = vpop.f32.mrb[0].mxu0
      %v1932 = vadd.f32 0.0, %v1931
      %v1933 = vpop.f32.mrb[0].mxu0
      %1934 = vdwg.mxu0
      %v1935 = vadd.f32 %v1877, %v1929
      %v1936 = vadd.f32 %v1878, %v1932
      %v1937 = vld [vmem:[%s662] sm:$0xf]
      %v1938 = vld [vmem:[%s662 + $0x4] sm:$0xf]
      %v1939 = vld [vmem:[%s662 + $0x8] sm:$0x1]
      %v1940 = vld [vmem:[%s693] sm:$0xf]
      %v1941 = vld [vmem:[%s693 + $0x4] sm:$0xf]
      %v1942 = vld [vmem:[%s693 + $0x8] sm:$0x1]
      %v1943 = vld [vmem:[%s6] sm:$0x3]
      %v1944 = vld [vmem:[%s7] sm:$0x3]
      %v1948 = vunpack.c.l.b16 %v1940
      %v1949 = vunpack.c.l.b16 %v1941
      %v1950 = vunpack.c.l.b16 %v1942
      %v1951 = vpack.c.b16 %v1949, %v1948
      %v1952 = vpack.c.b16 %v1950, %v1950
      %v1954 = vsel %vm721, %v1951, 0
      %v1957 = vsel %vm721, %v1952, 0
      %v1960 = vsel %vm728, %v1944, 0
      %1962 = vmatprep.subr.bf16.mxu0 0
      %1963 = vmatpush1.bf16.msra.mxu0 %v1960
      %1964 = vmatprep.subr.bf16.mxu0 0
      %1965 = vmatpush1.bf16.msra.mxu0 0
      %1966 = vmatprep.subr.bf16.mxu0 0
      %1967 = vmatpush1.bf16.msra.mxu0 0
      %1968 = vmatprep.subr.bf16.mxu0 0
      %1969 = vmatpush1.bf16.msra.mxu0 0
      %1970 = vmatprep.subr.bf16.mxu0 0
      %1971 = vmatpush1.bf16.msra.mxu0 0
      %1972 = vmatprep.subr.bf16.mxu0 0
      %1973 = vmatpush1.bf16.msra.mxu0 0
      %1974 = vmatprep.subr.bf16.mxu0 0
      %1975 = vmatpush1.bf16.msra.mxu0 0
      %1976 = vmatprep.subr.bf16.mxu0 0
      %1977 = vmatpush1.bf16.msra.mxu0 0
      %1978 = vmatprep.subr.bf16.mxu0 0
      %1979 = vmatpush1.bf16.msra.mxu0 0
      %1980 = vmatprep.subr.bf16.mxu0 0
      %1981 = vmatpush1.bf16.msra.mxu0 0
      %1982 = vmatprep.subr.bf16.mxu0 0
      %1983 = vmatpush1.bf16.msra.mxu0 0
      %1984 = vmatprep.subr.bf16.mxu0 0
      %1985 = vmatpush1.bf16.msra.mxu0 0
      %1986 = vmatprep.subr.bf16.mxu0 0
      %1987 = vmatpush1.bf16.msra.mxu0 0
      %1988 = vmatprep.subr.bf16.mxu0 0
      %1989 = vmatpush1.bf16.msra.mxu0 0
      %1990 = vmatprep.subr.bf16.mxu0 0
      %1991 = vmatpush1.bf16.msra.mxu0 0
      %1992 = vmatprep.subr.bf16.mxu0 0
      %1993 = vmatpush1.bf16.msra.mxu0 0
      %1994 = vmatprep.mubr.bf16.mxu0 0
      %1995 = vmatmul.mubr.bf16.gmra.mrb[0].mxu0 %v1954
      %v1996 = vpop.f32.mrb[0].mxu0
      %v1997 = vadd.f32 0.0, %v1996
      %v1998 = vpop.f32.mrb[0].mxu0
      %v1999 = vpop.f32.mrb[0].mxu0
      %v2000 = vadd.f32 0.0, %v1999
      %v2001 = vpop.f32.mrb[0].mxu0
      %2002 = vmatprep.mubr.bf16.mxu0 0
      %2003 = vmatmul.mubr.bf16.gmra.mrb[0].mxu0 %v1957
      %v2004 = vpop.f32.mrb[0].mxu0
      %v2005 = vadd.f32 0.0, %v2004
      %v2006 = vpop.f32.mrb[0].mxu0
      %v2007 = vpop.f32.mrb[0].mxu0
      %v2008 = vpop.f32.mrb[0].mxu0
      %2009 = vdwg.mxu0
      %v2013 = vunpack.c.l.b16 %v1937
      %v2014 = vunpack.c.l.b16 %v1938
      %v2015 = vunpack.c.l.b16 %v1939
      %v2016 = vpack.c.b16 %v2014, %v2013
      %v2017 = vpack.c.b16 %v2015, %v2015
      %v2019 = vsel %vm721, %v2016, 0
      %v2022 = vsel %vm721, %v2017, 0
      %v2025 = vsel %vm728, %v1943, 0
      %2027 = vmatprep.subr.bf16.mxu0 0
      %2028 = vmatpush1.bf16.msra.mxu0 %v2025
      %2029 = vmatprep.subr.bf16.mxu0 0
      %2030 = vmatpush1.bf16.msra.mxu0 0
      %2031 = vmatprep.subr.bf16.mxu0 0
      %2032 = vmatpush1.bf16.msra.mxu0 0
      %2033 = vmatprep.subr.bf16.mxu0 0
      %2034 = vmatpush1.bf16.msra.mxu0 0
      %2035 = vmatprep.subr.bf16.mxu0 0
      %2036 = vmatpush1.bf16.msra.mxu0 0
      %2037 = vmatprep.subr.bf16.mxu0 0
      %2038 = vmatpush1.bf16.msra.mxu0 0
      %2039 = vmatprep.subr.bf16.mxu0 0
      %2040 = vmatpush1.bf16.msra.mxu0 0
      %2041 = vmatprep.subr.bf16.mxu0 0
      %2042 = vmatpush1.bf16.msra.mxu0 0
      %2043 = vmatprep.subr.bf16.mxu0 0
      %2044 = vmatpush1.bf16.msra.mxu0 0
      %2045 = vmatprep.subr.bf16.mxu0 0
      %2046 = vmatpush1.bf16.msra.mxu0 0
      %2047 = vmatprep.subr.bf16.mxu0 0
      %2048 = vmatpush1.bf16.msra.mxu0 0
      %2049 = vmatprep.subr.bf16.mxu0 0
      %2050 = vmatpush1.bf16.msra.mxu0 0
      %2051 = vmatprep.subr.bf16.mxu0 0
      %2052 = vmatpush1.bf16.msra.mxu0 0
      %2053 = vmatprep.subr.bf16.mxu0 0
      %2054 = vmatpush1.bf16.msra.mxu0 0
      %2055 = vmatprep.subr.bf16.mxu0 0
      %2056 = vmatpush1.bf16.msra.mxu0 0
      %2057 = vmatprep.subr.bf16.mxu0 0
      %2058 = vmatpush1.bf16.msra.mxu0 0
      %2059 = vmatprep.mubr.bf16.mxu0 0
      %2060 = vmatmul.mubr.bf16.gmra.mrb[0].mxu0 %v2019
      %v2061 = vpop.f32.mrb[0].mxu0
      %v2062 = vadd.f32 %v1997, %v2061
      %v2063 = vpop.f32.mrb[0].mxu0
      %v2064 = vpop.f32.mrb[0].mxu0
      %v2065 = vadd.f32 %v2000, %v2064
      %v2066 = vpop.f32.mrb[0].mxu0
      %2067 = vmatprep.mubr.bf16.mxu0 0
      %2068 = vmatmul.mubr.bf16.gmra.mrb[0].mxu0 %v2022
      %v2069 = vpop.f32.mrb[0].mxu0
      %v2070 = vadd.f32 %v2005, %v2069
      %v2071 = vpop.f32.mrb[0].mxu0
      %v2072 = vpop.f32.mrb[0].mxu0
      %v2073 = vpop.f32.mrb[0].mxu0
      %2074 = vdwg.mxu0
      %v2075 = vld [vmem:[%s8] sm:$0x1]
      %v2077 = vlaneseq
      %v2078 = vshrl.u32 %v2077, 7
      %v2079 = vsub.s32 0, %v2078
      %v2080 = vrot.slane %v2075, %v2079
      %v2082 = vadd.f32 %v2062, %v2080
      %v2083 = vadd.f32 %v2065, %v2080
      %v2084 = vadd.f32 %v2070, %v2080
      %v2085 = vmax.f32 %v2082, 0.0
      %v2086 = vmax.f32 %v2083, 0.0
      %v2087 = vmax.f32 %v2084, 0.0
      %v2088 = vld [vmem:[%s9] sm:$0x1]
      %v2090 = vlaneseq
      %v2091 = vshrl.u32 %v2090, 7
      %v2092 = vsub.s32 0, %v2091
      %v2093 = vrot.slane %v2088, %v2092
      %v2095 = vmul.f32 %v2085, %v2093
      %v2096 = vmul.f32 %v2086, %v2093
      %v2097 = vmul.f32 %v2087, %v2093
      %v2098 = vsel %vm868, %v2095, 0.0
      %2099 = vadd.xlane.f32.xlu0 %v2098
      %v2100 = vpop.xlane.xlu0 %2099
      %v2101 = vsel %vm868, %v2096, 0.0
      %2102 = vadd.xlane.f32.xlu0 %v2101
      %v2103 = vpop.xlane.xlu0 %2102
      %v2104 = vsel %vm875, %v2097, 0.0
      %2105 = vadd.xlane.f32.xlu0 %v2104
      %v2106 = vpop.xlane.xlu0 %2105
      %v2107 = vld [vmem:[#allocation3] sm:$0x1]
      %v2109 = vlaneseq
      %v2110 = vshrl.u32 %v2109, 7
      %v2111 = vsub.s32 0, %v2110
      %v2112 = vrot.slane %v2107, %v2111
      %v2114 = vadd.f32 %v2100, %v2112
      %v2115 = vadd.f32 %v2103, %v2112
      %v2116 = vadd.f32 %v2106, %v2112
      %v2117 = vxor.u32 %v2114, 2147483648
      %v2118 = vxor.u32 %v2115, 2147483648
      %v2119 = vxor.u32 %v2116, 2147483648
      %v2120 = vmul.f32 %v2117, 1.442695
      %v2121 = vpow.pop %v2120
      %v2122 = vmul.f32 %v2118, 1.442695
      %v2123 = vpow.pop %v2122
      %v2124 = vmul.f32 %v2119, 1.442695
      %v2125 = vpow.pop %v2124
      %v2126 = vadd.f32 %v2121, 1.0
      %v2127 = vadd.f32 %v2123, 1.0
      %v2128 = vadd.f32 %v2125, 1.0
      %v2129 = vrcp.pop %v2126
      %v2130 = vmul.f32 1.0, %v2129
      %v2131 = vrcp.pop %v2127
      %v2132 = vmul.f32 1.0, %v2131
      %v2133 = vrcp.pop %v2128
      %v2134 = vmul.f32 1.0, %v2133
      %v2135 = vunpack.c.l.bf16 %v1940
      %v2136 = vunpack.c.l.bf16 %v1941
      %v2137 = vunpack.c.l.bf16 %v1942
      %2139 = vset.pattern.permute.xlu0 0
      %2140 = vperm.xlu0 %2139, %v2130
      %v2141 = vpop.permute.xlu0 %2140
      %2144 = vset.pattern.permute.xlu0 0
      %2145 = vperm.xlu0 %2144, %v2132
      %v2146 = vpop.permute.xlu0 %2145
      %2149 = vset.pattern.permute.xlu0 0
      %2150 = vperm.xlu0 %2149, %v2134
      %v2151 = vpop.permute.xlu0 %2150
      %v2153 = vmul.f32 %v2135, %v2141
      %v2154 = vmul.f32 %v2136, %v2146
      %v2155 = vmul.f32 %v2137, %v2151
      %v2156 = vpack.c.bf16 %v2154, %v2153
      %v2157 = vpack.c.bf16 %v2155, %v2155
      %v2160 = vunpack.c.l.b16 %v2156
      %v2161 = vunpack.c.h.b16 %v2156
      %v2162 = vunpack.c.l.b16 %v2157
      %v2163 = vpack.c.b16 %v2160, %v2160
      %v2164 = vpack.c.b16 %v2161, %v2161
      %v2165 = vpack.c.b16 %v2162, %v2162
      %2169 = vst.msk [vmem:[#allocation2] sm:$0xf] %vm941, %v2163
      %2170 = vst.msk [vmem:[#allocation2 + $0x4] sm:$0xf] %vm941, %v2164
      %2171 = vst.msk [vmem:[#allocation2 + $0x8] sm:$0x1] %vm944, %v2165
      %v2172 = vld [vmem:[#allocation2] sm:$0xf]
      %v2173 = vld [vmem:[#allocation2 + $0x4] sm:$0xf]
      %s2174 = scalar_lea.vmem %s11, 12
      %v2175 = vld [vmem:[%s2174] sm:$0x3]
      %v2178 = vunpack.c.l.b16 %v2172
      %v2179 = vunpack.c.l.b16 %v2173
      %v2180 = vpack.c.b16 %v2179, %v2178
      %v2182 = vsel %vm721, %v2180, 0
      %v2185 = vsel %vm728, %v2175, 0
      %2187 = vmatprep.subr.bf16.mxu0 0
      %2188 = vmatpush1.bf16.msra.mxu0 %v2185
      %2189 = vmatprep.subr.bf16.mxu0 0
      %2190 = vmatpush1.bf16.msra.mxu0 0
      %2191 = vmatprep.subr.bf16.mxu0 0
      %2192 = vmatpush1.bf16.msra.mxu0 0
      %2193 = vmatprep.subr.bf16.mxu0 0
      %2194 = vmatpush1.bf16.msra.mxu0 0
      %2195 = vmatprep.subr.bf16.mxu0 0
      %2196 = vmatpush1.bf16.msra.mxu0 0
      %2197 = vmatprep.subr.bf16.mxu0 0
      %2198 = vmatpush1.bf16.msra.mxu0 0
      %2199 = vmatprep.subr.bf16.mxu0 0
      %2200 = vmatpush1.bf16.msra.mxu0 0
      %2201 = vmatprep.subr.bf16.mxu0 0
      %2202 = vmatpush1.bf16.msra.mxu0 0
      %2203 = vmatprep.subr.bf16.mxu0 0
      %2204 = vmatpush1.bf16.msra.mxu0 0
      %2205 = vmatprep.subr.bf16.mxu0 0
      %2206 = vmatpush1.bf16.msra.mxu0 0
      %2207 = vmatprep.subr.bf16.mxu0 0
      %2208 = vmatpush1.bf16.msra.mxu0 0
      %2209 = vmatprep.subr.bf16.mxu0 0
      %2210 = vmatpush1.bf16.msra.mxu0 0
      %2211 = vmatprep.subr.bf16.mxu0 0
      %2212 = vmatpush1.bf16.msra.mxu0 0
      %2213 = vmatprep.subr.bf16.mxu0 0
      %2214 = vmatpush1.bf16.msra.mxu0 0
      %2215 = vmatprep.subr.bf16.mxu0 0
      %2216 = vmatpush1.bf16.msra.mxu0 0
      %2217 = vmatprep.subr.bf16.mxu0 0
      %2218 = vmatpush1.bf16.msra.mxu0 0
      %2219 = vmatprep.mubr.bf16.mxu0 0
      %2220 = vmatmul.mubr.bf16.gmra.mrb[0].mxu0 %v2182
      %v2221 = vpop.f32.mrb[0].mxu0
      %v2222 = vadd.f32 0.0, %v2221
      %v2223 = vpop.f32.mrb[0].mxu0
      %v2224 = vpop.f32.mrb[0].mxu0
      %v2225 = vadd.f32 0.0, %v2224
      %v2226 = vpop.f32.mrb[0].mxu0
      %2227 = vdwg.mxu0
      %v2228 = vadd.f32 %v1935, %v2222
      %v2229 = vadd.f32 %v1936, %v2225
      %v2230 = vld [vmem:[%s662] sm:$0xf]
      %v2231 = vld [vmem:[%s662 + $0x4] sm:$0xf]
      %s2232 = scalar_lea.vmem %s12, 12
      %v2233 = vld [vmem:[%s2232] sm:$0x3]
      %v2236 = vunpack.c.l.b16 %v2230
      %v2237 = vunpack.c.l.b16 %v2231
      %v2238 = vpack.c.b16 %v2237, %v2236
      %v2240 = vsel %vm721, %v2238, 0
      %v2243 = vsel %vm728, %v2233, 0
      %2245 = vmatprep.subr.bf16.mxu0 0
      %2246 = vmatpush1.bf16.msra.mxu0 %v2243
      %2247 = vmatprep.subr.bf16.mxu0 0
      %2248 = vmatpush1.bf16.msra.mxu0 0
      %2249 = vmatprep.subr.bf16.mxu0 0
      %2250 = vmatpush1.bf16.msra.mxu0 0
      %2251 = vmatprep.subr.bf16.mxu0 0
      %2252 = vmatpush1.bf16.msra.mxu0 0
      %2253 = vmatprep.subr.bf16.mxu0 0
      %2254 = vmatpush1.bf16.msra.mxu0 0
      %2255 = vmatprep.subr.bf16.mxu0 0
      %2256 = vmatpush1.bf16.msra.mxu0 0
      %2257 = vmatprep.subr.bf16.mxu0 0
      %2258 = vmatpush1.bf16.msra.mxu0 0
      %2259 = vmatprep.subr.bf16.mxu0 0
      %2260 = vmatpush1.bf16.msra.mxu0 0
      %2261 = vmatprep.subr.bf16.mxu0 0
      %2262 = vmatpush1.bf16.msra.mxu0 0
      %2263 = vmatprep.subr.bf16.mxu0 0
      %2264 = vmatpush1.bf16.msra.mxu0 0
      %2265 = vmatprep.subr.bf16.mxu0 0
      %2266 = vmatpush1.bf16.msra.mxu0 0
      %2267 = vmatprep.subr.bf16.mxu0 0
      %2268 = vmatpush1.bf16.msra.mxu0 0
      %2269 = vmatprep.subr.bf16.mxu0 0
      %2270 = vmatpush1.bf16.msra.mxu0 0
      %2271 = vmatprep.subr.bf16.mxu0 0
      %2272 = vmatpush1.bf16.msra.mxu0 0
      %2273 = vmatprep.subr.bf16.mxu0 0
      %2274 = vmatpush1.bf16.msra.mxu0 0
      %2275 = vmatprep.subr.bf16.mxu0 0
      %2276 = vmatpush1.bf16.msra.mxu0 0
      %2277 = vmatprep.mubr.bf16.mxu0 0
      %2278 = vmatmul.mubr.bf16.gmra.mrb[0].mxu0 %v2240
      %v2279 = vpop.f32.mrb[0].mxu0
      %v2280 = vadd.f32 0.0, %v2279
      %v2281 = vpop.f32.mrb[0].mxu0
      %v2282 = vpop.f32.mrb[0].mxu0
      %v2283 = vadd.f32 0.0, %v2282
      %v2284 = vpop.f32.mrb[0].mxu0
      %2285 = vdwg.mxu0
      %v2286 = vadd.f32 %v2228, %v2280
      %v2287 = vadd.f32 %v2229, %v2283
      %v2288 = vld [vmem:[#allocation2] sm:$0xf]
      %v2289 = vld [vmem:[#allocation2 + $0x4] sm:$0xf]
      %v2290 = vld [vmem:[#allocation2 + $0x8] sm:$0x1]
      %s2291 = scalar_lea.vmem %s11, 14
      %v2292 = vld [vmem:[%s2291] sm:$0x3]
      %v2296 = vunpack.c.l.b16 %v2288
      %v2297 = vunpack.c.l.b16 %v2289
      %v2298 = vunpack.c.l.b16 %v2290
      %v2299 = vpack.c.b16 %v2297, %v2296
      %v2300 = vpack.c.b16 %v2298, %v2298
      %v2302 = vshrl.u32 %v2299, 16
      %v2304 = vshll.u32 %v2299, 16
      %v2306 = vrot.slane %v2304, 1
      %v2307 = vor.u32 %v2302, %v2306
      %v2309 = vshll.u32 %v2300, 16
      %v2311 = vrot.slane %v2309, 1
      %v2312 = vsel %vm1069, %v2307, %v2311
      %v2314 = vsel %vm721, %v2312, 0
      %v2317 = vsel %vm728, %v2292, 0
      %2319 = vmatprep.subr.bf16.mxu0 0
      %2320 = vmatpush1.bf16.msra.mxu0 %v2317
      %2321 = vmatprep.subr.bf16.mxu0 0
      %2322 = vmatpush1.bf16.msra.mxu0 0
      %2323 = vmatprep.subr.bf16.mxu0 0
      %2324 = vmatpush1.bf16.msra.mxu0 0
      %2325 = vmatprep.subr.bf16.mxu0 0
      %2326 = vmatpush1.bf16.msra.mxu0 0
      %2327 = vmatprep.subr.bf16.mxu0 0
      %2328 = vmatpush1.bf16.msra.mxu0 0
      %2329 = vmatprep.subr.bf16.mxu0 0
      %2330 = vmatpush1.bf16.msra.mxu0 0
      %2331 = vmatprep.subr.bf16.mxu0 0
      %2332 = vmatpush1.bf16.msra.mxu0 0
      %2333 = vmatprep.subr.bf16.mxu0 0
      %2334 = vmatpush1.bf16.msra.mxu0 0
      %2335 = vmatprep.subr.bf16.mxu0 0
      %2336 = vmatpush1.bf16.msra.mxu0 0
      %2337 = vmatprep.subr.bf16.mxu0 0
      %2338 = vmatpush1.bf16.msra.mxu0 0
      %2339 = vmatprep.subr.bf16.mxu0 0
      %2340 = vmatpush1.bf16.msra.mxu0 0
      %2341 = vmatprep.subr.bf16.mxu0 0
      %2342 = vmatpush1.bf16.msra.mxu0 0
      %2343 = vmatprep.subr.bf16.mxu0 0
      %2344 = vmatpush1.bf16.msra.mxu0 0
      %2345 = vmatprep.subr.bf16.mxu0 0
      %2346 = vmatpush1.bf16.msra.mxu0 0
      %2347 = vmatprep.subr.bf16.mxu0 0
      %2348 = vmatpush1.bf16.msra.mxu0 0
      %2349 = vmatprep.subr.bf16.mxu0 0
      %2350 = vmatpush1.bf16.msra.mxu0 0
      %2351 = vmatprep.mubr.bf16.mxu0 0
      %2352 = vmatmul.mubr.bf16.gmra.mrb[0].mxu0 %v2314
      %v2353 = vpop.f32.mrb[0].mxu0
      %v2354 = vadd.f32 0.0, %v2353
      %v2355 = vpop.f32.mrb[0].mxu0
      %v2356 = vpop.f32.mrb[0].mxu0
      %v2357 = vadd.f32 0.0, %v2356
      %v2358 = vpop.f32.mrb[0].mxu0
      %2359 = vdwg.mxu0
      %v2360 = vadd.f32 %v2286, %v2354
      %v2361 = vadd.f32 %v2287, %v2357
      %v2362 = vld [vmem:[%s662] sm:$0xf]
      %v2363 = vld [vmem:[%s662 + $0x4] sm:$0xf]
      %v2364 = vld [vmem:[%s662 + $0x8] sm:$0x1]
      %s2365 = scalar_lea.vmem %s12, 14
      %v2366 = vld [vmem:[%s2365] sm:$0x3]
      %v2370 = vunpack.c.l.b16 %v2362
      %v2371 = vunpack.c.l.b16 %v2363
      %v2372 = vunpack.c.l.b16 %v2364
      %v2373 = vpack.c.b16 %v2371, %v2370
      %v2374 = vpack.c.b16 %v2372, %v2372
      %v2376 = vshrl.u32 %v2373, 16
      %v2378 = vshll.u32 %v2373, 16
      %v2380 = vrot.slane %v2378, 1
      %v2381 = vor.u32 %v2376, %v2380
      %v2383 = vshll.u32 %v2374, 16
      %v2385 = vrot.slane %v2383, 1
      %v2386 = vsel %vm1069, %v2381, %v2385
      %v2388 = vsel %vm721, %v2386, 0
      %v2391 = vsel %vm728, %v2366, 0
      %2393 = vmatprep.subr.bf16.mxu0 0
      %2394 = vmatpush1.bf16.msra.mxu0 %v2391
      %2395 = vmatprep.subr.bf16.mxu0 0
      %2396 = vmatpush1.bf16.msra.mxu0 0
      %2397 = vmatprep.subr.bf16.mxu0 0
      %2398 = vmatpush1.bf16.msra.mxu0 0
      %2399 = vmatprep.subr.bf16.mxu0 0
      %2400 = vmatpush1.bf16.msra.mxu0 0
      %2401 = vmatprep.subr.bf16.mxu0 0
      %2402 = vmatpush1.bf16.msra.mxu0 0
      %2403 = vmatprep.subr.bf16.mxu0 0
      %2404 = vmatpush1.bf16.msra.mxu0 0
      %2405 = vmatprep.subr.bf16.mxu0 0
      %2406 = vmatpush1.bf16.msra.mxu0 0
      %2407 = vmatprep.subr.bf16.mxu0 0
      %2408 = vmatpush1.bf16.msra.mxu0 0
      %2409 = vmatprep.subr.bf16.mxu0 0
      %2410 = vmatpush1.bf16.msra.mxu0 0
      %2411 = vmatprep.subr.bf16.mxu0 0
      %2412 = vmatpush1.bf16.msra.mxu0 0
      %2413 = vmatprep.subr.bf16.mxu0 0
      %2414 = vmatpush1.bf16.msra.mxu0 0
      %2415 = vmatprep.subr.bf16.mxu0 0
      %2416 = vmatpush1.bf16.msra.mxu0 0
      %2417 = vmatprep.subr.bf16.mxu0 0
      %2418 = vmatpush1.bf16.msra.mxu0 0
      %2419 = vmatprep.subr.bf16.mxu0 0
      %2420 = vmatpush1.bf16.msra.mxu0 0
      %2421 = vmatprep.subr.bf16.mxu0 0
      %2422 = vmatpush1.bf16.msra.mxu0 0
      %2423 = vmatprep.subr.bf16.mxu0 0
      %2424 = vmatpush1.bf16.msra.mxu0 0
      %2425 = vmatprep.mubr.bf16.mxu0 0
      %2426 = vmatmul.mubr.bf16.gmra.mrb[0].mxu0 %v2388
      %v2427 = vpop.f32.mrb[0].mxu0
      %v2428 = vadd.f32 0.0, %v2427
      %v2429 = vpop.f32.mrb[0].mxu0
      %v2430 = vpop.f32.mrb[0].mxu0
      %v2431 = vadd.f32 0.0, %v2430
      %v2432 = vpop.f32.mrb[0].mxu0
      %2433 = vdwg.mxu0
      %v2434 = vadd.f32 %v2360, %v2428
      %v2435 = vadd.f32 %v2361, %v2431
      %v2436 = vld [vmem:[#allocation2] sm:$0xe]
      %s2437 = scalar_lea.vmem %s11, 16
      %v2438 = vld [vmem:[%s2437] sm:$0x3]
      %v2440 = vunpack.c.l.b16 %v2436
      %v2441 = vpack.c.b16 %v2297, %v2440
      %v2442 = vrot.slane %v2441, 1
      %v2443 = vrot.slane %v2300, 1
      %v2444 = vsel %vm1211, %v2442, %v2443
      %v2446 = vsel %vm721, %v2444, 0
      %v2449 = vsel %vm728, %v2438, 0
      %2451 = vmatprep.subr.bf16.mxu0 0
      %2452 = vmatpush1.bf16.msra.mxu0 %v2449
      %2453 = vmatprep.subr.bf16.mxu0 0
      %2454 = vmatpush1.bf16.msra.mxu0 0
      %2455 = vmatprep.subr.bf16.mxu0 0
      %2456 = vmatpush1.bf16.msra.mxu0 0
      %2457 = vmatprep.subr.bf16.mxu0 0
      %2458 = vmatpush1.bf16.msra.mxu0 0
      %2459 = vmatprep.subr.bf16.mxu0 0
      %2460 = vmatpush1.bf16.msra.mxu0 0
      %2461 = vmatprep.subr.bf16.mxu0 0
      %2462 = vmatpush1.bf16.msra.mxu0 0
      %2463 = vmatprep.subr.bf16.mxu0 0
      %2464 = vmatpush1.bf16.msra.mxu0 0
      %2465 = vmatprep.subr.bf16.mxu0 0
      %2466 = vmatpush1.bf16.msra.mxu0 0
      %2467 = vmatprep.subr.bf16.mxu0 0
      %2468 = vmatpush1.bf16.msra.mxu0 0
      %2469 = vmatprep.subr.bf16.mxu0 0
      %2470 = vmatpush1.bf16.msra.mxu0 0
      %2471 = vmatprep.subr.bf16.mxu0 0
      %2472 = vmatpush1.bf16.msra.mxu0 0
      %2473 = vmatprep.subr.bf16.mxu0 0
      %2474 = vmatpush1.bf16.msra.mxu0 0
      %2475 = vmatprep.subr.bf16.mxu0 0
      %2476 = vmatpush1.bf16.msra.mxu0 0
      %2477 = vmatprep.subr.bf16.mxu0 0
      %2478 = vmatpush1.bf16.msra.mxu0 0
      %2479 = vmatprep.subr.bf16.mxu0 0
      %2480 = vmatpush1.bf16.msra.mxu0 0
      %2481 = vmatprep.subr.bf16.mxu0 0
      %2482 = vmatpush1.bf16.msra.mxu0 0
      %2483 = vmatprep.mubr.bf16.mxu0 0
      %2484 = vmatmul.mubr.bf16.gmra.mrb[0].mxu0 %v2446
      %v2485 = vpop.f32.mrb[0].mxu0
      %v2486 = vadd.f32 0.0, %v2485
      %v2487 = vpop.f32.mrb[0].mxu0
      %v2488 = vpop.f32.mrb[0].mxu0
      %v2489 = vadd.f32 0.0, %v2488
      %v2490 = vpop.f32.mrb[0].mxu0
      %2491 = vdwg.mxu0
      %v2492 = vadd.f32 %v2434, %v2486
      %v2493 = vadd.f32 %v2435, %v2489
      %v2494 = vld [vmem:[%s662] sm:$0xe]
      %s2495 = scalar_lea.vmem %s12, 16
      %v2496 = vld [vmem:[%s2495] sm:$0x3]
      %v2498 = vunpack.c.l.b16 %v2494
      %v2499 = vpack.c.b16 %v2371, %v2498
      %v2500 = vrot.slane %v2499, 1
      %v2501 = vrot.slane %v2374, 1
      %v2502 = vsel %vm1211, %v2500, %v2501
      %v2504 = vsel %vm721, %v2502, 0
      %v2507 = vsel %vm728, %v2496, 0
      %2509 = vmatprep.subr.bf16.mxu0 0
      %2510 = vmatpush1.bf16.msra.mxu0 %v2507
      %2511 = vmatprep.subr.bf16.mxu0 0
      %2512 = vmatpush1.bf16.msra.mxu0 0
      %2513 = vmatprep.subr.bf16.mxu0 0
      %2514 = vmatpush1.bf16.msra.mxu0 0
      %2515 = vmatprep.subr.bf16.mxu0 0
      %2516 = vmatpush1.bf16.msra.mxu0 0
      %2517 = vmatprep.subr.bf16.mxu0 0
      %2518 = vmatpush1.bf16.msra.mxu0 0
      %2519 = vmatprep.subr.bf16.mxu0 0
      %2520 = vmatpush1.bf16.msra.mxu0 0
      %2521 = vmatprep.subr.bf16.mxu0 0
      %2522 = vmatpush1.bf16.msra.mxu0 0
      %2523 = vmatprep.subr.bf16.mxu0 0
      %2524 = vmatpush1.bf16.msra.mxu0 0
      %2525 = vmatprep.subr.bf16.mxu0 0
      %2526 = vmatpush1.bf16.msra.mxu0 0
      %2527 = vmatprep.subr.bf16.mxu0 0
      %2528 = vmatpush1.bf16.msra.mxu0 0
      %2529 = vmatprep.subr.bf16.mxu0 0
      %2530 = vmatpush1.bf16.msra.mxu0 0
      %2531 = vmatprep.subr.bf16.mxu0 0
      %2532 = vmatpush1.bf16.msra.mxu0 0
      %2533 = vmatprep.subr.bf16.mxu0 0
      %2534 = vmatpush1.bf16.msra.mxu0 0
      %2535 = vmatprep.subr.bf16.mxu0 0
      %2536 = vmatpush1.bf16.msra.mxu0 0
      %2537 = vmatprep.subr.bf16.mxu0 0
      %2538 = vmatpush1.bf16.msra.mxu0 0
      %2539 = vmatprep.subr.bf16.mxu0 0
      %2540 = vmatpush1.bf16.msra.mxu0 0
      %2541 = vmatprep.mubr.bf16.mxu0 0
      %2542 = vmatmul.mubr.bf16.gmra.mrb[0].mxu0 %v2504
      %v2543 = vpop.f32.mrb[0].mxu0
      %v2544 = vadd.f32 0.0, %v2543
      %v2545 = vpop.f32.mrb[0].mxu0
      %v2546 = vpop.f32.mrb[0].mxu0
      %v2547 = vadd.f32 0.0, %v2546
      %v2548 = vpop.f32.mrb[0].mxu0
      %2549 = vdwg.mxu0
      %v2550 = vadd.f32 %v2492, %v2544
      %v2551 = vadd.f32 %v2493, %v2547
      %v2552 = vld [vmem:[%s13] sm:$0x1]
      %v2554 = vlaneseq
      %v2555 = vshrl.u32 %v2554, 7
      %v2556 = vsub.s32 0, %v2555
      %v2557 = vrot.slane %v2552, %v2556
      %v2559 = vadd.f32 %v2550, %v2557
      %v2560 = vadd.f32 %v2551, %v2557
      %v2561 = vmax.f32 %v2559, 0.0
      %v2562 = vmax.f32 %v2560, 0.0
      %v2563 = vpack.c.bf16 %v2562, %v2561
      %v2565 = vunpack.c.l.b16 %v2563
      %v2566 = vunpack.c.h.b16 %v2563
      %v2567 = vpack.c.b16 %v2565, %v2565
      %v2568 = vpack.c.b16 %v2566, %v2566
      %2571 = vst.msk [vmem:[%s703] sm:$0xf] %vm941, %v2567
      %2572 = vst.msk [vmem:[%s703 + $0x4] sm:$0xf] %vm941, %v2568
      %p2573 = scmp.lt.s32.totalorder %s31, 1
      %s2574 = scalar_select %p2573, %s31, 1
      %p2575 = scmp.lt.s32.totalorder %s32, 15
      %s2576 = scalar_select %p2575, %s32, 15
      %s2577 = smul.addr %s2576, 2
      %s2578 = smul.addr %s2574, 32
      %s2579 = sadd.s32 %s2577, %s2578
      %s2580 = smul.addr %s2579, 4
      %s2581 = scalar_lea.vmem %s14, %s2580
      // Predicated region
      $region77: #{att_up_forward_pallas.4} parent=75 // pred_check
        %p2582 = pneg %p403
      $region78: #{att_up_forward_pallas.4} parent=75 // pred_check_branch
        %2584 = sbr.rel (%p2582) target = $region80
      $region79: #{att_up_forward_pallas.4} parent=75 // pred_region
        _
      $region80: #{att_up_forward_pallas.4} parent=75 // pred_fallthru
        _
    $region76: #{att_up_forward_pallas.4} parent=5 // pred_fallthru
      _
    %p2585 = scmp.le.s32.totalorder 2, %s22
    // Predicated region
    $region81: #{att_up_forward_pallas.4} parent=5 // pred_check
      %p2586 = pneg %p2585
    $region82: #{att_up_forward_pallas.4} parent=5 // pred_check_branch
      %2588 = sbr.rel (%p2586) target = $region84
    $region83: #{att_up_forward_pallas.4} parent=5 // pred_region
      %s2589 = ssub.s32 %s22, 2
      // Predicated region
      $region85: #{att_up_forward_pallas.4} parent=83 // pred_check
        %p2590 = pneg %p409
      $region86: #{att_up_forward_pallas.4} parent=83 // pred_check_branch
        %2592 = sbr.rel (%p2590) target = $region88
      $region87: #{att_up_forward_pallas.4} parent=83 // pred_region
        %p2593 = scmp.lt.s32.totalorder %s33, 1
        %s2594 = scalar_select %p2593, %s33, 1
        %p2595 = scmp.lt.s32.totalorder %s34, 15
        %s2596 = scalar_select %p2595, %s34, 15
        %s2597 = smul.addr %s2596, 2
        %s2598 = smul.addr %s2594, 32
        %s2599 = sadd.s32 %s2597, %s2598
        %s2600 = smul.addr %s2599, 4
        %s2601 = scalar_lea.vmem %s14, %s2600
      $region88: #{att_up_forward_pallas.4} parent=83 // pred_fallthru
        _
    $region84: #{att_up_forward_pallas.4} parent=5 // pred_fallthru
      _
  $region6: #{att_up_forward_pallas.4} parent=0 // loop_footer
    %s26 = sadd.s32 1, %s22
  $region7: #{att_up_forward_pallas.4} parent=0 // loop_footer_branch
    %21 = sbr.rel target = $region3
  $region8: #{att_up_forward_pallas.4} parent=0 // loop_exit
    _

</llo_original>
